<compile_context>
chip_gen: v5e
topology: v5e:2x2
jax: 0.10.0
libtpu: 0.0.40
codegen_flags: <defaults>
</compile_context>

<pallas_src>
import functools

import jax
import jax.numpy as jnp
import numpy as np
from jax import lax
from jax.experimental import pallas as pl
from jax.experimental.pallas import tpu as pltpu


# ----------------------------------------------------------------------------
# Fused Pallas kernel (one batch element per grid step)
# ----------------------------------------------------------------------------
def _cgl_kernel(x_ref, c_ref, m_ref, w_in_ref, b_in_ref, w_out_ref, b_out_ref,
                h_ref, c_out_ref, m_out_ref, pad_in_ref, pad_mem_ref,
                *, N, KH, KW, PAD, H, W, CX):
    """Fully fused CGL cell.

    Stage 1: one MXU matmul produces pre-summed gate pre-activations
             [x_p+g_c | f_x+f_c | x_m_p+g_m | f_m_x+f_m]   (HW, 4N)
             (the three input convs and the cross-conv adds are folded into
             one block-structured im2col weight).
    Stage 2: fp32 gate math (sigmoid / tanh / blend) on the VPU/EUP.
    Stage 3: one MXU matmul produces [conv_o_c(mem) | conv_last(mem)]
             (1x1 conv_last embedded at the centre tap), then
             h = sigmoid(.) * tanh(.).
    """
    HW = H * W
    CIN = CX + 2 * N
    forget_bias = -1.0

    x = x_ref[0]             # (H, W, CX)  fp32
    c_prev = c_ref[0]        # (H, W, N)   fp32
    m_prev = m_ref[0]        # (H, W, N)   fp32

    # ---- stage 1: padded, channel-concatenated input in a VMEM scratch -----
    pad_in_ref[...] = jnp.zeros(pad_in_ref.shape, pad_in_ref.dtype)
    interior = jnp.concatenate([x, c_prev, m_prev], axis=-1)       # (H, W, CIN)
    pad_in_ref[PAD:PAD + H, PAD:PAD + W, :] = interior

    padded = pad_in_ref[...]                                       # (H+2p, W+2p, CIN)
    taps = []
    for kh in range(KH):
        for kw in range(KW):
            taps.append(padded[kh:kh + H, kw:kw + W, :].reshape(HW, CIN))
    patch = jnp.concatenate(taps, axis=-1).astype(jnp.bfloat16)    # (HW, KH*KW*CIN)

    gates = jnp.dot(patch, w_in_ref[...],
                    preferred_element_type=jnp.float32) + b_in_ref[...]  # (HW, 4N) f32

    # ---- stage 2: gate math (fp32) ------------------------------------------
    c_flat = c_prev.reshape(HW, N)
    m_flat = m_prev.reshape(HW, N)

    xp_gc = gates[:, 0 * N:1 * N]     # x_p   + g_c
    fx_fc = gates[:, 1 * N:2 * N]     # f_x   + f_c
    xmp_gm = gates[:, 2 * N:3 * N]    # x_m_p + g_m
    fmx_fm = gates[:, 3 * N:4 * N]    # f_m_x + f_m

    f_t = jax.nn.sigmoid(fx_fc + forget_bias)
    c_new = f_t * c_flat + (1.0 - f_t) * jnp.tanh(xp_gc)
    f_tp = jax.nn.sigmoid(fmx_fm + forget_bias)
    m_new = f_tp * m_flat + (1.0 - f_tp) * jnp.tanh(xmp_gm)

    c_out_ref[...] = c_new.reshape(1, H, W, N).astype(c_out_ref.dtype)
    m_out_ref[...] = m_new.reshape(1, H, W, N).astype(m_out_ref.dtype)

    # ---- stage 3: fused output convs (3x3 + embedded 1x1) + gating ----------
    pad_mem_ref[...] = jnp.zeros(pad_mem_ref.shape, pad_mem_ref.dtype)
    mem = jnp.concatenate([c_new, m_new], axis=-1).reshape(H, W, 2 * N)
    pad_mem_ref[PAD:PAD + H, PAD:PAD + W, :] = mem

    padded_m = pad_mem_ref[...]
    taps2 = []
    for kh in range(KH):
        for kw in range(KW):
            taps2.append(padded_m[kh:kh + H, kw:kw + W, :].reshape(HW, 2 * N))
    patch2 = jnp.concatenate(taps2, axis=-1).astype(jnp.bfloat16)  # (HW, KH*KW*2N)

    out2 = jnp.dot(patch2, w_out_ref[...],
                   preferred_element_type=jnp.float32) + b_out_ref[...]   # (HW, 2N)
    h = jax.nn.sigmoid(out2[:, 0:N]) * jnp.tanh(out2[:, N:2 * N])
    h_ref[...] = h.reshape(1, H, W, N).astype(h_ref.dtype)


# ----------------------------------------------------------------------------
# Weight packing (trace-time, tiny arrays)
# ----------------------------------------------------------------------------
def _pack_weights(params, *, cx, N, KH, KW):
    """Pack HWIO weights into the two fused im2col matmul weights (bf16)."""
    wx, wc, wm = params['wx'], params['wc'], params['wm']
    CIN = cx + 2 * N

    # Combined input weight: conv of concat([x, c, m]) directly yields the
    # pre-summed gates [x_p+g_c | f_x+f_c | x_m_p+g_m | f_m_x+f_m].
    w_in = jnp.zeros((KH, KW, CIN, 4 * N), jnp.float32)
    w_in = w_in.at[:, :, 0:cx, :].set(wx)                                   # x rows
    w_in = w_in.at[:, :, cx:cx + N, 0:N].set(wc[..., N:2 * N])              # g_c
    w_in = w_in.at[:, :, cx:cx + N, N:2 * N].set(wc[..., 0:N])              # f_c
    w_in = w_in.at[:, :, cx + N:cx + 2 * N, 2 * N:3 * N].set(wm[..., N:2 * N])  # g_m
    w_in = w_in.at[:, :, cx + N:cx + 2 * N, 3 * N:4 * N].set(wm[..., 0:N])      # f_m
    w_in_flat = w_in.reshape(KH * KW * CIN, 4 * N).astype(jnp.bfloat16)

    bx, bc, bm = params['bx'], params['bc'], params['bm']
    b_in = jnp.concatenate([
        bx[0:N] + bc[N:2 * N],        # x_p   + g_c
        bx[N:2 * N] + bc[0:N],        # f_x   + f_c
        bx[2 * N:3 * N] + bm[N:2 * N],  # x_m_p + g_m
        bx[3 * N:4 * N] + bm[0:N],      # f_m_x + f_m
    ]).reshape(1, 4 * N).astype(jnp.float32)

    # Combined output weight: [conv_o_c (3x3) | conv_last (1x1 at centre tap)].
    wo, wl = params['wo'], params['wl']
    w_out = jnp.zeros((KH, KW, 2 * N, 2 * N), jnp.float32)
    w_out = w_out.at[:, :, :, 0:N].set(wo)
    w_out = w_out.at[KH // 2, KW // 2, :, N:2 * N].set(wl[0, 0])
    w_out_flat = w_out.reshape(KH * KW * 2 * N, 2 * N).astype(jnp.bfloat16)
    b_out = jnp.concatenate([params['bo'], params['bl']]
                            ).reshape(1, 2 * N).astype(jnp.float32)
    return w_in_flat, b_in, w_out_flat, b_out


# ----------------------------------------------------------------------------
# Public wrapper (NCHW in / NCHW out, matching the PyTorch module)
# ----------------------------------------------------------------------------
@functools.partial(jax.jit, static_argnames=("num_hidden", "filter_size"))
def cgl_forward(params, x_t, c_t, m_t, *, num_hidden, filter_size):
    N = num_hidden
    KH = KW = filter_size
    PAD = filter_size // 2

    to_nhwc = lambda a: jnp.transpose(a, (0, 2, 3, 1))
    to_nchw = lambda a: jnp.transpose(a, (0, 3, 1, 2))

    x = to_nhwc(x_t).astype(jnp.float32)
    c = to_nhwc(c_t).astype(jnp.float32)
    m = to_nhwc(m_t).astype(jnp.float32)
    B, H, W, CX = x.shape
    CIN = CX + 2 * N

    w_in, b_in, w_out, b_out = _pack_weights(params, cx=CX, N=N, KH=KH, KW=KW)

    kernel = functools.partial(_cgl_kernel, N=N, KH=KH, KW=KW, PAD=PAD,
                               H=H, W=W, CX=CX)

    h_new, c_new, m_new = pl.pallas_call(
        kernel,
        grid=(B,),
        in_specs=[
            pl.BlockSpec((1, H, W, CX), lambda b: (b, 0, 0, 0)),
            pl.BlockSpec((1, H, W, N), lambda b: (b, 0, 0, 0)),
            pl.BlockSpec((1, H, W, N), lambda b: (b, 0, 0, 0)),
            pl.BlockSpec((KH * KW * CIN, 4 * N), lambda b: (0, 0)),
            pl.BlockSpec((1, 4 * N), lambda b: (0, 0)),
            pl.BlockSpec((KH * KW * 2 * N, 2 * N), lambda b: (0, 0)),
            pl.BlockSpec((1, 2 * N), lambda b: (0, 0)),
        ],
        out_specs=(
            pl.BlockSpec((1, H, W, N), lambda b: (b, 0, 0, 0)),
            pl.BlockSpec((1, H, W, N), lambda b: (b, 0, 0, 0)),
            pl.BlockSpec((1, H, W, N), lambda b: (b, 0, 0, 0)),
        ),
        out_shape=(
            jax.ShapeDtypeStruct((B, H, W, N), jnp.float32),
            jax.ShapeDtypeStruct((B, H, W, N), jnp.float32),
            jax.ShapeDtypeStruct((B, H, W, N), jnp.float32),
        ),
        scratch_shapes=[
            pltpu.VMEM((H + 2 * PAD, W + 2 * PAD, CIN), jnp.float32),
            pltpu.VMEM((H + 2 * PAD, W + 2 * PAD, 2 * N), jnp.float32),
        ],
        compiler_params=pltpu.CompilerParams(
            dimension_semantics=("parallel",)),
    )(x, c, m, w_in, b_in, w_out, b_out)

    return to_nchw(h_new), to_nchw(c_new), to_nchw(m_new)


# ----------------------------------------------------------------------------
# Pure-JAX reference (for verification)
# ----------------------------------------------------------------------------
def _conv_ref(x, w, b, pad):
    y = lax.conv_general_dilated(
        x, w, window_strides=(1, 1), padding=[(pad, pad), (pad, pad)],
        dimension_numbers=('NHWC', 'HWIO', 'NHWC'))
    return y + b.reshape(1, 1, 1, -1)


def cgl_reference(params, x_t, c_t, m_t, *, num_hidden, filter_size):
    pad = filter_size // 2
    to_nhwc = lambda a: jnp.transpose(a, (0, 2, 3, 1))
    to_nchw = lambda a: jnp.transpose(a, (0, 3, 1, 2))
    x, c, m = to_nhwc(x_t), to_nhwc(c_t), to_nhwc(m_t)

    xc = _conv_ref(x, params['wx'], params['bx'], pad)
    cc = _conv_ref(c, params['wc'], params['bc'], pad)
    mc = _conv_ref(m, params['wm'], params['bm'], pad)

    x_p, f_x, x_m_p, f_m_x = jnp.split(xc, 4, axis=-1)
    f_c, g_c = jnp.split(cc, 2, axis=-1)
    f_m, g_m = jnp.split(mc, 2, axis=-1)

    f_t = jax.nn.sigmoid(f_x + f_c - 1.0)
    c_new = f_t * c + (1 - f_t) * jnp.tanh(x_p + g_c)
    f_tp = jax.nn.sigmoid(f_m_x + f_m - 1.0)
    m_new = f_tp * m + (1 - f_tp) * jnp.tanh(x_m_p + g_m)

    mem = jnp.concatenate([c_new, m_new], axis=-1)
    o_t = jax.nn.sigmoid(_conv_ref(mem, params['wo'], params['bo'], pad))
    h_new = o_t * jnp.tanh(_conv_ref(mem, params['wl'], params['bl'], 0))
    return to_nchw(h_new), to_nchw(c_new), to_nchw(m_new)


# ----------------------------------------------------------------------------
# Main
# ----------------------------------------------------------------------------
if __name__ == "__main__":
    B, in_channel, H, W = 2, 4, 16, 16
    num_hidden = 8
    filter_size = 3

    key = jax.random.PRNGKey(0)
    ks = jax.random.split(key, 16)

    def init(k, shape, scale=0.1):
        return scale * jax.random.normal(k, shape, dtype=jnp.float32)

    params = {
        # weights stored HWIO
        'wx': init(ks[0], (filter_size, filter_size, in_channel, 4 * num_hidden)),
        'bx': init(ks[1], (4 * num_hidden,)),
        'wc': init(ks[2], (filter_size, filter_size, num_hidden, 2 * num_hidden)),
        'bc': init(ks[3], (2 * num_hidden,)),
        'wm': init(ks[4], (filter_size, filter_size, num_hidden, 2 * num_hidden)),
        'bm': init(ks[5], (2 * num_hidden,)),
        'wo': init(ks[6], (filter_size, filter_size, 2 * num_hidden, num_hidden)),
        'bo': init(ks[7], (num_hidden,)),
        'wl': init(ks[8], (1, 1, 2 * num_hidden, num_hidden)),
        'bl': init(ks[9], (num_hidden,)),
    }

    x_t = init(ks[10], (B, in_channel, H, W), scale=1.0)   # NCHW, like torch
    c_t = init(ks[11], (B, num_hidden, H, W), scale=1.0)
    m_t = init(ks[12], (B, num_hidden, H, W), scale=1.0)

    h_new, c_new, m_new = cgl_forward(
        params, x_t, c_t, m_t, num_hidden=num_hidden, filter_size=filter_size)
    jax.block_until_ready((h_new, c_new, m_new))

    h_ref, c_ref, m_ref = cgl_reference(
        params, x_t, c_t, m_t, num_hidden=num_hidden, filter_size=filter_size)

    # bf16 MXU operands + fp32 accumulation -> slightly relaxed tolerance.
    np.testing.assert_allclose(np.asarray(h_new), np.asarray(h_ref), rtol=2e-2, atol=2e-2)
    np.testing.assert_allclose(np.asarray(c_new), np.asarray(c_ref), rtol=2e-2, atol=2e-2)
    np.testing.assert_allclose(np.asarray(m_new), np.asarray(m_ref), rtol=2e-2, atol=2e-2)

    print("KERNEL_OK")
</pallas_src>

<mosaic_0001>
module attributes {stable_mosaic.version = 11 : i64} {
  func.func @_cgl_kernel(%arg0: i32, %arg1: memref<1x16x16x4xf32, #tpu.memory_space<vmem>>, %arg2: memref<1x16x16x8xf32, #tpu.memory_space<vmem>>, %arg3: memref<1x16x16x8xf32, #tpu.memory_space<vmem>>, %arg4: memref<180x32xbf16, #tpu.memory_space<vmem>>, %arg5: memref<1x32xf32, #tpu.memory_space<vmem>>, %arg6: memref<144x16xbf16, #tpu.memory_space<vmem>>, %arg7: memref<1x16xf32, #tpu.memory_space<vmem>>, %arg8: memref<1x16x16x8xf32, #tpu.memory_space<vmem>>, %arg9: memref<1x16x16x8xf32, #tpu.memory_space<vmem>>, %arg10: memref<1x16x16x8xf32, #tpu.memory_space<vmem>>, %arg11: memref<18x18x20xf32, #tpu.memory_space<vmem>>, %arg12: memref<18x18x16xf32, #tpu.memory_space<vmem>>) attributes {dimension_semantics = [#tpu.dimension_semantics<parallel>], iteration_bounds = array<i64: 2>, scalar_prefetch = 0 : i64, scratch_operands = 2 : i64, tpu.core_type = #tpu.core_type<tc>, window_params = [{transform_indices = @transform_0, window_bounds = array<i64: 1, 16, 16, 4>}, {transform_indices = @transform_1, window_bounds = array<i64: 1, 16, 16, 8>}, {transform_indices = @transform_2, window_bounds = array<i64: 1, 16, 16, 8>}, {pipeline_mode = #tpu.pipeline_mode<synchronous>, transform_indices = @transform_3, window_bounds = array<i64: 180, 32>}, {pipeline_mode = #tpu.pipeline_mode<synchronous>, transform_indices = @transform_4, window_bounds = array<i64: 1, 32>}, {pipeline_mode = #tpu.pipeline_mode<synchronous>, transform_indices = @transform_5, window_bounds = array<i64: 144, 16>}, {pipeline_mode = #tpu.pipeline_mode<synchronous>, transform_indices = @transform_6, window_bounds = array<i64: 1, 16>}, {transform_indices = @transform_7, window_bounds = array<i64: 1, 16, 16, 8>}, {transform_indices = @transform_8, window_bounds = array<i64: 1, 16, 16, 8>}, {transform_indices = @transform_9, window_bounds = array<i64: 1, 16, 16, 8>}]} {
    %c0 = arith.constant 0 : index
    %c0_0 = arith.constant 0 : index
    %c0_1 = arith.constant 0 : index
    %c0_2 = arith.constant 0 : index
    %0 = vector.load %arg1[%c0, %c0_0, %c0_1, %c0_2] : memref<1x16x16x4xf32, #tpu.memory_space<vmem>>, vector<1x16x16x4xf32>
    %1 = vector.shape_cast %0 : vector<1x16x16x4xf32> to vector<16x16x4xf32>
    %c0_3 = arith.constant 0 : index
    %c0_4 = arith.constant 0 : index
    %c0_5 = arith.constant 0 : index
    %c0_6 = arith.constant 0 : index
    %2 = vector.load %arg2[%c0_3, %c0_4, %c0_5, %c0_6] : memref<1x16x16x8xf32, #tpu.memory_space<vmem>>, vector<1x16x16x8xf32>
    %3 = vector.shape_cast %2 : vector<1x16x16x8xf32> to vector<16x16x8xf32>
    %c0_7 = arith.constant 0 : index
    %c0_8 = arith.constant 0 : index
    %c0_9 = arith.constant 0 : index
    %c0_10 = arith.constant 0 : index
    %4 = vector.load %arg3[%c0_7, %c0_8, %c0_9, %c0_10] : memref<1x16x16x8xf32, #tpu.memory_space<vmem>>, vector<1x16x16x8xf32>
    %5 = vector.shape_cast %4 : vector<1x16x16x8xf32> to vector<16x16x8xf32>
    %cst = arith.constant 0.000000e+00 : f32
    %6 = vector.broadcast %cst : f32 to vector<18x18x20xf32>
    %c0_11 = arith.constant 0 : index
    %c0_12 = arith.constant 0 : index
    %c0_13 = arith.constant 0 : index
    %7 = vector.load %arg11[%c0_11, %c0_12, %c0_13] : memref<18x18x20xf32, #tpu.memory_space<vmem>>, vector<18x18x20xf32>
    tpu.vector_store %arg11[%c0_11, %c0_12, %c0_13], %6 {strides = array<i32>} : memref<18x18x20xf32, #tpu.memory_space<vmem>>, vector<18x18x20xf32>,
    %8 = tpu.concatenate %1, %3, %5 in 2 : vector<16x16x4xf32>, vector<16x16x8xf32>, vector<16x16x8xf32> -> vector<16x16x20xf32>
    %c1 = arith.constant 1 : index
    %c1_14 = arith.constant 1 : index
    %c0_15 = arith.constant 0 : index
    %9 = vector.load %arg11[%c1, %c1_14, %c0_15] : memref<18x18x20xf32, #tpu.memory_space<vmem>>, vector<16x16x20xf32>
    tpu.vector_store %arg11[%c1, %c1_14, %c0_15], %8 {strides = array<i32>} : memref<18x18x20xf32, #tpu.memory_space<vmem>>, vector<16x16x20xf32>,
    %c0_16 = arith.constant 0 : index
    %c0_17 = arith.constant 0 : index
    %c0_18 = arith.constant 0 : index
    %10 = vector.load %arg11[%c0_16, %c0_17, %c0_18] : memref<18x18x20xf32, #tpu.memory_space<vmem>>, vector<18x18x20xf32>
    %11 = vector.extract_strided_slice %10 {offsets = [0, 0, 0], sizes = [16, 16, 20], strides = [1, 1, 1]} : vector<18x18x20xf32> to vector<16x16x20xf32>
    %12 = vector.shape_cast %11 : vector<16x16x20xf32> to vector<256x20xf32>
    %13 = vector.extract_strided_slice %10 {offsets = [0, 1, 0], sizes = [16, 16, 20], strides = [1, 1, 1]} : vector<18x18x20xf32> to vector<16x16x20xf32>
    %14 = vector.shape_cast %13 : vector<16x16x20xf32> to vector<256x20xf32>
    %15 = vector.extract_strided_slice %10 {offsets = [0, 2, 0], sizes = [16, 16, 20], strides = [1, 1, 1]} : vector<18x18x20xf32> to vector<16x16x20xf32>
    %16 = vector.shape_cast %15 : vector<16x16x20xf32> to vector<256x20xf32>
    %17 = vector.extract_strided_slice %10 {offsets = [1, 0, 0], sizes = [16, 16, 20], strides = [1, 1, 1]} : vector<18x18x20xf32> to vector<16x16x20xf32>
    %18 = vector.shape_cast %17 : vector<16x16x20xf32> to vector<256x20xf32>
    %19 = vector.extract_strided_slice %10 {offsets = [1, 1, 0], sizes = [16, 16, 20], strides = [1, 1, 1]} : vector<18x18x20xf32> to vector<16x16x20xf32>
    %20 = vector.shape_cast %19 : vector<16x16x20xf32> to vector<256x20xf32>
    %21 = vector.extract_strided_slice %10 {offsets = [1, 2, 0], sizes = [16, 16, 20], strides = [1, 1, 1]} : vector<18x18x20xf32> to vector<16x16x20xf32>
    %22 = vector.shape_cast %21 : vector<16x16x20xf32> to vector<256x20xf32>
    %23 = vector.extract_strided_slice %10 {offsets = [2, 0, 0], sizes = [16, 16, 20], strides = [1, 1, 1]} : vector<18x18x20xf32> to vector<16x16x20xf32>
    %24 = vector.shape_cast %23 : vector<16x16x20xf32> to vector<256x20xf32>
    %25 = vector.extract_strided_slice %10 {offsets = [2, 1, 0], sizes = [16, 16, 20], strides = [1, 1, 1]} : vector<18x18x20xf32> to vector<16x16x20xf32>
    %26 = vector.shape_cast %25 : vector<16x16x20xf32> to vector<256x20xf32>
    %27 = vector.extract_strided_slice %10 {offsets = [2, 2, 0], sizes = [16, 16, 20], strides = [1, 1, 1]} : vector<18x18x20xf32> to vector<16x16x20xf32>
    %28 = vector.shape_cast %27 : vector<16x16x20xf32> to vector<256x20xf32>
    %29 = tpu.concatenate %12, %14, %16, %18, %20, %22, %24, %26, %28 in 1 : vector<256x20xf32>, vector<256x20xf32>, vector<256x20xf32>, vector<256x20xf32>, vector<256x20xf32>, vector<256x20xf32>, vector<256x20xf32>, vector<256x20xf32>, vector<256x20xf32> -> vector<256x180xf32>
    %30 = arith.truncf %29 : vector<256x180xf32> to vector<256x180xbf16>
    %c0_19 = arith.constant 0 : index
    %c0_20 = arith.constant 0 : index
    %31 = vector.load %arg4[%c0_19, %c0_20] : memref<180x32xbf16, #tpu.memory_space<vmem>>, vector<180x32xbf16>
    %cst_21 = arith.constant dense<0.000000e+00> : vector<256x32xf32>
    %32 = tpu.matmul %30, %31, %cst_21 {dimension_numbers = #tpu.dot_dimension_numbers<[1], [0], [0], [1], [0, 0, 1, 1], [], []>} : vector<256x180xbf16>, vector<180x32xbf16>, vector<256x32xf32> -> vector<256x32xf32>
    %c0_22 = arith.constant 0 : index
    %c0_23 = arith.constant 0 : index
    %33 = vector.load %arg5[%c0_22, %c0_23] : memref<1x32xf32, #tpu.memory_space<vmem>>, vector<1x32xf32>
    %34 = vector.broadcast %33 : vector<1x32xf32> to vector<256x32xf32>
    %35 = arith.addf %32, %34 : vector<256x32xf32>
    %36 = vector.shape_cast %3 : vector<16x16x8xf32> to vector<256x8xf32>
    %37 = vector.shape_cast %5 : vector<16x16x8xf32> to vector<256x8xf32>
    %38 = vector.extract_strided_slice %35 {offsets = [0, 0], sizes = [256, 8], strides = [1, 1]} : vector<256x32xf32> to vector<256x8xf32>
    %39 = vector.extract_strided_slice %35 {offsets = [0, 8], sizes = [256, 8], strides = [1, 1]} : vector<256x32xf32> to vector<256x8xf32>
    %40 = vector.extract_strided_slice %35 {offsets = [0, 16], sizes = [256, 8], strides = [1, 1]} : vector<256x32xf32> to vector<256x8xf32>
    %41 = vector.extract_strided_slice %35 {offsets = [0, 24], sizes = [256, 8], strides = [1, 1]} : vector<256x32xf32> to vector<256x8xf32>
    %cst_24 = arith.constant -1.000000e+00 : f32
    %42 = vector.broadcast %cst_24 : f32 to vector<256x8xf32>
    %43 = arith.addf %39, %42 : vector<256x8xf32>
    %44 = arith.negf %43 : vector<256x8xf32>
    %45 = math.exp %44 : vector<256x8xf32>
    %cst_25 = arith.constant 1.000000e+00 : f32
    %46 = vector.broadcast %cst_25 : f32 to vector<256x8xf32>
    %47 = arith.addf %46, %45 : vector<256x8xf32>
    %48 = arith.divf %46, %47 : vector<256x8xf32>
    %49 = arith.mulf %48, %36 : vector<256x8xf32>
    %cst_26 = arith.constant 1.000000e+00 : f32
    %50 = vector.broadcast %cst_26 : f32 to vector<256x8xf32>
    %51 = arith.subf %50, %48 : vector<256x8xf32>
    %52 = math.tanh %38 : vector<256x8xf32>
    %53 = arith.mulf %51, %52 : vector<256x8xf32>
    %54 = arith.addf %49, %53 : vector<256x8xf32>
    %cst_27 = arith.constant -1.000000e+00 : f32
    %55 = vector.broadcast %cst_27 : f32 to vector<256x8xf32>
    %56 = arith.addf %41, %55 : vector<256x8xf32>
    %57 = arith.negf %56 : vector<256x8xf32>
    %58 = math.exp %57 : vector<256x8xf32>
    %cst_28 = arith.constant 1.000000e+00 : f32
    %59 = vector.broadcast %cst_28 : f32 to vector<256x8xf32>
    %60 = arith.addf %59, %58 : vector<256x8xf32>
    %61 = arith.divf %59, %60 : vector<256x8xf32>
    %62 = arith.mulf %61, %37 : vector<256x8xf32>
    %cst_29 = arith.constant 1.000000e+00 : f32
    %63 = vector.broadcast %cst_29 : f32 to vector<256x8xf32>
    %64 = arith.subf %63, %61 : vector<256x8xf32>
    %65 = math.tanh %40 : vector<256x8xf32>
    %66 = arith.mulf %64, %65 : vector<256x8xf32>
    %67 = arith.addf %62, %66 : vector<256x8xf32>
    %68 = vector.shape_cast %54 : vector<256x8xf32> to vector<1x16x16x8xf32>
    %c0_30 = arith.constant 0 : index
    %c0_31 = arith.constant 0 : index
    %c0_32 = arith.constant 0 : index
    %c0_33 = arith.constant 0 : index
    %69 = vector.load %arg9[%c0_30, %c0_31, %c0_32, %c0_33] : memref<1x16x16x8xf32, #tpu.memory_space<vmem>>, vector<1x16x16x8xf32>
    tpu.vector_store %arg9[%c0_30, %c0_31, %c0_32, %c0_33], %68 {strides = array<i32>} : memref<1x16x16x8xf32, #tpu.memory_space<vmem>>, vector<1x16x16x8xf32>,
    %70 = vector.shape_cast %67 : vector<256x8xf32> to vector<1x16x16x8xf32>
    %c0_34 = arith.constant 0 : index
    %c0_35 = arith.constant 0 : index
    %c0_36 = arith.constant 0 : index
    %c0_37 = arith.constant 0 : index
    %71 = vector.load %arg10[%c0_34, %c0_35, %c0_36, %c0_37] : memref<1x16x16x8xf32, #tpu.memory_space<vmem>>, vector<1x16x16x8xf32>
    tpu.vector_store %arg10[%c0_34, %c0_35, %c0_36, %c0_37], %70 {strides = array<i32>} : memref<1x16x16x8xf32, #tpu.memory_space<vmem>>, vector<1x16x16x8xf32>,
    %cst_38 = arith.constant 0.000000e+00 : f32
    %72 = vector.broadcast %cst_38 : f32 to vector<18x18x16xf32>
    %c0_39 = arith.constant 0 : index
    %c0_40 = arith.constant 0 : index
    %c0_41 = arith.constant 0 : index
    %73 = vector.load %arg12[%c0_39, %c0_40, %c0_41] : memref<18x18x16xf32, #tpu.memory_space<vmem>>, vector<18x18x16xf32>
    tpu.vector_store %arg12[%c0_39, %c0_40, %c0_41], %72 {strides = array<i32>} : memref<18x18x16xf32, #tpu.memory_space<vmem>>, vector<18x18x16xf32>,
    %74 = tpu.concatenate %54, %67 in 1 : vector<256x8xf32>, vector<256x8xf32> -> vector<256x16xf32>
    %75 = vector.shape_cast %74 : vector<256x16xf32> to vector<16x16x16xf32>
    %c1_42 = arith.constant 1 : index
    %c1_43 = arith.constant 1 : index
    %c0_44 = arith.constant 0 : index
    %76 = vector.load %arg12[%c1_42, %c1_43, %c0_44] : memref<18x18x16xf32, #tpu.memory_space<vmem>>, vector<16x16x16xf32>
    tpu.vector_store %arg12[%c1_42, %c1_43, %c0_44], %75 {strides = array<i32>} : memref<18x18x16xf32, #tpu.memory_space<vmem>>, vector<16x16x16xf32>,
    %c0_45 = arith.constant 0 : index
    %c0_46 = arith.constant 0 : index
    %c0_47 = arith.constant 0 : index
    %77 = vector.load %arg12[%c0_45, %c0_46, %c0_47] : memref<18x18x16xf32, #tpu.memory_space<vmem>>, vector<18x18x16xf32>
    %78 = vector.extract_strided_slice %77 {offsets = [0, 0, 0], sizes = [16, 16, 16], strides = [1, 1, 1]} : vector<18x18x16xf32> to vector<16x16x16xf32>
    %79 = vector.shape_cast %78 : vector<16x16x16xf32> to vector<256x16xf32>
    %80 = vector.extract_strided_slice %77 {offsets = [0, 1, 0], sizes = [16, 16, 16], strides = [1, 1, 1]} : vector<18x18x16xf32> to vector<16x16x16xf32>
    %81 = vector.shape_cast %80 : vector<16x16x16xf32> to vector<256x16xf32>
    %82 = vector.extract_strided_slice %77 {offsets = [0, 2, 0], sizes = [16, 16, 16], strides = [1, 1, 1]} : vector<18x18x16xf32> to vector<16x16x16xf32>
    %83 = vector.shape_cast %82 : vector<16x16x16xf32> to vector<256x16xf32>
    %84 = vector.extract_strided_slice %77 {offsets = [1, 0, 0], sizes = [16, 16, 16], strides = [1, 1, 1]} : vector<18x18x16xf32> to vector<16x16x16xf32>
    %85 = vector.shape_cast %84 : vector<16x16x16xf32> to vector<256x16xf32>
    %86 = vector.extract_strided_slice %77 {offsets = [1, 1, 0], sizes = [16, 16, 16], strides = [1, 1, 1]} : vector<18x18x16xf32> to vector<16x16x16xf32>
    %87 = vector.shape_cast %86 : vector<16x16x16xf32> to vector<256x16xf32>
    %88 = vector.extract_strided_slice %77 {offsets = [1, 2, 0], sizes = [16, 16, 16], strides = [1, 1, 1]} : vector<18x18x16xf32> to vector<16x16x16xf32>
    %89 = vector.shape_cast %88 : vector<16x16x16xf32> to vector<256x16xf32>
    %90 = vector.extract_strided_slice %77 {offsets = [2, 0, 0], sizes = [16, 16, 16], strides = [1, 1, 1]} : vector<18x18x16xf32> to vector<16x16x16xf32>
    %91 = vector.shape_cast %90 : vector<16x16x16xf32> to vector<256x16xf32>
    %92 = vector.extract_strided_slice %77 {offsets = [2, 1, 0], sizes = [16, 16, 16], strides = [1, 1, 1]} : vector<18x18x16xf32> to vector<16x16x16xf32>
    %93 = vector.shape_cast %92 : vector<16x16x16xf32> to vector<256x16xf32>
    %94 = vector.extract_strided_slice %77 {offsets = [2, 2, 0], sizes = [16, 16, 16], strides = [1, 1, 1]} : vector<18x18x16xf32> to vector<16x16x16xf32>
    %95 = vector.shape_cast %94 : vector<16x16x16xf32> to vector<256x16xf32>
    %96 = tpu.concatenate %79, %81, %83, %85, %87, %89, %91, %93, %95 in 1 : vector<256x16xf32>, vector<256x16xf32>, vector<256x16xf32>, vector<256x16xf32>, vector<256x16xf32>, vector<256x16xf32>, vector<256x16xf32>, vector<256x16xf32>, vector<256x16xf32> -> vector<256x144xf32>
    %97 = arith.truncf %96 : vector<256x144xf32> to vector<256x144xbf16>
    %c0_48 = arith.constant 0 : index
    %c0_49 = arith.constant 0 : index
    %98 = vector.load %arg6[%c0_48, %c0_49] : memref<144x16xbf16, #tpu.memory_space<vmem>>, vector<144x16xbf16>
    %cst_50 = arith.constant dense<0.000000e+00> : vector<256x16xf32>
    %99 = tpu.matmul %97, %98, %cst_50 {dimension_numbers = #tpu.dot_dimension_numbers<[1], [0], [0], [1], [0, 0, 1, 1], [], []>} : vector<256x144xbf16>, vector<144x16xbf16>, vector<256x16xf32> -> vector<256x16xf32>
    %c0_51 = arith.constant 0 : index
    %c0_52 = arith.constant 0 : index
    %100 = vector.load %arg7[%c0_51, %c0_52] : memref<1x16xf32, #tpu.memory_space<vmem>>, vector<1x16xf32>
    %101 = vector.broadcast %100 : vector<1x16xf32> to vector<256x16xf32>
    %102 = arith.addf %99, %101 : vector<256x16xf32>
    %103 = vector.extract_strided_slice %102 {offsets = [0, 0], sizes = [256, 8], strides = [1, 1]} : vector<256x16xf32> to vector<256x8xf32>
    %104 = arith.negf %103 : vector<256x8xf32>
    %105 = math.exp %104 : vector<256x8xf32>
    %cst_53 = arith.constant 1.000000e+00 : f32
    %106 = vector.broadcast %cst_53 : f32 to vector<256x8xf32>
    %107 = arith.addf %106, %105 : vector<256x8xf32>
    %108 = arith.divf %106, %107 : vector<256x8xf32>
    %109 = vector.extract_strided_slice %102 {offsets = [0, 8], sizes = [256, 8], strides = [1, 1]} : vector<256x16xf32> to vector<256x8xf32>
    %110 = math.tanh %109 : vector<256x8xf32>
    %111 = arith.mulf %108, %110 : vector<256x8xf32>
    %112 = vector.shape_cast %111 : vector<256x8xf32> to vector<1x16x16x8xf32>
    %c0_54 = arith.constant 0 : index
    %c0_55 = arith.constant 0 : index
    %c0_56 = arith.constant 0 : index
    %c0_57 = arith.constant 0 : index
    %113 = vector.load %arg8[%c0_54, %c0_55, %c0_56, %c0_57] : memref<1x16x16x8xf32, #tpu.memory_space<vmem>>, vector<1x16x16x8xf32>
    tpu.vector_store %arg8[%c0_54, %c0_55, %c0_56, %c0_57], %112 {strides = array<i32>} : memref<1x16x16x8xf32, #tpu.memory_space<vmem>>, vector<1x16x16x8xf32>,
    return
  }
  func.func @transform_0(%arg0: i32) -> (i32, i32, i32, i32) {
    %c0_i32 = arith.constant 0 : i32
    %c0_i32_0 = arith.constant 0 : i32
    %c0_i32_1 = arith.constant 0 : i32
    %c0_i32_2 = arith.constant 0 : i32
    return %arg0, %c0_i32, %c0_i32_0, %c0_i32_1 : i32, i32, i32, i32
  }
  func.func @transform_1(%arg0: i32) -> (i32, i32, i32, i32) {
    %c0_i32 = arith.constant 0 : i32
    %c0_i32_0 = arith.constant 0 : i32
    %c0_i32_1 = arith.constant 0 : i32
    %c0_i32_2 = arith.constant 0 : i32
    return %arg0, %c0_i32, %c0_i32_0, %c0_i32_1 : i32, i32, i32, i32
  }
  func.func @transform_2(%arg0: i32) -> (i32, i32, i32, i32) {
    %c0_i32 = arith.constant 0 : i32
    %c0_i32_0 = arith.constant 0 : i32
    %c0_i32_1 = arith.constant 0 : i32
    %c0_i32_2 = arith.constant 0 : i32
    return %arg0, %c0_i32, %c0_i32_0, %c0_i32_1 : i32, i32, i32, i32
  }
  func.func @transform_3(%arg0: i32) -> (i32, i32) {
    %c0_i32 = arith.constant 0 : i32
    %c0_i32_0 = arith.constant 0 : i32
    %c0_i32_1 = arith.constant 0 : i32
    return %c0_i32, %c0_i32_0 : i32, i32
  }
  func.func @transform_4(%arg0: i32) -> (i32, i32) {
    %c0_i32 = arith.constant 0 : i32
    %c0_i32_0 = arith.constant 0 : i32
    %c0_i32_1 = arith.constant 0 : i32
    return %c0_i32, %c0_i32_0 : i32, i32
  }
  func.func @transform_5(%arg0: i32) -> (i32, i32) {
    %c0_i32 = arith.constant 0 : i32
    %c0_i32_0 = arith.constant 0 : i32
    %c0_i32_1 = arith.constant 0 : i32
    return %c0_i32, %c0_i32_0 : i32, i32
  }
  func.func @transform_6(%arg0: i32) -> (i32, i32) {
    %c0_i32 = arith.constant 0 : i32
    %c0_i32_0 = arith.constant 0 : i32
    %c0_i32_1 = arith.constant 0 : i32
    return %c0_i32, %c0_i32_0 : i32, i32
  }
  func.func @transform_7(%arg0: i32) -> (i32, i32, i32, i32) {
    %c0_i32 = arith.constant 0 : i32
    %c0_i32_0 = arith.constant 0 : i32
    %c0_i32_1 = arith.constant 0 : i32
    %c0_i32_2 = arith.constant 0 : i32
    return %arg0, %c0_i32, %c0_i32_0, %c0_i32_1 : i32, i32, i32, i32
  }
  func.func @transform_8(%arg0: i32) -> (i32, i32, i32, i32) {
    %c0_i32 = arith.constant 0 : i32
    %c0_i32_0 = arith.constant 0 : i32
    %c0_i32_1 = arith.constant 0 : i32
    %c0_i32_2 = arith.constant 0 : i32
    return %arg0, %c0_i32, %c0_i32_0, %c0_i32_1 : i32, i32, i32, i32
  }
  func.func @transform_9(%arg0: i32) -> (i32, i32, i32, i32) {
    %c0_i32 = arith.constant 0 : i32
    %c0_i32_0 = arith.constant 0 : i32
    %c0_i32_1 = arith.constant 0 : i32
    %c0_i32_2 = arith.constant 0 : i32
    return %arg0, %c0_i32, %c0_i32_0, %c0_i32_1 : i32, i32, i32, i32
  }
}

</mosaic_0001>

<llo_original>
// kernel: cgl_forward.1
$region0: #{cgl_forward.1}
  #allocation0 [shape = 'u32[]', space=smem, size = 0x4, offset = 0x4, fixed_abs, tag = 'smem constant byte address 0x4 - core index']
  #allocation1 [shape = 'u32[72,128]{1,0:T(1,128)}', space=vmem, size = 0x9000, scoped, tag = 'internal scratch']
  #allocation2 [shape = 'f32[18,18,20]{2,1,0:T(8,128)}', space=vmem, size = 0x36000, scoped, tag = 'scratch operand']
  #allocation3 [shape = 'f32[18,18,16]{2,1,0:T(8,128)}', space=vmem, size = 0x36000, scoped, tag = 'scratch operand']
  %s0 = inlined_call_operand.vmem [shape: f32[2,16,16,4], index: 0, kind: input, shape index: {}]
  %s1 = inlined_call_operand.vmem [shape: f32[2,16,16,8], index: 1, kind: input, shape index: {}]
  %s2 = inlined_call_operand.vmem [shape: f32[2,16,16,8], index: 2, kind: input, shape index: {}]
  %s3 = inlined_call_operand.vmem [shape: bf16[180,32], index: 3, kind: input, shape index: {}]
  %s4 = inlined_call_operand.vmem [shape: f32[1,32], index: 4, kind: input, shape index: {}]
  %s5 = inlined_call_operand.vmem [shape: bf16[144,16], index: 5, kind: input, shape index: {}]
  %s6 = inlined_call_operand.vmem [shape: f32[1,16], index: 6, kind: input, shape index: {}]
  %s7 = inlined_call_operand.vmem [shape: f32[2,16,16,8], index: 7, kind: output, shape index: {0}]
  %s8 = inlined_call_operand.vmem [shape: f32[2,16,16,8], index: 8, kind: output, shape index: {1}]
  %s9 = inlined_call_operand.vmem [shape: f32[2,16,16,8], index: 9, kind: output, shape index: {2}]
  %10 = xla_tuple %s7, %s8, %s9
  %s11 = sld [smem:[#allocation0]]
  $region77: #{cgl_forward.1} parent=0
    _
  %s13 = ssub.s32 1, %s11
  %s14 = scalar_select 0, %s13, %s11
  loop: start=0, step=1, limit=4
  $region2: #{cgl_forward.1} parent=0 // loop_pre_header
    _
  $region3: #{cgl_forward.1} parent=0 // loop_header
    %s16 = sphi 0, %s20
    %p17 = scmp.ge.s32.totalorder %s16, 4
    %s26 = sphi 0, %s28
    %s29 = sphi 0, %s26
    %s30 = sphi 0, %s29
    %s46 = sphi 0, %s30
    %s52 = sphi 0, %s54
    %s55 = sphi 0, %s52
    %s56 = sphi 0, %s55
    %s72 = sphi 0, %s56
    %s78 = sphi 0, %s80
    %s81 = sphi 0, %s78
    %s82 = sphi 0, %s81
    %s98 = sphi 0, %s82
    %s102 = sphi 0, %s102
    %s104 = sphi 0, %s102
    %s105 = sphi 0, %s104
    %s119 = sphi 0, %s105
    %s123 = sphi 0, %s123
    %s125 = sphi 0, %s123
    %s126 = sphi 0, %s125
    %s140 = sphi 0, %s126
    %s144 = sphi 0, %s144
    %s146 = sphi 0, %s144
    %s147 = sphi 0, %s146
    %s161 = sphi 0, %s147
    %s165 = sphi 0, %s165
    %s167 = sphi 0, %s165
    %s168 = sphi 0, %s167
    %s182 = sphi 0, %s168
    %s188 = sphi 0, %s190
    %s191 = sphi 0, %s188
    %s192 = sphi 0, %s191
    %s208 = sphi 0, %s192
    %s214 = sphi 0, %s216
    %s217 = sphi 0, %s214
    %s218 = sphi 0, %s217
    %s234 = sphi 0, %s218
    %s240 = sphi 0, %s242
    %s243 = sphi 0, %s240
    %s244 = sphi 0, %s243
    %s260 = sphi 0, %s244
  $region4: #{cgl_forward.1} parent=0 // loop_header_branch
    %19 = sbr.rel (%p17) target = $region8
  $region5: #{cgl_forward.1} parent=0 // loop_body
    %s21 = ssub.s32 %s16, 1
    %s22 = ssub.s32 %s16, 2
    %s23 = sadd.s32 %s16, 1
    %s24 = ssub.s32 %s16, %s23
    %p25 = scmp.eq.s32.totalorder %s24, 0
    %s27 = sadd.s32 %s26, 1
    %s28 = scalar_select %p25, %s26, %s27
    %p31 = pneg %p25
    %p32 = scmp.eq.s32.totalorder %s16, 1
    %p33 = por %p31, %p32
    %p34 = scmp.ne.s32.totalorder %s26, %s29
    %p35 = scmp.eq.s32.totalorder %s16, 0
    %p36 = por %p34, %p35
    %p37 = scmp.ne.s32.totalorder %s26, %s29
    %p38 = scmp.eq.s32.totalorder %s21, 1
    %p39 = por %p37, %p38
    %p40 = scmp.ne.s32.totalorder %s29, %s30
    %p41 = scmp.eq.s32.totalorder %s21, 0
    %p42 = por %p40, %p41
    %p43 = scmp.ne.s32.totalorder %s29, %s30
    %p44 = scmp.eq.s32.totalorder %s22, 1
    %p45 = por %p43, %p44
    %p47 = scmp.ne.s32.totalorder %s30, %s46
    %p48 = scmp.eq.s32.totalorder %s22, 0
    %p49 = por %p47, %p48
    %s50 = ssub.s32 %s16, %s23
    %p51 = scmp.eq.s32.totalorder %s50, 0
    %s53 = sadd.s32 %s52, 1
    %s54 = scalar_select %p51, %s52, %s53
    %p57 = pneg %p51
    %p58 = scmp.eq.s32.totalorder %s16, 1
    %p59 = por %p57, %p58
    %p60 = scmp.ne.s32.totalorder %s52, %s55
    %p61 = scmp.eq.s32.totalorder %s16, 0
    %p62 = por %p60, %p61
    %p63 = scmp.ne.s32.totalorder %s52, %s55
    %p64 = scmp.eq.s32.totalorder %s21, 1
    %p65 = por %p63, %p64
    %p66 = scmp.ne.s32.totalorder %s55, %s56
    %p67 = scmp.eq.s32.totalorder %s21, 0
    %p68 = por %p66, %p67
    %p69 = scmp.ne.s32.totalorder %s55, %s56
    %p70 = scmp.eq.s32.totalorder %s22, 1
    %p71 = por %p69, %p70
    %p73 = scmp.ne.s32.totalorder %s56, %s72
    %p74 = scmp.eq.s32.totalorder %s22, 0
    %p75 = por %p73, %p74
    %s76 = ssub.s32 %s16, %s23
    %p77 = scmp.eq.s32.totalorder %s76, 0
    %s79 = sadd.s32 %s78, 1
    %s80 = scalar_select %p77, %s78, %s79
    %p83 = pneg %p77
    %p84 = scmp.eq.s32.totalorder %s16, 1
    %p85 = por %p83, %p84
    %p86 = scmp.ne.s32.totalorder %s78, %s81
    %p87 = scmp.eq.s32.totalorder %s16, 0
    %p88 = por %p86, %p87
    %p89 = scmp.ne.s32.totalorder %s78, %s81
    %p90 = scmp.eq.s32.totalorder %s21, 1
    %p91 = por %p89, %p90
    %p92 = scmp.ne.s32.totalorder %s81, %s82
    %p93 = scmp.eq.s32.totalorder %s21, 0
    %p94 = por %p92, %p93
    %p95 = scmp.ne.s32.totalorder %s81, %s82
    %p96 = scmp.eq.s32.totalorder %s22, 1
    %p97 = por %p95, %p96
    %p99 = scmp.ne.s32.totalorder %s82, %s98
    %p100 = scmp.eq.s32.totalorder %s22, 0
    %p101 = por %p99, %p100
    %s103 = sadd.s32 %s102, 1
    %p106 = scmp.eq.s32.totalorder %s16, 1
    %p107 = scmp.ne.s32.totalorder %s102, %s104
    %p108 = scmp.eq.s32.totalorder %s16, 0
    %p109 = por %p107, %p108
    %p110 = scmp.ne.s32.totalorder %s102, %s104
    %p111 = scmp.eq.s32.totalorder %s21, 1
    %p112 = por %p110, %p111
    %p113 = scmp.ne.s32.totalorder %s104, %s105
    %p114 = scmp.eq.s32.totalorder %s21, 0
    %p115 = por %p113, %p114
    %p116 = scmp.ne.s32.totalorder %s104, %s105
    %p117 = scmp.eq.s32.totalorder %s22, 1
    %p118 = por %p116, %p117
    %p120 = scmp.ne.s32.totalorder %s105, %s119
    %p121 = scmp.eq.s32.totalorder %s22, 0
    %p122 = por %p120, %p121
    %s124 = sadd.s32 %s123, 1
    %p127 = scmp.eq.s32.totalorder %s16, 1
    %p128 = scmp.ne.s32.totalorder %s123, %s125
    %p129 = scmp.eq.s32.totalorder %s16, 0
    %p130 = por %p128, %p129
    %p131 = scmp.ne.s32.totalorder %s123, %s125
    %p132 = scmp.eq.s32.totalorder %s21, 1
    %p133 = por %p131, %p132
    %p134 = scmp.ne.s32.totalorder %s125, %s126
    %p135 = scmp.eq.s32.totalorder %s21, 0
    %p136 = por %p134, %p135
    %p137 = scmp.ne.s32.totalorder %s125, %s126
    %p138 = scmp.eq.s32.totalorder %s22, 1
    %p139 = por %p137, %p138
    %p141 = scmp.ne.s32.totalorder %s126, %s140
    %p142 = scmp.eq.s32.totalorder %s22, 0
    %p143 = por %p141, %p142
    %s145 = sadd.s32 %s144, 1
    %p148 = scmp.eq.s32.totalorder %s16, 1
    %p149 = scmp.ne.s32.totalorder %s144, %s146
    %p150 = scmp.eq.s32.totalorder %s16, 0
    %p151 = por %p149, %p150
    %p152 = scmp.ne.s32.totalorder %s144, %s146
    %p153 = scmp.eq.s32.totalorder %s21, 1
    %p154 = por %p152, %p153
    %p155 = scmp.ne.s32.totalorder %s146, %s147
    %p156 = scmp.eq.s32.totalorder %s21, 0
    %p157 = por %p155, %p156
    %p158 = scmp.ne.s32.totalorder %s146, %s147
    %p159 = scmp.eq.s32.totalorder %s22, 1
    %p160 = por %p158, %p159
    %p162 = scmp.ne.s32.totalorder %s147, %s161
    %p163 = scmp.eq.s32.totalorder %s22, 0
    %p164 = por %p162, %p163
    %s166 = sadd.s32 %s165, 1
    %p169 = scmp.eq.s32.totalorder %s16, 1
    %p170 = scmp.ne.s32.totalorder %s165, %s167
    %p171 = scmp.eq.s32.totalorder %s16, 0
    %p172 = por %p170, %p171
    %p173 = scmp.ne.s32.totalorder %s165, %s167
    %p174 = scmp.eq.s32.totalorder %s21, 1
    %p175 = por %p173, %p174
    %p176 = scmp.ne.s32.totalorder %s167, %s168
    %p177 = scmp.eq.s32.totalorder %s21, 0
    %p178 = por %p176, %p177
    %p179 = scmp.ne.s32.totalorder %s167, %s168
    %p180 = scmp.eq.s32.totalorder %s22, 1
    %p181 = por %p179, %p180
    %p183 = scmp.ne.s32.totalorder %s168, %s182
    %p184 = scmp.eq.s32.totalorder %s22, 0
    %p185 = por %p183, %p184
    %s186 = ssub.s32 %s16, %s23
    %p187 = scmp.eq.s32.totalorder %s186, 0
    %s189 = sadd.s32 %s188, 1
    %s190 = scalar_select %p187, %s188, %s189
    %p193 = pneg %p187
    %p194 = scmp.eq.s32.totalorder %s16, 1
    %p195 = por %p193, %p194
    %p196 = scmp.ne.s32.totalorder %s188, %s191
    %p197 = scmp.eq.s32.totalorder %s16, 0
    %p198 = por %p196, %p197
    %p199 = scmp.ne.s32.totalorder %s188, %s191
    %p200 = scmp.eq.s32.totalorder %s21, 1
    %p201 = por %p199, %p200
    %p202 = scmp.ne.s32.totalorder %s191, %s192
    %p203 = scmp.eq.s32.totalorder %s21, 0
    %p204 = por %p202, %p203
    %p205 = scmp.ne.s32.totalorder %s191, %s192
    %p206 = scmp.eq.s32.totalorder %s22, 1
    %p207 = por %p205, %p206
    %p209 = scmp.ne.s32.totalorder %s192, %s208
    %p210 = scmp.eq.s32.totalorder %s22, 0
    %p211 = por %p209, %p210
    %s212 = ssub.s32 %s16, %s23
    %p213 = scmp.eq.s32.totalorder %s212, 0
    %s215 = sadd.s32 %s214, 1
    %s216 = scalar_select %p213, %s214, %s215
    %p219 = pneg %p213
    %p220 = scmp.eq.s32.totalorder %s16, 1
    %p221 = por %p219, %p220
    %p222 = scmp.ne.s32.totalorder %s214, %s217
    %p223 = scmp.eq.s32.totalorder %s16, 0
    %p224 = por %p222, %p223
    %p225 = scmp.ne.s32.totalorder %s214, %s217
    %p226 = scmp.eq.s32.totalorder %s21, 1
    %p227 = por %p225, %p226
    %p228 = scmp.ne.s32.totalorder %s217, %s218
    %p229 = scmp.eq.s32.totalorder %s21, 0
    %p230 = por %p228, %p229
    %p231 = scmp.ne.s32.totalorder %s217, %s218
    %p232 = scmp.eq.s32.totalorder %s22, 1
    %p233 = por %p231, %p232
    %p235 = scmp.ne.s32.totalorder %s218, %s234
    %p236 = scmp.eq.s32.totalorder %s22, 0
    %p237 = por %p235, %p236
    %s238 = ssub.s32 %s16, %s23
    %p239 = scmp.eq.s32.totalorder %s238, 0
    %s241 = sadd.s32 %s240, 1
    %s242 = scalar_select %p239, %s240, %s241
    %p245 = pneg %p239
    %p246 = scmp.eq.s32.totalorder %s16, 1
    %p247 = por %p245, %p246
    %p248 = scmp.ne.s32.totalorder %s240, %s243
    %p249 = scmp.eq.s32.totalorder %s16, 0
    %p250 = por %p248, %p249
    %p251 = scmp.ne.s32.totalorder %s240, %s243
    %p252 = scmp.eq.s32.totalorder %s21, 1
    %p253 = por %p251, %p252
    %p254 = scmp.ne.s32.totalorder %s243, %s244
    %p255 = scmp.eq.s32.totalorder %s21, 0
    %p256 = por %p254, %p255
    %p257 = scmp.ne.s32.totalorder %s243, %s244
    %p258 = scmp.eq.s32.totalorder %s22, 1
    %p259 = por %p257, %p258
    %p261 = scmp.ne.s32.totalorder %s244, %s260
    %p262 = scmp.eq.s32.totalorder %s22, 0
    %p263 = por %p261, %p262
    %p264 = scmp.le.s32.totalorder 1, %s16
    %p265 = scmp.lt.s32.totalorder %s16, 3
    %p266 = pnand %p264, %p265
    %p267 = pneg %p266
    // Predicated region
    $region9: #{cgl_forward.1} parent=5 // pred_check
      _
    $region10: #{cgl_forward.1} parent=5 // pred_check_branch
      %269 = sbr.rel (%p266) target = $region12
    $region11: #{cgl_forward.1} parent=5 // pred_region
      %s270 = ssub.s32 %s16, 1
      // Predicated region
      $region13: #{cgl_forward.1} parent=11 // pred_check
        %p271 = pneg %p115
      $region14: #{cgl_forward.1} parent=11 // pred_check_branch
        %273 = sbr.rel (%p271) target = $region16
      $region15: #{cgl_forward.1} parent=11 // pred_region
        _
      $region16: #{cgl_forward.1} parent=11 // pred_fallthru
        _
      // Predicated region
      $region17: #{cgl_forward.1} parent=11 // pred_check
        %p274 = pneg %p136
      $region18: #{cgl_forward.1} parent=11 // pred_check_branch
        %276 = sbr.rel (%p274) target = $region20
      $region19: #{cgl_forward.1} parent=11 // pred_region
        _
      $region20: #{cgl_forward.1} parent=11 // pred_fallthru
        _
      // Predicated region
      $region21: #{cgl_forward.1} parent=11 // pred_check
        %p277 = pneg %p157
      $region22: #{cgl_forward.1} parent=11 // pred_check_branch
        %279 = sbr.rel (%p277) target = $region24
      $region23: #{cgl_forward.1} parent=11 // pred_region
        _
      $region24: #{cgl_forward.1} parent=11 // pred_fallthru
        _
      // Predicated region
      $region25: #{cgl_forward.1} parent=11 // pred_check
        %p280 = pneg %p178
      $region26: #{cgl_forward.1} parent=11 // pred_check_branch
        %282 = sbr.rel (%p280) target = $region28
      $region27: #{cgl_forward.1} parent=11 // pred_region
        _
      $region28: #{cgl_forward.1} parent=11 // pred_fallthru
        _
    $region12: #{cgl_forward.1} parent=5 // pred_fallthru
      _
    %p283 = scmp.lt.s32.totalorder %s16, 2
    // Predicated region
    $region29: #{cgl_forward.1} parent=5 // pred_check
      %p284 = pneg %p283
    $region30: #{cgl_forward.1} parent=5 // pred_check_branch
      %286 = sbr.rel (%p284) target = $region32
    $region31: #{cgl_forward.1} parent=5 // pred_region
      // Predicated region
      $region33: #{cgl_forward.1} parent=31 // pred_check
        %p287 = pneg %p36
      $region34: #{cgl_forward.1} parent=31 // pred_check_branch
        %289 = sbr.rel (%p287) target = $region36
      $region35: #{cgl_forward.1} parent=31 // pred_region
        %p290 = scmp.lt.s32.totalorder %s16, 1
        %s291 = scalar_select %p290, %s16, 1
        %s292 = smul.addr %s291, 32
        %s293 = smul.addr %s292, 8
        %s294 = scalar_lea.vmem %s0, %s293
      $region36: #{cgl_forward.1} parent=31 // pred_fallthru
        _
      // Predicated region
      $region37: #{cgl_forward.1} parent=31 // pred_check
        %p295 = pneg %p62
      $region38: #{cgl_forward.1} parent=31 // pred_check_branch
        %297 = sbr.rel (%p295) target = $region40
      $region39: #{cgl_forward.1} parent=31 // pred_region
        %p298 = scmp.lt.s32.totalorder %s16, 1
        %s299 = scalar_select %p298, %s16, 1
        %s300 = smul.addr %s299, 32
        %s301 = smul.addr %s300, 8
        %s302 = scalar_lea.vmem %s1, %s301
      $region40: #{cgl_forward.1} parent=31 // pred_fallthru
        _
      // Predicated region
      $region41: #{cgl_forward.1} parent=31 // pred_check
        %p303 = pneg %p88
      $region42: #{cgl_forward.1} parent=31 // pred_check_branch
        %305 = sbr.rel (%p303) target = $region44
      $region43: #{cgl_forward.1} parent=31 // pred_region
        %p306 = scmp.lt.s32.totalorder %s16, 1
        %s307 = scalar_select %p306, %s16, 1
        %s308 = smul.addr %s307, 32
        %s309 = smul.addr %s308, 8
        %s310 = scalar_lea.vmem %s2, %s309
      $region44: #{cgl_forward.1} parent=31 // pred_fallthru
        _
    $region32: #{cgl_forward.1} parent=5 // pred_fallthru
      _
    %p311 = scmp.le.s32.totalorder 1, %s16
    %p312 = scmp.lt.s32.totalorder %s16, 3
    %p313 = pnand %p311, %p312
    %p314 = pneg %p313
    // Predicated region
    $region45: #{cgl_forward.1} parent=5 // pred_check
      _
    $region46: #{cgl_forward.1} parent=5 // pred_check_branch
      %316 = sbr.rel (%p313) target = $region48
    $region47: #{cgl_forward.1} parent=5 // pred_region
      %s317 = ssub.s32 %s16, 1
      %p318 = scmp.lt.s32.totalorder %s21, 1
      %s319 = scalar_select %p318, %s21, 1
      %s320 = smul.addr %s319, 32
      %s321 = smul.addr %s320, 8
      %s322 = scalar_lea.vmem %s0, %s321
      %p323 = pneg %p42
      %p324 = pneg %p39
      %p325 = scmp.lt.s32.totalorder %s21, 1
      %s326 = scalar_select %p325, %s21, 1
      %s327 = smul.addr %s326, 32
      %s328 = smul.addr %s327, 8
      %s329 = scalar_lea.vmem %s1, %s328
      %p330 = pneg %p68
      %p331 = pneg %p65
      %p332 = scmp.lt.s32.totalorder %s21, 1
      %s333 = scalar_select %p332, %s21, 1
      %s334 = smul.addr %s333, 32
      %s335 = smul.addr %s334, 8
      %s336 = scalar_lea.vmem %s2, %s335
      %p337 = pneg %p94
      %p338 = pneg %p91
      %p339 = pneg %p115
      %p340 = pneg %p112
      %p341 = pneg %p136
      %p342 = pneg %p133
      %p343 = pneg %p157
      %p344 = pneg %p154
      %p345 = pneg %p178
      %p346 = pneg %p175
      %p347 = pneg %p204
      %p348 = pneg %p201
      %p349 = scmp.lt.s32.totalorder %s21, 1
      %s350 = scalar_select %p349, %s21, 1
      %s351 = smul.addr %s350, 32
      %s352 = smul.addr %s351, 8
      %s353 = scalar_lea.vmem %s7, %s352
      %p354 = pneg %p230
      %p355 = pneg %p227
      %p356 = scmp.lt.s32.totalorder %s21, 1
      %s357 = scalar_select %p356, %s21, 1
      %s358 = smul.addr %s357, 32
      %s359 = smul.addr %s358, 8
      %s360 = scalar_lea.vmem %s8, %s359
      %p361 = pneg %p256
      %p362 = pneg %p253
      %p363 = scmp.lt.s32.totalorder %s21, 1
      %s364 = scalar_select %p363, %s21, 1
      %s365 = smul.addr %s364, 32
      %s366 = smul.addr %s365, 8
      %s367 = scalar_lea.vmem %s9, %s366
      %p368 = scmp.lt.s32.totalorder %s21, 1
      %s369 = scalar_select %p368, %s21, 1
      %s370 = smul.addr %s369, 32
      %s371 = smul.addr %s370, 8
      %s372 = scalar_lea.vmem %s0, %s371
      %p373 = scmp.lt.s32.totalorder %s21, 1
      %s374 = scalar_select %p373, %s21, 1
      %s375 = smul.addr %s374, 32
      %s376 = smul.addr %s375, 8
      %s377 = scalar_lea.vmem %s1, %s376
      %p378 = scmp.lt.s32.totalorder %s21, 1
      %s379 = scalar_select %p378, %s21, 1
      %s380 = smul.addr %s379, 32
      %s381 = smul.addr %s380, 8
      %s382 = scalar_lea.vmem %s2, %s381
      %p383 = scmp.lt.s32.totalorder %s21, 1
      %s384 = scalar_select %p383, %s21, 1
      %s385 = smul.addr %s384, 32
      %s386 = smul.addr %s385, 8
      %s387 = scalar_lea.vmem %s7, %s386
      %p388 = scmp.lt.s32.totalorder %s21, 1
      %s389 = scalar_select %p388, %s21, 1
      %s390 = smul.addr %s389, 32
      %s391 = smul.addr %s390, 8
      %s392 = scalar_lea.vmem %s8, %s391
      %p393 = scmp.lt.s32.totalorder %s21, 1
      %s394 = scalar_select %p393, %s21, 1
      %s395 = smul.addr %s394, 32
      %s396 = smul.addr %s395, 8
      %s397 = scalar_lea.vmem %s9, %s396
      %v399 = vld [vmem:[%s372] sm:$0xff]
      %v400 = vld [vmem:[%s372 + $0x8] sm:$0xff]
      %v401 = vld [vmem:[%s372 + $0x10] sm:$0xff]
      %v402 = vld [vmem:[%s372 + $0x18] sm:$0xff]
      %v403 = vld [vmem:[%s372 + $0x20] sm:$0xff]
      %v404 = vld [vmem:[%s372 + $0x28] sm:$0xff]
      %v405 = vld [vmem:[%s372 + $0x30] sm:$0xff]
      %v406 = vld [vmem:[%s372 + $0x38] sm:$0xff]
      %v407 = vld [vmem:[%s372 + $0x40] sm:$0xff]
      %v408 = vld [vmem:[%s372 + $0x48] sm:$0xff]
      %v409 = vld [vmem:[%s372 + $0x50] sm:$0xff]
      %v410 = vld [vmem:[%s372 + $0x58] sm:$0xff]
      %v411 = vld [vmem:[%s372 + $0x60] sm:$0xff]
      %v412 = vld [vmem:[%s372 + $0x68] sm:$0xff]
      %v413 = vld [vmem:[%s372 + $0x70] sm:$0xff]
      %v414 = vld [vmem:[%s372 + $0x78] sm:$0xff]
      %v415 = vld [vmem:[%s372 + $0x80] sm:$0xff]
      %v416 = vld [vmem:[%s372 + $0x88] sm:$0xff]
      %v417 = vld [vmem:[%s372 + $0x90] sm:$0xff]
      %v418 = vld [vmem:[%s372 + $0x98] sm:$0xff]
      %v419 = vld [vmem:[%s372 + $0xa0] sm:$0xff]
      %v420 = vld [vmem:[%s372 + $0xa8] sm:$0xff]
      %v421 = vld [vmem:[%s372 + $0xb0] sm:$0xff]
      %v422 = vld [vmem:[%s372 + $0xb8] sm:$0xff]
      %v423 = vld [vmem:[%s372 + $0xc0] sm:$0xff]
      %v424 = vld [vmem:[%s372 + $0xc8] sm:$0xff]
      %v425 = vld [vmem:[%s372 + $0xd0] sm:$0xff]
      %v426 = vld [vmem:[%s372 + $0xd8] sm:$0xff]
      %v427 = vld [vmem:[%s372 + $0xe0] sm:$0xff]
      %v428 = vld [vmem:[%s372 + $0xe8] sm:$0xff]
      %v429 = vld [vmem:[%s372 + $0xf0] sm:$0xff]
      %v430 = vld [vmem:[%s372 + $0xf8] sm:$0xff]
      %v431 = vld [vmem:[%s377] sm:$0xff]
      %v432 = vld [vmem:[%s377 + $0x8] sm:$0xff]
      %v433 = vld [vmem:[%s377 + $0x10] sm:$0xff]
      %v434 = vld [vmem:[%s377 + $0x18] sm:$0xff]
      %v435 = vld [vmem:[%s377 + $0x20] sm:$0xff]
      %v436 = vld [vmem:[%s377 + $0x28] sm:$0xff]
      %v437 = vld [vmem:[%s377 + $0x30] sm:$0xff]
      %v438 = vld [vmem:[%s377 + $0x38] sm:$0xff]
      %v439 = vld [vmem:[%s377 + $0x40] sm:$0xff]
      %v440 = vld [vmem:[%s377 + $0x48] sm:$0xff]
      %v441 = vld [vmem:[%s377 + $0x50] sm:$0xff]
      %v442 = vld [vmem:[%s377 + $0x58] sm:$0xff]
      %v443 = vld [vmem:[%s377 + $0x60] sm:$0xff]
      %v444 = vld [vmem:[%s377 + $0x68] sm:$0xff]
      %v445 = vld [vmem:[%s377 + $0x70] sm:$0xff]
      %v446 = vld [vmem:[%s377 + $0x78] sm:$0xff]
      %v447 = vld [vmem:[%s377 + $0x80] sm:$0xff]
      %v448 = vld [vmem:[%s377 + $0x88] sm:$0xff]
      %v449 = vld [vmem:[%s377 + $0x90] sm:$0xff]
      %v450 = vld [vmem:[%s377 + $0x98] sm:$0xff]
      %v451 = vld [vmem:[%s377 + $0xa0] sm:$0xff]
      %v452 = vld [vmem:[%s377 + $0xa8] sm:$0xff]
      %v453 = vld [vmem:[%s377 + $0xb0] sm:$0xff]
      %v454 = vld [vmem:[%s377 + $0xb8] sm:$0xff]
      %v455 = vld [vmem:[%s377 + $0xc0] sm:$0xff]
      %v456 = vld [vmem:[%s377 + $0xc8] sm:$0xff]
      %v457 = vld [vmem:[%s377 + $0xd0] sm:$0xff]
      %v458 = vld [vmem:[%s377 + $0xd8] sm:$0xff]
      %v459 = vld [vmem:[%s377 + $0xe0] sm:$0xff]
      %v460 = vld [vmem:[%s377 + $0xe8] sm:$0xff]
      %v461 = vld [vmem:[%s377 + $0xf0] sm:$0xff]
      %v462 = vld [vmem:[%s377 + $0xf8] sm:$0xff]
      %v463 = vld [vmem:[%s382] sm:$0xff]
      %v464 = vld [vmem:[%s382 + $0x8] sm:$0xff]
      %v465 = vld [vmem:[%s382 + $0x10] sm:$0xff]
      %v466 = vld [vmem:[%s382 + $0x18] sm:$0xff]
      %v467 = vld [vmem:[%s382 + $0x20] sm:$0xff]
      %v468 = vld [vmem:[%s382 + $0x28] sm:$0xff]
      %v469 = vld [vmem:[%s382 + $0x30] sm:$0xff]
      %v470 = vld [vmem:[%s382 + $0x38] sm:$0xff]
      %v471 = vld [vmem:[%s382 + $0x40] sm:$0xff]
      %v472 = vld [vmem:[%s382 + $0x48] sm:$0xff]
      %v473 = vld [vmem:[%s382 + $0x50] sm:$0xff]
      %v474 = vld [vmem:[%s382 + $0x58] sm:$0xff]
      %v475 = vld [vmem:[%s382 + $0x60] sm:$0xff]
      %v476 = vld [vmem:[%s382 + $0x68] sm:$0xff]
      %v477 = vld [vmem:[%s382 + $0x70] sm:$0xff]
      %v478 = vld [vmem:[%s382 + $0x78] sm:$0xff]
      %v479 = vld [vmem:[%s382 + $0x80] sm:$0xff]
      %v480 = vld [vmem:[%s382 + $0x88] sm:$0xff]
      %v481 = vld [vmem:[%s382 + $0x90] sm:$0xff]
      %v482 = vld [vmem:[%s382 + $0x98] sm:$0xff]
      %v483 = vld [vmem:[%s382 + $0xa0] sm:$0xff]
      %v484 = vld [vmem:[%s382 + $0xa8] sm:$0xff]
      %v485 = vld [vmem:[%s382 + $0xb0] sm:$0xff]
      %v486 = vld [vmem:[%s382 + $0xb8] sm:$0xff]
      %v487 = vld [vmem:[%s382 + $0xc0] sm:$0xff]
      %v488 = vld [vmem:[%s382 + $0xc8] sm:$0xff]
      %v489 = vld [vmem:[%s382 + $0xd0] sm:$0xff]
      %v490 = vld [vmem:[%s382 + $0xd8] sm:$0xff]
      %v491 = vld [vmem:[%s382 + $0xe0] sm:$0xff]
      %v492 = vld [vmem:[%s382 + $0xe8] sm:$0xff]
      %v493 = vld [vmem:[%s382 + $0xf0] sm:$0xff]
      %v494 = vld [vmem:[%s382 + $0xf8] sm:$0xff]
      %vm495 = vcmask 162816
      %496 = vst.msk [vmem:[#allocation2] sm:$0xff] %vm495, 0.0
      %497 = vst.msk [vmem:[#allocation2 + $0x8] sm:$0xff] %vm495, 0.0
      %vm498 = vcmask 156672
      %499 = vst.msk [vmem:[#allocation2 + $0x10] sm:$0x3] %vm498, 0.0
      %500 = vst.msk [vmem:[#allocation2 + $0x18] sm:$0xff] %vm495, 0.0
      %501 = vst.msk [vmem:[#allocation2 + $0x20] sm:$0xff] %vm495, 0.0
      %502 = vst.msk [vmem:[#allocation2 + $0x28] sm:$0x3] %vm498, 0.0
      %503 = vst.msk [vmem:[#allocation2 + $0x30] sm:$0xff] %vm495, 0.0
      %504 = vst.msk [vmem:[#allocation2 + $0x38] sm:$0xff] %vm495, 0.0
      %505 = vst.msk [vmem:[#allocation2 + $0x40] sm:$0x3] %vm498, 0.0
      %506 = vst.msk [vmem:[#allocation2 + $0x48] sm:$0xff] %vm495, 0.0
      %507 = vst.msk [vmem:[#allocation2 + $0x50] sm:$0xff] %vm495, 0.0
      %508 = vst.msk [vmem:[#allocation2 + $0x58] sm:$0x3] %vm498, 0.0
      %509 = vst.msk [vmem:[#allocation2 + $0x60] sm:$0xff] %vm495, 0.0
      %510 = vst.msk [vmem:[#allocation2 + $0x68] sm:$0xff] %vm495, 0.0
      %511 = vst.msk [vmem:[#allocation2 + $0x70] sm:$0x3] %vm498, 0.0
      %512 = vst.msk [vmem:[#allocation2 + $0x78] sm:$0xff] %vm495, 0.0
      %513 = vst.msk [vmem:[#allocation2 + $0x80] sm:$0xff] %vm495, 0.0
      %514 = vst.msk [vmem:[#allocation2 + $0x88] sm:$0x3] %vm498, 0.0
      %515 = vst.msk [vmem:[#allocation2 + $0x90] sm:$0xff] %vm495, 0.0
      %516 = vst.msk [vmem:[#allocation2 + $0x98] sm:$0xff] %vm495, 0.0
      %517 = vst.msk [vmem:[#allocation2 + $0xa0] sm:$0x3] %vm498, 0.0
      %518 = vst.msk [vmem:[#allocation2 + $0xa8] sm:$0xff] %vm495, 0.0
      %519 = vst.msk [vmem:[#allocation2 + $0xb0] sm:$0xff] %vm495, 0.0
      %520 = vst.msk [vmem:[#allocation2 + $0xb8] sm:$0x3] %vm498, 0.0
      %521 = vst.msk [vmem:[#allocation2 + $0xc0] sm:$0xff] %vm495, 0.0
      %522 = vst.msk [vmem:[#allocation2 + $0xc8] sm:$0xff] %vm495, 0.0
      %523 = vst.msk [vmem:[#allocation2 + $0xd0] sm:$0x3] %vm498, 0.0
      %524 = vst.msk [vmem:[#allocation2 + $0xd8] sm:$0xff] %vm495, 0.0
      %525 = vst.msk [vmem:[#allocation2 + $0xe0] sm:$0xff] %vm495, 0.0
      %526 = vst.msk [vmem:[#allocation2 + $0xe8] sm:$0x3] %vm498, 0.0
      %527 = vst.msk [vmem:[#allocation2 + $0xf0] sm:$0xff] %vm495, 0.0
      %528 = vst.msk [vmem:[#allocation2 + $0xf8] sm:$0xff] %vm495, 0.0
      %529 = vst.msk [vmem:[#allocation2 + $0x100] sm:$0x3] %vm498, 0.0
      %530 = vst.msk [vmem:[#allocation2 + $0x108] sm:$0xff] %vm495, 0.0
      %531 = vst.msk [vmem:[#allocation2 + $0x110] sm:$0xff] %vm495, 0.0
      %532 = vst.msk [vmem:[#allocation2 + $0x118] sm:$0x3] %vm498, 0.0
      %533 = vst.msk [vmem:[#allocation2 + $0x120] sm:$0xff] %vm495, 0.0
      %534 = vst.msk [vmem:[#allocation2 + $0x128] sm:$0xff] %vm495, 0.0
      %535 = vst.msk [vmem:[#allocation2 + $0x130] sm:$0x3] %vm498, 0.0
      %536 = vst.msk [vmem:[#allocation2 + $0x138] sm:$0xff] %vm495, 0.0
      %537 = vst.msk [vmem:[#allocation2 + $0x140] sm:$0xff] %vm495, 0.0
      %538 = vst.msk [vmem:[#allocation2 + $0x148] sm:$0x3] %vm498, 0.0
      %539 = vst.msk [vmem:[#allocation2 + $0x150] sm:$0xff] %vm495, 0.0
      %540 = vst.msk [vmem:[#allocation2 + $0x158] sm:$0xff] %vm495, 0.0
      %541 = vst.msk [vmem:[#allocation2 + $0x160] sm:$0x3] %vm498, 0.0
      %542 = vst.msk [vmem:[#allocation2 + $0x168] sm:$0xff] %vm495, 0.0
      %543 = vst.msk [vmem:[#allocation2 + $0x170] sm:$0xff] %vm495, 0.0
      %544 = vst.msk [vmem:[#allocation2 + $0x178] sm:$0x3] %vm498, 0.0
      %545 = vst.msk [vmem:[#allocation2 + $0x180] sm:$0xff] %vm495, 0.0
      %546 = vst.msk [vmem:[#allocation2 + $0x188] sm:$0xff] %vm495, 0.0
      %547 = vst.msk [vmem:[#allocation2 + $0x190] sm:$0x3] %vm498, 0.0
      %548 = vst.msk [vmem:[#allocation2 + $0x198] sm:$0xff] %vm495, 0.0
      %549 = vst.msk [vmem:[#allocation2 + $0x1a0] sm:$0xff] %vm495, 0.0
      %550 = vst.msk [vmem:[#allocation2 + $0x1a8] sm:$0x3] %vm498, 0.0
      %583 = vrot.lane.b32.xlu0 %v431, 4
      %v584 = vpop.permute.xlu0 %583
      %585 = vrot.lane.b32.xlu0 %v432, 4
      %v586 = vpop.permute.xlu0 %585
      %587 = vrot.lane.b32.xlu0 %v433, 4
      %v588 = vpop.permute.xlu0 %587
      %589 = vrot.lane.b32.xlu0 %v434, 4
      %v590 = vpop.permute.xlu0 %589
      %591 = vrot.lane.b32.xlu0 %v435, 4
      %v592 = vpop.permute.xlu0 %591
      %593 = vrot.lane.b32.xlu0 %v436, 4
      %v594 = vpop.permute.xlu0 %593
      %595 = vrot.lane.b32.xlu0 %v437, 4
      %v596 = vpop.permute.xlu0 %595
      %597 = vrot.lane.b32.xlu0 %v438, 4
      %v598 = vpop.permute.xlu0 %597
      %599 = vrot.lane.b32.xlu0 %v439, 4
      %v600 = vpop.permute.xlu0 %599
      %601 = vrot.lane.b32.xlu0 %v440, 4
      %v602 = vpop.permute.xlu0 %601
      %603 = vrot.lane.b32.xlu0 %v441, 4
      %v604 = vpop.permute.xlu0 %603
      %605 = vrot.lane.b32.xlu0 %v442, 4
      %v606 = vpop.permute.xlu0 %605
      %607 = vrot.lane.b32.xlu0 %v443, 4
      %v608 = vpop.permute.xlu0 %607
      %609 = vrot.lane.b32.xlu0 %v444, 4
      %v610 = vpop.permute.xlu0 %609
      %611 = vrot.lane.b32.xlu0 %v445, 4
      %v612 = vpop.permute.xlu0 %611
      %613 = vrot.lane.b32.xlu0 %v446, 4
      %v614 = vpop.permute.xlu0 %613
      %615 = vrot.lane.b32.xlu0 %v447, 4
      %v616 = vpop.permute.xlu0 %615
      %617 = vrot.lane.b32.xlu0 %v448, 4
      %v618 = vpop.permute.xlu0 %617
      %619 = vrot.lane.b32.xlu0 %v449, 4
      %v620 = vpop.permute.xlu0 %619
      %621 = vrot.lane.b32.xlu0 %v450, 4
      %v622 = vpop.permute.xlu0 %621
      %623 = vrot.lane.b32.xlu0 %v451, 4
      %v624 = vpop.permute.xlu0 %623
      %625 = vrot.lane.b32.xlu0 %v452, 4
      %v626 = vpop.permute.xlu0 %625
      %627 = vrot.lane.b32.xlu0 %v453, 4
      %v628 = vpop.permute.xlu0 %627
      %629 = vrot.lane.b32.xlu0 %v454, 4
      %v630 = vpop.permute.xlu0 %629
      %631 = vrot.lane.b32.xlu0 %v455, 4
      %v632 = vpop.permute.xlu0 %631
      %633 = vrot.lane.b32.xlu0 %v456, 4
      %v634 = vpop.permute.xlu0 %633
      %635 = vrot.lane.b32.xlu0 %v457, 4
      %v636 = vpop.permute.xlu0 %635
      %637 = vrot.lane.b32.xlu0 %v458, 4
      %v638 = vpop.permute.xlu0 %637
      %639 = vrot.lane.b32.xlu0 %v459, 4
      %v640 = vpop.permute.xlu0 %639
      %641 = vrot.lane.b32.xlu0 %v460, 4
      %v642 = vpop.permute.xlu0 %641
      %643 = vrot.lane.b32.xlu0 %v461, 4
      %v644 = vpop.permute.xlu0 %643
      %645 = vrot.lane.b32.xlu0 %v462, 4
      %v646 = vpop.permute.xlu0 %645
      %711 = vrot.lane.b32.xlu0 %v463, 12
      %v712 = vpop.permute.xlu0 %711
      %713 = vrot.lane.b32.xlu0 %v464, 12
      %v714 = vpop.permute.xlu0 %713
      %715 = vrot.lane.b32.xlu0 %v465, 12
      %v716 = vpop.permute.xlu0 %715
      %717 = vrot.lane.b32.xlu0 %v466, 12
      %v718 = vpop.permute.xlu0 %717
      %719 = vrot.lane.b32.xlu0 %v467, 12
      %v720 = vpop.permute.xlu0 %719
      %721 = vrot.lane.b32.xlu0 %v468, 12
      %v722 = vpop.permute.xlu0 %721
      %723 = vrot.lane.b32.xlu0 %v469, 12
      %v724 = vpop.permute.xlu0 %723
      %725 = vrot.lane.b32.xlu0 %v470, 12
      %v726 = vpop.permute.xlu0 %725
      %727 = vrot.lane.b32.xlu0 %v471, 12
      %v728 = vpop.permute.xlu0 %727
      %729 = vrot.lane.b32.xlu0 %v472, 12
      %v730 = vpop.permute.xlu0 %729
      %731 = vrot.lane.b32.xlu0 %v473, 12
      %v732 = vpop.permute.xlu0 %731
      %733 = vrot.lane.b32.xlu0 %v474, 12
      %v734 = vpop.permute.xlu0 %733
      %735 = vrot.lane.b32.xlu0 %v475, 12
      %v736 = vpop.permute.xlu0 %735
      %737 = vrot.lane.b32.xlu0 %v476, 12
      %v738 = vpop.permute.xlu0 %737
      %739 = vrot.lane.b32.xlu0 %v477, 12
      %v740 = vpop.permute.xlu0 %739
      %741 = vrot.lane.b32.xlu0 %v478, 12
      %v742 = vpop.permute.xlu0 %741
      %743 = vrot.lane.b32.xlu0 %v479, 12
      %v744 = vpop.permute.xlu0 %743
      %745 = vrot.lane.b32.xlu0 %v480, 12
      %v746 = vpop.permute.xlu0 %745
      %747 = vrot.lane.b32.xlu0 %v481, 12
      %v748 = vpop.permute.xlu0 %747
      %749 = vrot.lane.b32.xlu0 %v482, 12
      %v750 = vpop.permute.xlu0 %749
      %751 = vrot.lane.b32.xlu0 %v483, 12
      %v752 = vpop.permute.xlu0 %751
      %753 = vrot.lane.b32.xlu0 %v484, 12
      %v754 = vpop.permute.xlu0 %753
      %755 = vrot.lane.b32.xlu0 %v485, 12
      %v756 = vpop.permute.xlu0 %755
      %757 = vrot.lane.b32.xlu0 %v486, 12
      %v758 = vpop.permute.xlu0 %757
      %759 = vrot.lane.b32.xlu0 %v487, 12
      %v760 = vpop.permute.xlu0 %759
      %761 = vrot.lane.b32.xlu0 %v488, 12
      %v762 = vpop.permute.xlu0 %761
      %763 = vrot.lane.b32.xlu0 %v489, 12
      %v764 = vpop.permute.xlu0 %763
      %765 = vrot.lane.b32.xlu0 %v490, 12
      %v766 = vpop.permute.xlu0 %765
      %767 = vrot.lane.b32.xlu0 %v491, 12
      %v768 = vpop.permute.xlu0 %767
      %769 = vrot.lane.b32.xlu0 %v492, 12
      %v770 = vpop.permute.xlu0 %769
      %771 = vrot.lane.b32.xlu0 %v493, 12
      %v772 = vpop.permute.xlu0 %771
      %773 = vrot.lane.b32.xlu0 %v494, 12
      %v774 = vpop.permute.xlu0 %773
      %vm807 = vcmask 31744
      %v808 = vsel %vm807, %v399, %v584
      %v809 = vsel %vm807, %v400, %v586
      %v810 = vsel %vm807, %v401, %v588
      %v811 = vsel %vm807, %v402, %v590
      %v812 = vsel %vm807, %v403, %v592
      %v813 = vsel %vm807, %v404, %v594
      %v814 = vsel %vm807, %v405, %v596
      %v815 = vsel %vm807, %v406, %v598
      %v816 = vsel %vm807, %v407, %v600
      %v817 = vsel %vm807, %v408, %v602
      %v818 = vsel %vm807, %v409, %v604
      %v819 = vsel %vm807, %v410, %v606
      %v820 = vsel %vm807, %v411, %v608
      %v821 = vsel %vm807, %v412, %v610
      %v822 = vsel %vm807, %v413, %v612
      %v823 = vsel %vm807, %v414, %v614
      %v824 = vsel %vm807, %v415, %v616
      %v825 = vsel %vm807, %v416, %v618
      %v826 = vsel %vm807, %v417, %v620
      %v827 = vsel %vm807, %v418, %v622
      %v828 = vsel %vm807, %v419, %v624
      %v829 = vsel %vm807, %v420, %v626
      %v830 = vsel %vm807, %v421, %v628
      %v831 = vsel %vm807, %v422, %v630
      %v832 = vsel %vm807, %v423, %v632
      %v833 = vsel %vm807, %v424, %v634
      %v834 = vsel %vm807, %v425, %v636
      %v835 = vsel %vm807, %v426, %v638
      %v836 = vsel %vm807, %v427, %v640
      %v837 = vsel %vm807, %v428, %v642
      %v838 = vsel %vm807, %v429, %v644
      %v839 = vsel %vm807, %v430, %v646
      %vm840 = vcmask 97280
      %v841 = vsel %vm840, %v808, %v712
      %v842 = vsel %vm840, %v809, %v714
      %v843 = vsel %vm840, %v810, %v716
      %v844 = vsel %vm840, %v811, %v718
      %v845 = vsel %vm840, %v812, %v720
      %v846 = vsel %vm840, %v813, %v722
      %v847 = vsel %vm840, %v814, %v724
      %v848 = vsel %vm840, %v815, %v726
      %v849 = vsel %vm840, %v816, %v728
      %v850 = vsel %vm840, %v817, %v730
      %v851 = vsel %vm840, %v818, %v732
      %v852 = vsel %vm840, %v819, %v734
      %v853 = vsel %vm840, %v820, %v736
      %v854 = vsel %vm840, %v821, %v738
      %v855 = vsel %vm840, %v822, %v740
      %v856 = vsel %vm840, %v823, %v742
      %v857 = vsel %vm840, %v824, %v744
      %v858 = vsel %vm840, %v825, %v746
      %v859 = vsel %vm840, %v826, %v748
      %v860 = vsel %vm840, %v827, %v750
      %v861 = vsel %vm840, %v828, %v752
      %v862 = vsel %vm840, %v829, %v754
      %v863 = vsel %vm840, %v830, %v756
      %v864 = vsel %vm840, %v831, %v758
      %v865 = vsel %vm840, %v832, %v760
      %v866 = vsel %vm840, %v833, %v762
      %v867 = vsel %vm840, %v834, %v764
      %v868 = vsel %vm840, %v835, %v766
      %v869 = vsel %vm840, %v836, %v768
      %v870 = vsel %vm840, %v837, %v770
      %v871 = vsel %vm840, %v838, %v772
      %v872 = vsel %vm840, %v839, %v774
      %s873 = scalar_lea.vmem [#allocation2], 24
      %874 = vst.msk [vmem:[%s873 + $0x1] sm:$0xff] %vm495, %v841
      %875 = vst.msk [vmem:[%s873 + $0x9] sm:$0xff] %vm495, %v842
      %876 = vst.msk [vmem:[%s873 + $0x19] sm:$0xff] %vm495, %v843
      %877 = vst.msk [vmem:[%s873 + $0x21] sm:$0xff] %vm495, %v844
      %878 = vst.msk [vmem:[%s873 + $0x31] sm:$0xff] %vm495, %v845
      %879 = vst.msk [vmem:[%s873 + $0x39] sm:$0xff] %vm495, %v846
      %880 = vst.msk [vmem:[%s873 + $0x49] sm:$0xff] %vm495, %v847
      %881 = vst.msk [vmem:[%s873 + $0x51] sm:$0xff] %vm495, %v848
      %882 = vst.msk [vmem:[%s873 + $0x61] sm:$0xff] %vm495, %v849
      %883 = vst.msk [vmem:[%s873 + $0x69] sm:$0xff] %vm495, %v850
      %884 = vst.msk [vmem:[%s873 + $0x79] sm:$0xff] %vm495, %v851
      %885 = vst.msk [vmem:[%s873 + $0x81] sm:$0xff] %vm495, %v852
      %886 = vst.msk [vmem:[%s873 + $0x91] sm:$0xff] %vm495, %v853
      %887 = vst.msk [vmem:[%s873 + $0x99] sm:$0xff] %vm495, %v854
      %888 = vst.msk [vmem:[%s873 + $0xa9] sm:$0xff] %vm495, %v855
      %889 = vst.msk [vmem:[%s873 + $0xb1] sm:$0xff] %vm495, %v856
      %890 = vst.msk [vmem:[%s873 + $0xc1] sm:$0xff] %vm495, %v857
      %891 = vst.msk [vmem:[%s873 + $0xc9] sm:$0xff] %vm495, %v858
      %892 = vst.msk [vmem:[%s873 + $0xd9] sm:$0xff] %vm495, %v859
      %893 = vst.msk [vmem:[%s873 + $0xe1] sm:$0xff] %vm495, %v860
      %894 = vst.msk [vmem:[%s873 + $0xf1] sm:$0xff] %vm495, %v861
      %895 = vst.msk [vmem:[%s873 + $0xf9] sm:$0xff] %vm495, %v862
      %896 = vst.msk [vmem:[%s873 + $0x109] sm:$0xff] %vm495, %v863
      %897 = vst.msk [vmem:[%s873 + $0x111] sm:$0xff] %vm495, %v864
      %898 = vst.msk [vmem:[%s873 + $0x121] sm:$0xff] %vm495, %v865
      %899 = vst.msk [vmem:[%s873 + $0x129] sm:$0xff] %vm495, %v866
      %900 = vst.msk [vmem:[%s873 + $0x139] sm:$0xff] %vm495, %v867
      %901 = vst.msk [vmem:[%s873 + $0x141] sm:$0xff] %vm495, %v868
      %902 = vst.msk [vmem:[%s873 + $0x151] sm:$0xff] %vm495, %v869
      %903 = vst.msk [vmem:[%s873 + $0x159] sm:$0xff] %vm495, %v870
      %904 = vst.msk [vmem:[%s873 + $0x169] sm:$0xff] %vm495, %v871
      %905 = vst.msk [vmem:[%s873 + $0x171] sm:$0xff] %vm495, %v872
      %v906 = vld [vmem:[#allocation2] sm:$0xff]
      %v907 = vld [vmem:[#allocation2 + $0x8] sm:$0xff]
      %v908 = vld [vmem:[#allocation2 + $0x10] sm:$0x3]
      %v909 = vld [vmem:[#allocation2 + $0x18] sm:$0xff]
      %v910 = vld [vmem:[#allocation2 + $0x20] sm:$0xff]
      %v911 = vld [vmem:[#allocation2 + $0x28] sm:$0x3]
      %v912 = vld [vmem:[#allocation2 + $0x30] sm:$0xff]
      %v913 = vld [vmem:[#allocation2 + $0x38] sm:$0xff]
      %v914 = vld [vmem:[#allocation2 + $0x40] sm:$0x3]
      %v915 = vld [vmem:[#allocation2 + $0x48] sm:$0xff]
      %v916 = vld [vmem:[#allocation2 + $0x50] sm:$0xff]
      %v917 = vld [vmem:[#allocation2 + $0x58] sm:$0x3]
      %v918 = vld [vmem:[#allocation2 + $0x60] sm:$0xff]
      %v919 = vld [vmem:[#allocation2 + $0x68] sm:$0xff]
      %v920 = vld [vmem:[#allocation2 + $0x70] sm:$0x3]
      %v921 = vld [vmem:[#allocation2 + $0x78] sm:$0xff]
      %v922 = vld [vmem:[#allocation2 + $0x80] sm:$0xff]
      %v923 = vld [vmem:[#allocation2 + $0x88] sm:$0x3]
      %v924 = vld [vmem:[#allocation2 + $0x90] sm:$0xff]
      %v925 = vld [vmem:[#allocation2 + $0x98] sm:$0xff]
      %v926 = vld [vmem:[#allocation2 + $0xa0] sm:$0x3]
      %v927 = vld [vmem:[#allocation2 + $0xa8] sm:$0xff]
      %v928 = vld [vmem:[#allocation2 + $0xb0] sm:$0xff]
      %v929 = vld [vmem:[#allocation2 + $0xb8] sm:$0x3]
      %v930 = vld [vmem:[#allocation2 + $0xc0] sm:$0xff]
      %v931 = vld [vmem:[#allocation2 + $0xc8] sm:$0xff]
      %v932 = vld [vmem:[#allocation2 + $0xd0] sm:$0x3]
      %v933 = vld [vmem:[#allocation2 + $0xd8] sm:$0xff]
      %v934 = vld [vmem:[#allocation2 + $0xe0] sm:$0xff]
      %v935 = vld [vmem:[#allocation2 + $0xe8] sm:$0x3]
      %v936 = vld [vmem:[#allocation2 + $0xf0] sm:$0xff]
      %v937 = vld [vmem:[#allocation2 + $0xf8] sm:$0xff]
      %v938 = vld [vmem:[#allocation2 + $0x100] sm:$0x3]
      %v939 = vld [vmem:[#allocation2 + $0x108] sm:$0xff]
      %v940 = vld [vmem:[#allocation2 + $0x110] sm:$0xff]
      %v941 = vld [vmem:[#allocation2 + $0x118] sm:$0x3]
      %v942 = vld [vmem:[#allocation2 + $0x120] sm:$0xff]
      %v943 = vld [vmem:[#allocation2 + $0x128] sm:$0xff]
      %v944 = vld [vmem:[#allocation2 + $0x130] sm:$0x3]
      %v945 = vld [vmem:[#allocation2 + $0x138] sm:$0xff]
      %v946 = vld [vmem:[#allocation2 + $0x140] sm:$0xff]
      %v947 = vld [vmem:[#allocation2 + $0x148] sm:$0x3]
      %v948 = vld [vmem:[#allocation2 + $0x150] sm:$0xff]
      %v949 = vld [vmem:[#allocation2 + $0x158] sm:$0xff]
      %v950 = vld [vmem:[#allocation2 + $0x160] sm:$0x3]
      %v951 = vld [vmem:[#allocation2 + $0x168] sm:$0xff]
      %v952 = vld [vmem:[#allocation2 + $0x170] sm:$0xff]
      %v953 = vld [vmem:[#allocation2 + $0x178] sm:$0x3]
      %v954 = vld [vmem:[#allocation2 + $0x180] sm:$0xff]
      %v955 = vld [vmem:[#allocation2 + $0x188] sm:$0xff]
      %v956 = vld [vmem:[#allocation2 + $0x190] sm:$0x3]
      %v957 = vld [vmem:[#allocation2 + $0x198] sm:$0xff]
      %v958 = vld [vmem:[#allocation2 + $0x1a0] sm:$0xff]
      %v959 = vld [vmem:[#allocation2 + $0x1a8] sm:$0x3]
      %vm1008 = vcmask 1046528
      %v1009 = vrot.slane %v906, 1
      %v1010 = vrot.slane %v907, 1
      %v1011 = vsel %vm1008, %v1009, %v1010
      %v1012 = vrot.slane %v908, 1
      %v1013 = vsel %vm1008, %v1010, %v1012
      %v1014 = vrot.slane %v909, 1
      %v1015 = vrot.slane %v910, 1
      %v1016 = vsel %vm1008, %v1014, %v1015
      %v1017 = vrot.slane %v911, 1
      %v1018 = vsel %vm1008, %v1015, %v1017
      %v1019 = vrot.slane %v912, 1
      %v1020 = vrot.slane %v913, 1
      %v1021 = vsel %vm1008, %v1019, %v1020
      %v1022 = vrot.slane %v914, 1
      %v1023 = vsel %vm1008, %v1020, %v1022
      %v1024 = vrot.slane %v915, 1
      %v1025 = vrot.slane %v916, 1
      %v1026 = vsel %vm1008, %v1024, %v1025
      %v1027 = vrot.slane %v917, 1
      %v1028 = vsel %vm1008, %v1025, %v1027
      %v1029 = vrot.slane %v918, 1
      %v1030 = vrot.slane %v919, 1
      %v1031 = vsel %vm1008, %v1029, %v1030
      %v1032 = vrot.slane %v920, 1
      %v1033 = vsel %vm1008, %v1030, %v1032
      %v1034 = vrot.slane %v921, 1
      %v1035 = vrot.slane %v922, 1
      %v1036 = vsel %vm1008, %v1034, %v1035
      %v1037 = vrot.slane %v923, 1
      %v1038 = vsel %vm1008, %v1035, %v1037
      %v1039 = vrot.slane %v924, 1
      %v1040 = vrot.slane %v925, 1
      %v1041 = vsel %vm1008, %v1039, %v1040
      %v1042 = vrot.slane %v926, 1
      %v1043 = vsel %vm1008, %v1040, %v1042
      %v1044 = vrot.slane %v927, 1
      %v1045 = vrot.slane %v928, 1
      %v1046 = vsel %vm1008, %v1044, %v1045
      %v1047 = vrot.slane %v929, 1
      %v1048 = vsel %vm1008, %v1045, %v1047
      %v1049 = vrot.slane %v930, 1
      %v1050 = vrot.slane %v931, 1
      %v1051 = vsel %vm1008, %v1049, %v1050
      %v1052 = vrot.slane %v932, 1
      %v1053 = vsel %vm1008, %v1050, %v1052
      %v1054 = vrot.slane %v933, 1
      %v1055 = vrot.slane %v934, 1
      %v1056 = vsel %vm1008, %v1054, %v1055
      %v1057 = vrot.slane %v935, 1
      %v1058 = vsel %vm1008, %v1055, %v1057
      %v1059 = vrot.slane %v936, 1
      %v1060 = vrot.slane %v937, 1
      %v1061 = vsel %vm1008, %v1059, %v1060
      %v1062 = vrot.slane %v938, 1
      %v1063 = vsel %vm1008, %v1060, %v1062
      %v1064 = vrot.slane %v939, 1
      %v1065 = vrot.slane %v940, 1
      %v1066 = vsel %vm1008, %v1064, %v1065
      %v1067 = vrot.slane %v941, 1
      %v1068 = vsel %vm1008, %v1065, %v1067
      %v1069 = vrot.slane %v942, 1
      %v1070 = vrot.slane %v943, 1
      %v1071 = vsel %vm1008, %v1069, %v1070
      %v1072 = vrot.slane %v944, 1
      %v1073 = vsel %vm1008, %v1070, %v1072
      %v1074 = vrot.slane %v945, 1
      %v1075 = vrot.slane %v946, 1
      %v1076 = vsel %vm1008, %v1074, %v1075
      %v1077 = vrot.slane %v947, 1
      %v1078 = vsel %vm1008, %v1075, %v1077
      %v1079 = vrot.slane %v948, 1
      %v1080 = vrot.slane %v949, 1
      %v1081 = vsel %vm1008, %v1079, %v1080
      %v1082 = vrot.slane %v950, 1
      %v1083 = vsel %vm1008, %v1080, %v1082
      %v1084 = vrot.slane %v951, 1
      %v1085 = vrot.slane %v952, 1
      %v1086 = vsel %vm1008, %v1084, %v1085
      %v1087 = vrot.slane %v953, 1
      %v1088 = vsel %vm1008, %v1085, %v1087
      %vm1089 = vcmask 1045504
      %v1090 = vrot.slane %v906, 2
      %v1091 = vrot.slane %v907, 2
      %v1092 = vsel %vm1089, %v1090, %v1091
      %v1093 = vrot.slane %v908, 2
      %v1094 = vsel %vm1089, %v1091, %v1093
      %v1095 = vrot.slane %v909, 2
      %v1096 = vrot.slane %v910, 2
      %v1097 = vsel %vm1089, %v1095, %v1096
      %v1098 = vrot.slane %v911, 2
      %v1099 = vsel %vm1089, %v1096, %v1098
      %v1100 = vrot.slane %v912, 2
      %v1101 = vrot.slane %v913, 2
      %v1102 = vsel %vm1089, %v1100, %v1101
      %v1103 = vrot.slane %v914, 2
      %v1104 = vsel %vm1089, %v1101, %v1103
      %v1105 = vrot.slane %v915, 2
      %v1106 = vrot.slane %v916, 2
      %v1107 = vsel %vm1089, %v1105, %v1106
      %v1108 = vrot.slane %v917, 2
      %v1109 = vsel %vm1089, %v1106, %v1108
      %v1110 = vrot.slane %v918, 2
      %v1111 = vrot.slane %v919, 2
      %v1112 = vsel %vm1089, %v1110, %v1111
      %v1113 = vrot.slane %v920, 2
      %v1114 = vsel %vm1089, %v1111, %v1113
      %v1115 = vrot.slane %v921, 2
      %v1116 = vrot.slane %v922, 2
      %v1117 = vsel %vm1089, %v1115, %v1116
      %v1118 = vrot.slane %v923, 2
      %v1119 = vsel %vm1089, %v1116, %v1118
      %v1120 = vrot.slane %v924, 2
      %v1121 = vrot.slane %v925, 2
      %v1122 = vsel %vm1089, %v1120, %v1121
      %v1123 = vrot.slane %v926, 2
      %v1124 = vsel %vm1089, %v1121, %v1123
      %v1125 = vrot.slane %v927, 2
      %v1126 = vrot.slane %v928, 2
      %v1127 = vsel %vm1089, %v1125, %v1126
      %v1128 = vrot.slane %v929, 2
      %v1129 = vsel %vm1089, %v1126, %v1128
      %v1130 = vrot.slane %v930, 2
      %v1131 = vrot.slane %v931, 2
      %v1132 = vsel %vm1089, %v1130, %v1131
      %v1133 = vrot.slane %v932, 2
      %v1134 = vsel %vm1089, %v1131, %v1133
      %v1135 = vrot.slane %v933, 2
      %v1136 = vrot.slane %v934, 2
      %v1137 = vsel %vm1089, %v1135, %v1136
      %v1138 = vrot.slane %v935, 2
      %v1139 = vsel %vm1089, %v1136, %v1138
      %v1140 = vrot.slane %v936, 2
      %v1141 = vrot.slane %v937, 2
      %v1142 = vsel %vm1089, %v1140, %v1141
      %v1143 = vrot.slane %v938, 2
      %v1144 = vsel %vm1089, %v1141, %v1143
      %v1145 = vrot.slane %v939, 2
      %v1146 = vrot.slane %v940, 2
      %v1147 = vsel %vm1089, %v1145, %v1146
      %v1148 = vrot.slane %v941, 2
      %v1149 = vsel %vm1089, %v1146, %v1148
      %v1150 = vrot.slane %v942, 2
      %v1151 = vrot.slane %v943, 2
      %v1152 = vsel %vm1089, %v1150, %v1151
      %v1153 = vrot.slane %v944, 2
      %v1154 = vsel %vm1089, %v1151, %v1153
      %v1155 = vrot.slane %v945, 2
      %v1156 = vrot.slane %v946, 2
      %v1157 = vsel %vm1089, %v1155, %v1156
      %v1158 = vrot.slane %v947, 2
      %v1159 = vsel %vm1089, %v1156, %v1158
      %v1160 = vrot.slane %v948, 2
      %v1161 = vrot.slane %v949, 2
      %v1162 = vsel %vm1089, %v1160, %v1161
      %v1163 = vrot.slane %v950, 2
      %v1164 = vsel %vm1089, %v1161, %v1163
      %v1165 = vrot.slane %v951, 2
      %v1166 = vrot.slane %v952, 2
      %v1167 = vsel %vm1089, %v1165, %v1166
      %v1168 = vrot.slane %v953, 2
      %v1169 = vsel %vm1089, %v1166, %v1168
      %v1173 = vrot.slane %v954, 1
      %v1174 = vrot.slane %v955, 1
      %v1175 = vsel %vm1008, %v1173, %v1174
      %v1176 = vrot.slane %v956, 1
      %v1177 = vsel %vm1008, %v1174, %v1176
      %v1178 = vrot.slane %v954, 2
      %v1179 = vrot.slane %v955, 2
      %v1180 = vsel %vm1089, %v1178, %v1179
      %v1181 = vrot.slane %v956, 2
      %v1182 = vsel %vm1089, %v1179, %v1181
      %v1186 = vrot.slane %v957, 1
      %v1187 = vrot.slane %v958, 1
      %v1188 = vsel %vm1008, %v1186, %v1187
      %v1189 = vrot.slane %v959, 1
      %v1190 = vsel %vm1008, %v1187, %v1189
      %v1191 = vrot.slane %v957, 2
      %v1192 = vrot.slane %v958, 2
      %v1193 = vsel %vm1089, %v1191, %v1192
      %v1194 = vrot.slane %v959, 2
      %v1195 = vsel %vm1089, %v1192, %v1194
      %1196 = vrot.lane.b32.xlu0 %v1011, 20
      %v1197 = vpop.permute.xlu0 %1196
      %1198 = vrot.lane.b32.xlu0 %v1013, 20
      %v1199 = vpop.permute.xlu0 %1198
      %1200 = vrot.lane.b32.xlu0 %v1016, 20
      %v1201 = vpop.permute.xlu0 %1200
      %1202 = vrot.lane.b32.xlu0 %v1018, 20
      %v1203 = vpop.permute.xlu0 %1202
      %1204 = vrot.lane.b32.xlu0 %v1021, 20
      %v1205 = vpop.permute.xlu0 %1204
      %1206 = vrot.lane.b32.xlu0 %v1023, 20
      %v1207 = vpop.permute.xlu0 %1206
      %1208 = vrot.lane.b32.xlu0 %v1026, 20
      %v1209 = vpop.permute.xlu0 %1208
      %1210 = vrot.lane.b32.xlu0 %v1028, 20
      %v1211 = vpop.permute.xlu0 %1210
      %1212 = vrot.lane.b32.xlu0 %v1031, 20
      %v1213 = vpop.permute.xlu0 %1212
      %1214 = vrot.lane.b32.xlu0 %v1033, 20
      %v1215 = vpop.permute.xlu0 %1214
      %1216 = vrot.lane.b32.xlu0 %v1036, 20
      %v1217 = vpop.permute.xlu0 %1216
      %1218 = vrot.lane.b32.xlu0 %v1038, 20
      %v1219 = vpop.permute.xlu0 %1218
      %1220 = vrot.lane.b32.xlu0 %v1041, 20
      %v1221 = vpop.permute.xlu0 %1220
      %1222 = vrot.lane.b32.xlu0 %v1043, 20
      %v1223 = vpop.permute.xlu0 %1222
      %1224 = vrot.lane.b32.xlu0 %v1046, 20
      %v1225 = vpop.permute.xlu0 %1224
      %1226 = vrot.lane.b32.xlu0 %v1048, 20
      %v1227 = vpop.permute.xlu0 %1226
      %1228 = vrot.lane.b32.xlu0 %v1051, 20
      %v1229 = vpop.permute.xlu0 %1228
      %1230 = vrot.lane.b32.xlu0 %v1053, 20
      %v1231 = vpop.permute.xlu0 %1230
      %1232 = vrot.lane.b32.xlu0 %v1056, 20
      %v1233 = vpop.permute.xlu0 %1232
      %1234 = vrot.lane.b32.xlu0 %v1058, 20
      %v1235 = vpop.permute.xlu0 %1234
      %1236 = vrot.lane.b32.xlu0 %v1061, 20
      %v1237 = vpop.permute.xlu0 %1236
      %1238 = vrot.lane.b32.xlu0 %v1063, 20
      %v1239 = vpop.permute.xlu0 %1238
      %1240 = vrot.lane.b32.xlu0 %v1066, 20
      %v1241 = vpop.permute.xlu0 %1240
      %1242 = vrot.lane.b32.xlu0 %v1068, 20
      %v1243 = vpop.permute.xlu0 %1242
      %1244 = vrot.lane.b32.xlu0 %v1071, 20
      %v1245 = vpop.permute.xlu0 %1244
      %1246 = vrot.lane.b32.xlu0 %v1073, 20
      %v1247 = vpop.permute.xlu0 %1246
      %1248 = vrot.lane.b32.xlu0 %v1076, 20
      %v1249 = vpop.permute.xlu0 %1248
      %1250 = vrot.lane.b32.xlu0 %v1078, 20
      %v1251 = vpop.permute.xlu0 %1250
      %1252 = vrot.lane.b32.xlu0 %v1081, 20
      %v1253 = vpop.permute.xlu0 %1252
      %1254 = vrot.lane.b32.xlu0 %v1083, 20
      %v1255 = vpop.permute.xlu0 %1254
      %1256 = vrot.lane.b32.xlu0 %v1086, 20
      %v1257 = vpop.permute.xlu0 %1256
      %1258 = vrot.lane.b32.xlu0 %v1088, 20
      %v1259 = vpop.permute.xlu0 %1258
      %1292 = vrot.lane.b32.xlu0 %v1092, 40
      %v1293 = vpop.permute.xlu0 %1292
      %1294 = vrot.lane.b32.xlu0 %v1094, 40
      %v1295 = vpop.permute.xlu0 %1294
      %1296 = vrot.lane.b32.xlu0 %v1097, 40
      %v1297 = vpop.permute.xlu0 %1296
      %1298 = vrot.lane.b32.xlu0 %v1099, 40
      %v1299 = vpop.permute.xlu0 %1298
      %1300 = vrot.lane.b32.xlu0 %v1102, 40
      %v1301 = vpop.permute.xlu0 %1300
      %1302 = vrot.lane.b32.xlu0 %v1104, 40
      %v1303 = vpop.permute.xlu0 %1302
      %1304 = vrot.lane.b32.xlu0 %v1107, 40
      %v1305 = vpop.permute.xlu0 %1304
      %1306 = vrot.lane.b32.xlu0 %v1109, 40
      %v1307 = vpop.permute.xlu0 %1306
      %1308 = vrot.lane.b32.xlu0 %v1112, 40
      %v1309 = vpop.permute.xlu0 %1308
      %1310 = vrot.lane.b32.xlu0 %v1114, 40
      %v1311 = vpop.permute.xlu0 %1310
      %1312 = vrot.lane.b32.xlu0 %v1117, 40
      %v1313 = vpop.permute.xlu0 %1312
      %1314 = vrot.lane.b32.xlu0 %v1119, 40
      %v1315 = vpop.permute.xlu0 %1314
      %1316 = vrot.lane.b32.xlu0 %v1122, 40
      %v1317 = vpop.permute.xlu0 %1316
      %1318 = vrot.lane.b32.xlu0 %v1124, 40
      %v1319 = vpop.permute.xlu0 %1318
      %1320 = vrot.lane.b32.xlu0 %v1127, 40
      %v1321 = vpop.permute.xlu0 %1320
      %1322 = vrot.lane.b32.xlu0 %v1129, 40
      %v1323 = vpop.permute.xlu0 %1322
      %1324 = vrot.lane.b32.xlu0 %v1132, 40
      %v1325 = vpop.permute.xlu0 %1324
      %1326 = vrot.lane.b32.xlu0 %v1134, 40
      %v1327 = vpop.permute.xlu0 %1326
      %1328 = vrot.lane.b32.xlu0 %v1137, 40
      %v1329 = vpop.permute.xlu0 %1328
      %1330 = vrot.lane.b32.xlu0 %v1139, 40
      %v1331 = vpop.permute.xlu0 %1330
      %1332 = vrot.lane.b32.xlu0 %v1142, 40
      %v1333 = vpop.permute.xlu0 %1332
      %1334 = vrot.lane.b32.xlu0 %v1144, 40
      %v1335 = vpop.permute.xlu0 %1334
      %1336 = vrot.lane.b32.xlu0 %v1147, 40
      %v1337 = vpop.permute.xlu0 %1336
      %1338 = vrot.lane.b32.xlu0 %v1149, 40
      %v1339 = vpop.permute.xlu0 %1338
      %1340 = vrot.lane.b32.xlu0 %v1152, 40
      %v1341 = vpop.permute.xlu0 %1340
      %1342 = vrot.lane.b32.xlu0 %v1154, 40
      %v1343 = vpop.permute.xlu0 %1342
      %1344 = vrot.lane.b32.xlu0 %v1157, 40
      %v1345 = vpop.permute.xlu0 %1344
      %1346 = vrot.lane.b32.xlu0 %v1159, 40
      %v1347 = vpop.permute.xlu0 %1346
      %1348 = vrot.lane.b32.xlu0 %v1162, 40
      %v1349 = vpop.permute.xlu0 %1348
      %1350 = vrot.lane.b32.xlu0 %v1164, 40
      %v1351 = vpop.permute.xlu0 %1350
      %1352 = vrot.lane.b32.xlu0 %v1167, 40
      %v1353 = vpop.permute.xlu0 %1352
      %1354 = vrot.lane.b32.xlu0 %v1169, 40
      %v1355 = vpop.permute.xlu0 %1354
      %1388 = vrot.lane.b32.xlu0 %v909, 60
      %v1389 = vpop.permute.xlu0 %1388
      %1390 = vrot.lane.b32.xlu0 %v910, 60
      %v1391 = vpop.permute.xlu0 %1390
      %1392 = vrot.lane.b32.xlu0 %v912, 60
      %v1393 = vpop.permute.xlu0 %1392
      %1394 = vrot.lane.b32.xlu0 %v913, 60
      %v1395 = vpop.permute.xlu0 %1394
      %1396 = vrot.lane.b32.xlu0 %v915, 60
      %v1397 = vpop.permute.xlu0 %1396
      %1398 = vrot.lane.b32.xlu0 %v916, 60
      %v1399 = vpop.permute.xlu0 %1398
      %1400 = vrot.lane.b32.xlu0 %v918, 60
      %v1401 = vpop.permute.xlu0 %1400
      %1402 = vrot.lane.b32.xlu0 %v919, 60
      %v1403 = vpop.permute.xlu0 %1402
      %1404 = vrot.lane.b32.xlu0 %v921, 60
      %v1405 = vpop.permute.xlu0 %1404
      %1406 = vrot.lane.b32.xlu0 %v922, 60
      %v1407 = vpop.permute.xlu0 %1406
      %1408 = vrot.lane.b32.xlu0 %v924, 60
      %v1409 = vpop.permute.xlu0 %1408
      %1410 = vrot.lane.b32.xlu0 %v925, 60
      %v1411 = vpop.permute.xlu0 %1410
      %1412 = vrot.lane.b32.xlu0 %v927, 60
      %v1413 = vpop.permute.xlu0 %1412
      %1414 = vrot.lane.b32.xlu0 %v928, 60
      %v1415 = vpop.permute.xlu0 %1414
      %1416 = vrot.lane.b32.xlu0 %v930, 60
      %v1417 = vpop.permute.xlu0 %1416
      %1418 = vrot.lane.b32.xlu0 %v931, 60
      %v1419 = vpop.permute.xlu0 %1418
      %1420 = vrot.lane.b32.xlu0 %v933, 60
      %v1421 = vpop.permute.xlu0 %1420
      %1422 = vrot.lane.b32.xlu0 %v934, 60
      %v1423 = vpop.permute.xlu0 %1422
      %1424 = vrot.lane.b32.xlu0 %v936, 60
      %v1425 = vpop.permute.xlu0 %1424
      %1426 = vrot.lane.b32.xlu0 %v937, 60
      %v1427 = vpop.permute.xlu0 %1426
      %1428 = vrot.lane.b32.xlu0 %v939, 60
      %v1429 = vpop.permute.xlu0 %1428
      %1430 = vrot.lane.b32.xlu0 %v940, 60
      %v1431 = vpop.permute.xlu0 %1430
      %1432 = vrot.lane.b32.xlu0 %v942, 60
      %v1433 = vpop.permute.xlu0 %1432
      %1434 = vrot.lane.b32.xlu0 %v943, 60
      %v1435 = vpop.permute.xlu0 %1434
      %1436 = vrot.lane.b32.xlu0 %v945, 60
      %v1437 = vpop.permute.xlu0 %1436
      %1438 = vrot.lane.b32.xlu0 %v946, 60
      %v1439 = vpop.permute.xlu0 %1438
      %1440 = vrot.lane.b32.xlu0 %v948, 60
      %v1441 = vpop.permute.xlu0 %1440
      %1442 = vrot.lane.b32.xlu0 %v949, 60
      %v1443 = vpop.permute.xlu0 %1442
      %1444 = vrot.lane.b32.xlu0 %v951, 60
      %v1445 = vpop.permute.xlu0 %1444
      %1446 = vrot.lane.b32.xlu0 %v952, 60
      %v1447 = vpop.permute.xlu0 %1446
      %1448 = vrot.lane.b32.xlu0 %v954, 60
      %v1449 = vpop.permute.xlu0 %1448
      %1450 = vrot.lane.b32.xlu0 %v955, 60
      %v1451 = vpop.permute.xlu0 %1450
      %1484 = vrot.lane.b32.xlu0 %v1016, 80
      %v1485 = vpop.permute.xlu0 %1484
      %1486 = vrot.lane.b32.xlu0 %v1018, 80
      %v1487 = vpop.permute.xlu0 %1486
      %1488 = vrot.lane.b32.xlu0 %v1021, 80
      %v1489 = vpop.permute.xlu0 %1488
      %1490 = vrot.lane.b32.xlu0 %v1023, 80
      %v1491 = vpop.permute.xlu0 %1490
      %1492 = vrot.lane.b32.xlu0 %v1026, 80
      %v1493 = vpop.permute.xlu0 %1492
      %1494 = vrot.lane.b32.xlu0 %v1028, 80
      %v1495 = vpop.permute.xlu0 %1494
      %1496 = vrot.lane.b32.xlu0 %v1031, 80
      %v1497 = vpop.permute.xlu0 %1496
      %1498 = vrot.lane.b32.xlu0 %v1033, 80
      %v1499 = vpop.permute.xlu0 %1498
      %1500 = vrot.lane.b32.xlu0 %v1036, 80
      %v1501 = vpop.permute.xlu0 %1500
      %1502 = vrot.lane.b32.xlu0 %v1038, 80
      %v1503 = vpop.permute.xlu0 %1502
      %1504 = vrot.lane.b32.xlu0 %v1041, 80
      %v1505 = vpop.permute.xlu0 %1504
      %1506 = vrot.lane.b32.xlu0 %v1043, 80
      %v1507 = vpop.permute.xlu0 %1506
      %1508 = vrot.lane.b32.xlu0 %v1046, 80
      %v1509 = vpop.permute.xlu0 %1508
      %1510 = vrot.lane.b32.xlu0 %v1048, 80
      %v1511 = vpop.permute.xlu0 %1510
      %1512 = vrot.lane.b32.xlu0 %v1051, 80
      %v1513 = vpop.permute.xlu0 %1512
      %1514 = vrot.lane.b32.xlu0 %v1053, 80
      %v1515 = vpop.permute.xlu0 %1514
      %1516 = vrot.lane.b32.xlu0 %v1056, 80
      %v1517 = vpop.permute.xlu0 %1516
      %1518 = vrot.lane.b32.xlu0 %v1058, 80
      %v1519 = vpop.permute.xlu0 %1518
      %1520 = vrot.lane.b32.xlu0 %v1061, 80
      %v1521 = vpop.permute.xlu0 %1520
      %1522 = vrot.lane.b32.xlu0 %v1063, 80
      %v1523 = vpop.permute.xlu0 %1522
      %1524 = vrot.lane.b32.xlu0 %v1066, 80
      %v1525 = vpop.permute.xlu0 %1524
      %1526 = vrot.lane.b32.xlu0 %v1068, 80
      %v1527 = vpop.permute.xlu0 %1526
      %1528 = vrot.lane.b32.xlu0 %v1071, 80
      %v1529 = vpop.permute.xlu0 %1528
      %1530 = vrot.lane.b32.xlu0 %v1073, 80
      %v1531 = vpop.permute.xlu0 %1530
      %1532 = vrot.lane.b32.xlu0 %v1076, 80
      %v1533 = vpop.permute.xlu0 %1532
      %1534 = vrot.lane.b32.xlu0 %v1078, 80
      %v1535 = vpop.permute.xlu0 %1534
      %1536 = vrot.lane.b32.xlu0 %v1081, 80
      %v1537 = vpop.permute.xlu0 %1536
      %1538 = vrot.lane.b32.xlu0 %v1083, 80
      %v1539 = vpop.permute.xlu0 %1538
      %1540 = vrot.lane.b32.xlu0 %v1086, 80
      %v1541 = vpop.permute.xlu0 %1540
      %1542 = vrot.lane.b32.xlu0 %v1088, 80
      %v1543 = vpop.permute.xlu0 %1542
      %1544 = vrot.lane.b32.xlu0 %v1175, 80
      %v1545 = vpop.permute.xlu0 %1544
      %1546 = vrot.lane.b32.xlu0 %v1177, 80
      %v1547 = vpop.permute.xlu0 %1546
      %1580 = vrot.lane.b32.xlu0 %v1097, 100
      %v1581 = vpop.permute.xlu0 %1580
      %1582 = vrot.lane.b32.xlu0 %v1099, 100
      %v1583 = vpop.permute.xlu0 %1582
      %1584 = vrot.lane.b32.xlu0 %v1102, 100
      %v1585 = vpop.permute.xlu0 %1584
      %1586 = vrot.lane.b32.xlu0 %v1104, 100
      %v1587 = vpop.permute.xlu0 %1586
      %1588 = vrot.lane.b32.xlu0 %v1107, 100
      %v1589 = vpop.permute.xlu0 %1588
      %1590 = vrot.lane.b32.xlu0 %v1109, 100
      %v1591 = vpop.permute.xlu0 %1590
      %1592 = vrot.lane.b32.xlu0 %v1112, 100
      %v1593 = vpop.permute.xlu0 %1592
      %1594 = vrot.lane.b32.xlu0 %v1114, 100
      %v1595 = vpop.permute.xlu0 %1594
      %1596 = vrot.lane.b32.xlu0 %v1117, 100
      %v1597 = vpop.permute.xlu0 %1596
      %1598 = vrot.lane.b32.xlu0 %v1119, 100
      %v1599 = vpop.permute.xlu0 %1598
      %1600 = vrot.lane.b32.xlu0 %v1122, 100
      %v1601 = vpop.permute.xlu0 %1600
      %1602 = vrot.lane.b32.xlu0 %v1124, 100
      %v1603 = vpop.permute.xlu0 %1602
      %1604 = vrot.lane.b32.xlu0 %v1127, 100
      %v1605 = vpop.permute.xlu0 %1604
      %1606 = vrot.lane.b32.xlu0 %v1129, 100
      %v1607 = vpop.permute.xlu0 %1606
      %1608 = vrot.lane.b32.xlu0 %v1132, 100
      %v1609 = vpop.permute.xlu0 %1608
      %1610 = vrot.lane.b32.xlu0 %v1134, 100
      %v1611 = vpop.permute.xlu0 %1610
      %1612 = vrot.lane.b32.xlu0 %v1137, 100
      %v1613 = vpop.permute.xlu0 %1612
      %1614 = vrot.lane.b32.xlu0 %v1139, 100
      %v1615 = vpop.permute.xlu0 %1614
      %1616 = vrot.lane.b32.xlu0 %v1142, 100
      %v1617 = vpop.permute.xlu0 %1616
      %1618 = vrot.lane.b32.xlu0 %v1144, 100
      %v1619 = vpop.permute.xlu0 %1618
      %1620 = vrot.lane.b32.xlu0 %v1147, 100
      %v1621 = vpop.permute.xlu0 %1620
      %1622 = vrot.lane.b32.xlu0 %v1149, 100
      %v1623 = vpop.permute.xlu0 %1622
      %1624 = vrot.lane.b32.xlu0 %v1152, 100
      %v1625 = vpop.permute.xlu0 %1624
      %1626 = vrot.lane.b32.xlu0 %v1154, 100
      %v1627 = vpop.permute.xlu0 %1626
      %1628 = vrot.lane.b32.xlu0 %v1157, 100
      %v1629 = vpop.permute.xlu0 %1628
      %1630 = vrot.lane.b32.xlu0 %v1159, 100
      %v1631 = vpop.permute.xlu0 %1630
      %1632 = vrot.lane.b32.xlu0 %v1162, 100
      %v1633 = vpop.permute.xlu0 %1632
      %1634 = vrot.lane.b32.xlu0 %v1164, 100
      %v1635 = vpop.permute.xlu0 %1634
      %1636 = vrot.lane.b32.xlu0 %v1167, 100
      %v1637 = vpop.permute.xlu0 %1636
      %1638 = vrot.lane.b32.xlu0 %v1169, 100
      %v1639 = vpop.permute.xlu0 %1638
      %1640 = vrot.lane.b32.xlu0 %v1180, 100
      %v1641 = vpop.permute.xlu0 %1640
      %1642 = vrot.lane.b32.xlu0 %v1182, 100
      %v1643 = vpop.permute.xlu0 %1642
      %1676 = vrot.lane.b32.xlu0 %v912, 120
      %v1677 = vpop.permute.xlu0 %1676
      %1678 = vrot.lane.b32.xlu0 %v913, 120
      %v1679 = vpop.permute.xlu0 %1678
      %1680 = vrot.lane.b32.xlu0 %v915, 120
      %v1681 = vpop.permute.xlu0 %1680
      %1682 = vrot.lane.b32.xlu0 %v916, 120
      %v1683 = vpop.permute.xlu0 %1682
      %1684 = vrot.lane.b32.xlu0 %v918, 120
      %v1685 = vpop.permute.xlu0 %1684
      %1686 = vrot.lane.b32.xlu0 %v919, 120
      %v1687 = vpop.permute.xlu0 %1686
      %1688 = vrot.lane.b32.xlu0 %v921, 120
      %v1689 = vpop.permute.xlu0 %1688
      %1690 = vrot.lane.b32.xlu0 %v922, 120
      %v1691 = vpop.permute.xlu0 %1690
      %1692 = vrot.lane.b32.xlu0 %v924, 120
      %v1693 = vpop.permute.xlu0 %1692
      %1694 = vrot.lane.b32.xlu0 %v925, 120
      %v1695 = vpop.permute.xlu0 %1694
      %1696 = vrot.lane.b32.xlu0 %v927, 120
      %v1697 = vpop.permute.xlu0 %1696
      %1698 = vrot.lane.b32.xlu0 %v928, 120
      %v1699 = vpop.permute.xlu0 %1698
      %1700 = vrot.lane.b32.xlu0 %v930, 120
      %v1701 = vpop.permute.xlu0 %1700
      %1702 = vrot.lane.b32.xlu0 %v931, 120
      %v1703 = vpop.permute.xlu0 %1702
      %1704 = vrot.lane.b32.xlu0 %v933, 120
      %v1705 = vpop.permute.xlu0 %1704
      %1706 = vrot.lane.b32.xlu0 %v934, 120
      %v1707 = vpop.permute.xlu0 %1706
      %1708 = vrot.lane.b32.xlu0 %v936, 120
      %v1709 = vpop.permute.xlu0 %1708
      %1710 = vrot.lane.b32.xlu0 %v937, 120
      %v1711 = vpop.permute.xlu0 %1710
      %1712 = vrot.lane.b32.xlu0 %v939, 120
      %v1713 = vpop.permute.xlu0 %1712
      %1714 = vrot.lane.b32.xlu0 %v940, 120
      %v1715 = vpop.permute.xlu0 %1714
      %1716 = vrot.lane.b32.xlu0 %v942, 120
      %v1717 = vpop.permute.xlu0 %1716
      %1718 = vrot.lane.b32.xlu0 %v943, 120
      %v1719 = vpop.permute.xlu0 %1718
      %1720 = vrot.lane.b32.xlu0 %v945, 120
      %v1721 = vpop.permute.xlu0 %1720
      %1722 = vrot.lane.b32.xlu0 %v946, 120
      %v1723 = vpop.permute.xlu0 %1722
      %1724 = vrot.lane.b32.xlu0 %v948, 120
      %v1725 = vpop.permute.xlu0 %1724
      %1726 = vrot.lane.b32.xlu0 %v949, 120
      %v1727 = vpop.permute.xlu0 %1726
      %1728 = vrot.lane.b32.xlu0 %v951, 120
      %v1729 = vpop.permute.xlu0 %1728
      %1730 = vrot.lane.b32.xlu0 %v952, 120
      %v1731 = vpop.permute.xlu0 %1730
      %1732 = vrot.lane.b32.xlu0 %v954, 120
      %v1733 = vpop.permute.xlu0 %1732
      %1734 = vrot.lane.b32.xlu0 %v955, 120
      %v1735 = vpop.permute.xlu0 %1734
      %1736 = vrot.lane.b32.xlu0 %v957, 120
      %v1737 = vpop.permute.xlu0 %1736
      %1738 = vrot.lane.b32.xlu0 %v958, 120
      %v1739 = vpop.permute.xlu0 %1738
      %1772 = vrot.lane.b32.xlu0 %v1021, 12
      %v1773 = vpop.permute.xlu0 %1772
      %1774 = vrot.lane.b32.xlu0 %v1023, 12
      %v1775 = vpop.permute.xlu0 %1774
      %1776 = vrot.lane.b32.xlu0 %v1026, 12
      %v1777 = vpop.permute.xlu0 %1776
      %1778 = vrot.lane.b32.xlu0 %v1028, 12
      %v1779 = vpop.permute.xlu0 %1778
      %1780 = vrot.lane.b32.xlu0 %v1031, 12
      %v1781 = vpop.permute.xlu0 %1780
      %1782 = vrot.lane.b32.xlu0 %v1033, 12
      %v1783 = vpop.permute.xlu0 %1782
      %1784 = vrot.lane.b32.xlu0 %v1036, 12
      %v1785 = vpop.permute.xlu0 %1784
      %1786 = vrot.lane.b32.xlu0 %v1038, 12
      %v1787 = vpop.permute.xlu0 %1786
      %1788 = vrot.lane.b32.xlu0 %v1041, 12
      %v1789 = vpop.permute.xlu0 %1788
      %1790 = vrot.lane.b32.xlu0 %v1043, 12
      %v1791 = vpop.permute.xlu0 %1790
      %1792 = vrot.lane.b32.xlu0 %v1046, 12
      %v1793 = vpop.permute.xlu0 %1792
      %1794 = vrot.lane.b32.xlu0 %v1048, 12
      %v1795 = vpop.permute.xlu0 %1794
      %1796 = vrot.lane.b32.xlu0 %v1051, 12
      %v1797 = vpop.permute.xlu0 %1796
      %1798 = vrot.lane.b32.xlu0 %v1053, 12
      %v1799 = vpop.permute.xlu0 %1798
      %1800 = vrot.lane.b32.xlu0 %v1056, 12
      %v1801 = vpop.permute.xlu0 %1800
      %1802 = vrot.lane.b32.xlu0 %v1058, 12
      %v1803 = vpop.permute.xlu0 %1802
      %1804 = vrot.lane.b32.xlu0 %v1061, 12
      %v1805 = vpop.permute.xlu0 %1804
      %1806 = vrot.lane.b32.xlu0 %v1063, 12
      %v1807 = vpop.permute.xlu0 %1806
      %1808 = vrot.lane.b32.xlu0 %v1066, 12
      %v1809 = vpop.permute.xlu0 %1808
      %1810 = vrot.lane.b32.xlu0 %v1068, 12
      %v1811 = vpop.permute.xlu0 %1810
      %1812 = vrot.lane.b32.xlu0 %v1071, 12
      %v1813 = vpop.permute.xlu0 %1812
      %1814 = vrot.lane.b32.xlu0 %v1073, 12
      %v1815 = vpop.permute.xlu0 %1814
      %1816 = vrot.lane.b32.xlu0 %v1076, 12
      %v1817 = vpop.permute.xlu0 %1816
      %1818 = vrot.lane.b32.xlu0 %v1078, 12
      %v1819 = vpop.permute.xlu0 %1818
      %1820 = vrot.lane.b32.xlu0 %v1081, 12
      %v1821 = vpop.permute.xlu0 %1820
      %1822 = vrot.lane.b32.xlu0 %v1083, 12
      %v1823 = vpop.permute.xlu0 %1822
      %1824 = vrot.lane.b32.xlu0 %v1086, 12
      %v1825 = vpop.permute.xlu0 %1824
      %1826 = vrot.lane.b32.xlu0 %v1088, 12
      %v1827 = vpop.permute.xlu0 %1826
      %1828 = vrot.lane.b32.xlu0 %v1175, 12
      %v1829 = vpop.permute.xlu0 %1828
      %1830 = vrot.lane.b32.xlu0 %v1177, 12
      %v1831 = vpop.permute.xlu0 %1830
      %1832 = vrot.lane.b32.xlu0 %v1188, 12
      %v1833 = vpop.permute.xlu0 %1832
      %1834 = vrot.lane.b32.xlu0 %v1190, 12
      %v1835 = vpop.permute.xlu0 %1834
      %1868 = vrot.lane.b32.xlu0 %v1102, 32
      %v1869 = vpop.permute.xlu0 %1868
      %1870 = vrot.lane.b32.xlu0 %v1104, 32
      %v1871 = vpop.permute.xlu0 %1870
      %1872 = vrot.lane.b32.xlu0 %v1107, 32
      %v1873 = vpop.permute.xlu0 %1872
      %1874 = vrot.lane.b32.xlu0 %v1109, 32
      %v1875 = vpop.permute.xlu0 %1874
      %1876 = vrot.lane.b32.xlu0 %v1112, 32
      %v1877 = vpop.permute.xlu0 %1876
      %1878 = vrot.lane.b32.xlu0 %v1114, 32
      %v1879 = vpop.permute.xlu0 %1878
      %1880 = vrot.lane.b32.xlu0 %v1117, 32
      %v1881 = vpop.permute.xlu0 %1880
      %1882 = vrot.lane.b32.xlu0 %v1119, 32
      %v1883 = vpop.permute.xlu0 %1882
      %1884 = vrot.lane.b32.xlu0 %v1122, 32
      %v1885 = vpop.permute.xlu0 %1884
      %1886 = vrot.lane.b32.xlu0 %v1124, 32
      %v1887 = vpop.permute.xlu0 %1886
      %1888 = vrot.lane.b32.xlu0 %v1127, 32
      %v1889 = vpop.permute.xlu0 %1888
      %1890 = vrot.lane.b32.xlu0 %v1129, 32
      %v1891 = vpop.permute.xlu0 %1890
      %1892 = vrot.lane.b32.xlu0 %v1132, 32
      %v1893 = vpop.permute.xlu0 %1892
      %1894 = vrot.lane.b32.xlu0 %v1134, 32
      %v1895 = vpop.permute.xlu0 %1894
      %1896 = vrot.lane.b32.xlu0 %v1137, 32
      %v1897 = vpop.permute.xlu0 %1896
      %1898 = vrot.lane.b32.xlu0 %v1139, 32
      %v1899 = vpop.permute.xlu0 %1898
      %1900 = vrot.lane.b32.xlu0 %v1142, 32
      %v1901 = vpop.permute.xlu0 %1900
      %1902 = vrot.lane.b32.xlu0 %v1144, 32
      %v1903 = vpop.permute.xlu0 %1902
      %1904 = vrot.lane.b32.xlu0 %v1147, 32
      %v1905 = vpop.permute.xlu0 %1904
      %1906 = vrot.lane.b32.xlu0 %v1149, 32
      %v1907 = vpop.permute.xlu0 %1906
      %1908 = vrot.lane.b32.xlu0 %v1152, 32
      %v1909 = vpop.permute.xlu0 %1908
      %1910 = vrot.lane.b32.xlu0 %v1154, 32
      %v1911 = vpop.permute.xlu0 %1910
      %1912 = vrot.lane.b32.xlu0 %v1157, 32
      %v1913 = vpop.permute.xlu0 %1912
      %1914 = vrot.lane.b32.xlu0 %v1159, 32
      %v1915 = vpop.permute.xlu0 %1914
      %1916 = vrot.lane.b32.xlu0 %v1162, 32
      %v1917 = vpop.permute.xlu0 %1916
      %1918 = vrot.lane.b32.xlu0 %v1164, 32
      %v1919 = vpop.permute.xlu0 %1918
      %1920 = vrot.lane.b32.xlu0 %v1167, 32
      %v1921 = vpop.permute.xlu0 %1920
      %1922 = vrot.lane.b32.xlu0 %v1169, 32
      %v1923 = vpop.permute.xlu0 %1922
      %1924 = vrot.lane.b32.xlu0 %v1180, 32
      %v1925 = vpop.permute.xlu0 %1924
      %1926 = vrot.lane.b32.xlu0 %v1182, 32
      %v1927 = vpop.permute.xlu0 %1926
      %1928 = vrot.lane.b32.xlu0 %v1193, 32
      %v1929 = vpop.permute.xlu0 %1928
      %1930 = vrot.lane.b32.xlu0 %v1195, 32
      %v1931 = vpop.permute.xlu0 %1930
      %v1964 = vsel %vm495, %v906, %v1197
      %v1965 = vsel %vm495, %v907, %v1199
      %v1966 = vsel %vm495, %v909, %v1201
      %v1967 = vsel %vm495, %v910, %v1203
      %v1968 = vsel %vm495, %v912, %v1205
      %v1969 = vsel %vm495, %v913, %v1207
      %v1970 = vsel %vm495, %v915, %v1209
      %v1971 = vsel %vm495, %v916, %v1211
      %v1972 = vsel %vm495, %v918, %v1213
      %v1973 = vsel %vm495, %v919, %v1215
      %v1974 = vsel %vm495, %v921, %v1217
      %v1975 = vsel %vm495, %v922, %v1219
      %v1976 = vsel %vm495, %v924, %v1221
      %v1977 = vsel %vm495, %v925, %v1223
      %v1978 = vsel %vm495, %v927, %v1225
      %v1979 = vsel %vm495, %v928, %v1227
      %v1980 = vsel %vm495, %v930, %v1229
      %v1981 = vsel %vm495, %v931, %v1231
      %v1982 = vsel %vm495, %v933, %v1233
      %v1983 = vsel %vm495, %v934, %v1235
      %v1984 = vsel %vm495, %v936, %v1237
      %v1985 = vsel %vm495, %v937, %v1239
      %v1986 = vsel %vm495, %v939, %v1241
      %v1987 = vsel %vm495, %v940, %v1243
      %v1988 = vsel %vm495, %v942, %v1245
      %v1989 = vsel %vm495, %v943, %v1247
      %v1990 = vsel %vm495, %v945, %v1249
      %v1991 = vsel %vm495, %v946, %v1251
      %v1992 = vsel %vm495, %v948, %v1253
      %v1993 = vsel %vm495, %v949, %v1255
      %v1994 = vsel %vm495, %v951, %v1257
      %v1995 = vsel %vm495, %v952, %v1259
      %vm1996 = vcmask 326656
      %v1997 = vsel %vm1996, %v1964, %v1293
      %v1998 = vsel %vm1996, %v1965, %v1295
      %v1999 = vsel %vm1996, %v1966, %v1297
      %v2000 = vsel %vm1996, %v1967, %v1299
      %v2001 = vsel %vm1996, %v1968, %v1301
      %v2002 = vsel %vm1996, %v1969, %v1303
      %v2003 = vsel %vm1996, %v1970, %v1305
      %v2004 = vsel %vm1996, %v1971, %v1307
      %v2005 = vsel %vm1996, %v1972, %v1309
      %v2006 = vsel %vm1996, %v1973, %v1311
      %v2007 = vsel %vm1996, %v1974, %v1313
      %v2008 = vsel %vm1996, %v1975, %v1315
      %v2009 = vsel %vm1996, %v1976, %v1317
      %v2010 = vsel %vm1996, %v1977, %v1319
      %v2011 = vsel %vm1996, %v1978, %v1321
      %v2012 = vsel %vm1996, %v1979, %v1323
      %v2013 = vsel %vm1996, %v1980, %v1325
      %v2014 = vsel %vm1996, %v1981, %v1327
      %v2015 = vsel %vm1996, %v1982, %v1329
      %v2016 = vsel %vm1996, %v1983, %v1331
      %v2017 = vsel %vm1996, %v1984, %v1333
      %v2018 = vsel %vm1996, %v1985, %v1335
      %v2019 = vsel %vm1996, %v1986, %v1337
      %v2020 = vsel %vm1996, %v1987, %v1339
      %v2021 = vsel %vm1996, %v1988, %v1341
      %v2022 = vsel %vm1996, %v1989, %v1343
      %v2023 = vsel %vm1996, %v1990, %v1345
      %v2024 = vsel %vm1996, %v1991, %v1347
      %v2025 = vsel %vm1996, %v1992, %v1349
      %v2026 = vsel %vm1996, %v1993, %v1351
      %v2027 = vsel %vm1996, %v1994, %v1353
      %v2028 = vsel %vm1996, %v1995, %v1355
      %vm2029 = vcmask 490496
      %v2030 = vsel %vm2029, %v1997, %v1389
      %v2031 = vsel %vm2029, %v1998, %v1391
      %v2032 = vsel %vm2029, %v1999, %v1393
      %v2033 = vsel %vm2029, %v2000, %v1395
      %v2034 = vsel %vm2029, %v2001, %v1397
      %v2035 = vsel %vm2029, %v2002, %v1399
      %v2036 = vsel %vm2029, %v2003, %v1401
      %v2037 = vsel %vm2029, %v2004, %v1403
      %v2038 = vsel %vm2029, %v2005, %v1405
      %v2039 = vsel %vm2029, %v2006, %v1407
      %v2040 = vsel %vm2029, %v2007, %v1409
      %v2041 = vsel %vm2029, %v2008, %v1411
      %v2042 = vsel %vm2029, %v2009, %v1413
      %v2043 = vsel %vm2029, %v2010, %v1415
      %v2044 = vsel %vm2029, %v2011, %v1417
      %v2045 = vsel %vm2029, %v2012, %v1419
      %v2046 = vsel %vm2029, %v2013, %v1421
      %v2047 = vsel %vm2029, %v2014, %v1423
      %v2048 = vsel %vm2029, %v2015, %v1425
      %v2049 = vsel %vm2029, %v2016, %v1427
      %v2050 = vsel %vm2029, %v2017, %v1429
      %v2051 = vsel %vm2029, %v2018, %v1431
      %v2052 = vsel %vm2029, %v2019, %v1433
      %v2053 = vsel %vm2029, %v2020, %v1435
      %v2054 = vsel %vm2029, %v2021, %v1437
      %v2055 = vsel %vm2029, %v2022, %v1439
      %v2056 = vsel %vm2029, %v2023, %v1441
      %v2057 = vsel %vm2029, %v2024, %v1443
      %v2058 = vsel %vm2029, %v2025, %v1445
      %v2059 = vsel %vm2029, %v2026, %v1447
      %v2060 = vsel %vm2029, %v2027, %v1449
      %v2061 = vsel %vm2029, %v2028, %v1451
      %vm2062 = vcmask 654336
      %v2063 = vsel %vm2062, %v2030, %v1485
      %v2064 = vsel %vm2062, %v2031, %v1487
      %v2065 = vsel %vm2062, %v2032, %v1489
      %v2066 = vsel %vm2062, %v2033, %v1491
      %v2067 = vsel %vm2062, %v2034, %v1493
      %v2068 = vsel %vm2062, %v2035, %v1495
      %v2069 = vsel %vm2062, %v2036, %v1497
      %v2070 = vsel %vm2062, %v2037, %v1499
      %v2071 = vsel %vm2062, %v2038, %v1501
      %v2072 = vsel %vm2062, %v2039, %v1503
      %v2073 = vsel %vm2062, %v2040, %v1505
      %v2074 = vsel %vm2062, %v2041, %v1507
      %v2075 = vsel %vm2062, %v2042, %v1509
      %v2076 = vsel %vm2062, %v2043, %v1511
      %v2077 = vsel %vm2062, %v2044, %v1513
      %v2078 = vsel %vm2062, %v2045, %v1515
      %v2079 = vsel %vm2062, %v2046, %v1517
      %v2080 = vsel %vm2062, %v2047, %v1519
      %v2081 = vsel %vm2062, %v2048, %v1521
      %v2082 = vsel %vm2062, %v2049, %v1523
      %v2083 = vsel %vm2062, %v2050, %v1525
      %v2084 = vsel %vm2062, %v2051, %v1527
      %v2085 = vsel %vm2062, %v2052, %v1529
      %v2086 = vsel %vm2062, %v2053, %v1531
      %v2087 = vsel %vm2062, %v2054, %v1533
      %v2088 = vsel %vm2062, %v2055, %v1535
      %v2089 = vsel %vm2062, %v2056, %v1537
      %v2090 = vsel %vm2062, %v2057, %v1539
      %v2091 = vsel %vm2062, %v2058, %v1541
      %v2092 = vsel %vm2062, %v2059, %v1543
      %v2093 = vsel %vm2062, %v2060, %v1545
      %v2094 = vsel %vm2062, %v2061, %v1547
      %vm2095 = vcmask 818176
      %v2096 = vsel %vm2095, %v2063, %v1581
      %v2097 = vsel %vm2095, %v2064, %v1583
      %v2098 = vsel %vm2095, %v2065, %v1585
      %v2099 = vsel %vm2095, %v2066, %v1587
      %v2100 = vsel %vm2095, %v2067, %v1589
      %v2101 = vsel %vm2095, %v2068, %v1591
      %v2102 = vsel %vm2095, %v2069, %v1593
      %v2103 = vsel %vm2095, %v2070, %v1595
      %v2104 = vsel %vm2095, %v2071, %v1597
      %v2105 = vsel %vm2095, %v2072, %v1599
      %v2106 = vsel %vm2095, %v2073, %v1601
      %v2107 = vsel %vm2095, %v2074, %v1603
      %v2108 = vsel %vm2095, %v2075, %v1605
      %v2109 = vsel %vm2095, %v2076, %v1607
      %v2110 = vsel %vm2095, %v2077, %v1609
      %v2111 = vsel %vm2095, %v2078, %v1611
      %v2112 = vsel %vm2095, %v2079, %v1613
      %v2113 = vsel %vm2095, %v2080, %v1615
      %v2114 = vsel %vm2095, %v2081, %v1617
      %v2115 = vsel %vm2095, %v2082, %v1619
      %v2116 = vsel %vm2095, %v2083, %v1621
      %v2117 = vsel %vm2095, %v2084, %v1623
      %v2118 = vsel %vm2095, %v2085, %v1625
      %v2119 = vsel %vm2095, %v2086, %v1627
      %v2120 = vsel %vm2095, %v2087, %v1629
      %v2121 = vsel %vm2095, %v2088, %v1631
      %v2122 = vsel %vm2095, %v2089, %v1633
      %v2123 = vsel %vm2095, %v2090, %v1635
      %v2124 = vsel %vm2095, %v2091, %v1637
      %v2125 = vsel %vm2095, %v2092, %v1639
      %v2126 = vsel %vm2095, %v2093, %v1641
      %v2127 = vsel %vm2095, %v2094, %v1643
      %vm2128 = vcmask 982016
      %v2129 = vsel %vm2128, %v2096, %v1677
      %v2130 = vsel %vm2128, %v2097, %v1679
      %v2131 = vsel %vm2128, %v2098, %v1681
      %v2132 = vsel %vm2128, %v2099, %v1683
      %v2133 = vsel %vm2128, %v2100, %v1685
      %v2134 = vsel %vm2128, %v2101, %v1687
      %v2135 = vsel %vm2128, %v2102, %v1689
      %v2136 = vsel %vm2128, %v2103, %v1691
      %v2137 = vsel %vm2128, %v2104, %v1693
      %v2138 = vsel %vm2128, %v2105, %v1695
      %v2139 = vsel %vm2128, %v2106, %v1697
      %v2140 = vsel %vm2128, %v2107, %v1699
      %v2141 = vsel %vm2128, %v2108, %v1701
      %v2142 = vsel %vm2128, %v2109, %v1703
      %v2143 = vsel %vm2128, %v2110, %v1705
      %v2144 = vsel %vm2128, %v2111, %v1707
      %v2145 = vsel %vm2128, %v2112, %v1709
      %v2146 = vsel %vm2128, %v2113, %v1711
      %v2147 = vsel %vm2128, %v2114, %v1713
      %v2148 = vsel %vm2128, %v2115, %v1715
      %v2149 = vsel %vm2128, %v2116, %v1717
      %v2150 = vsel %vm2128, %v2117, %v1719
      %v2151 = vsel %vm2128, %v2118, %v1721
      %v2152 = vsel %vm2128, %v2119, %v1723
      %v2153 = vsel %vm2128, %v2120, %v1725
      %v2154 = vsel %vm2128, %v2121, %v1727
      %v2155 = vsel %vm2128, %v2122, %v1729
      %v2156 = vsel %vm2128, %v2123, %v1731
      %v2157 = vsel %vm2128, %v2124, %v1733
      %v2158 = vsel %vm2128, %v2125, %v1735
      %v2159 = vsel %vm2128, %v2126, %v1737
      %v2160 = vsel %vm2128, %v2127, %v1739
      %v2161 = vsel %vm840, %v1677, %v1773
      %v2162 = vsel %vm840, %v1679, %v1775
      %v2163 = vsel %vm840, %v1681, %v1777
      %v2164 = vsel %vm840, %v1683, %v1779
      %v2165 = vsel %vm840, %v1685, %v1781
      %v2166 = vsel %vm840, %v1687, %v1783
      %v2167 = vsel %vm840, %v1689, %v1785
      %v2168 = vsel %vm840, %v1691, %v1787
      %v2169 = vsel %vm840, %v1693, %v1789
      %v2170 = vsel %vm840, %v1695, %v1791
      %v2171 = vsel %vm840, %v1697, %v1793
      %v2172 = vsel %vm840, %v1699, %v1795
      %v2173 = vsel %vm840, %v1701, %v1797
      %v2174 = vsel %vm840, %v1703, %v1799
      %v2175 = vsel %vm840, %v1705, %v1801
      %v2176 = vsel %vm840, %v1707, %v1803
      %v2177 = vsel %vm840, %v1709, %v1805
      %v2178 = vsel %vm840, %v1711, %v1807
      %v2179 = vsel %vm840, %v1713, %v1809
      %v2180 = vsel %vm840, %v1715, %v1811
      %v2181 = vsel %vm840, %v1717, %v1813
      %v2182 = vsel %vm840, %v1719, %v1815
      %v2183 = vsel %vm840, %v1721, %v1817
      %v2184 = vsel %vm840, %v1723, %v1819
      %v2185 = vsel %vm840, %v1725, %v1821
      %v2186 = vsel %vm840, %v1727, %v1823
      %v2187 = vsel %vm840, %v1729, %v1825
      %v2188 = vsel %vm840, %v1731, %v1827
      %v2189 = vsel %vm840, %v1733, %v1829
      %v2190 = vsel %vm840, %v1735, %v1831
      %v2191 = vsel %vm840, %v1737, %v1833
      %v2192 = vsel %vm840, %v1739, %v1835
      %vm2193 = vcmask 261120
      %v2194 = vsel %vm2193, %v2161, %v1869
      %v2195 = vsel %vm2193, %v2162, %v1871
      %v2196 = vsel %vm2193, %v2163, %v1873
      %v2197 = vsel %vm2193, %v2164, %v1875
      %v2198 = vsel %vm2193, %v2165, %v1877
      %v2199 = vsel %vm2193, %v2166, %v1879
      %v2200 = vsel %vm2193, %v2167, %v1881
      %v2201 = vsel %vm2193, %v2168, %v1883
      %v2202 = vsel %vm2193, %v2169, %v1885
      %v2203 = vsel %vm2193, %v2170, %v1887
      %v2204 = vsel %vm2193, %v2171, %v1889
      %v2205 = vsel %vm2193, %v2172, %v1891
      %v2206 = vsel %vm2193, %v2173, %v1893
      %v2207 = vsel %vm2193, %v2174, %v1895
      %v2208 = vsel %vm2193, %v2175, %v1897
      %v2209 = vsel %vm2193, %v2176, %v1899
      %v2210 = vsel %vm2193, %v2177, %v1901
      %v2211 = vsel %vm2193, %v2178, %v1903
      %v2212 = vsel %vm2193, %v2179, %v1905
      %v2213 = vsel %vm2193, %v2180, %v1907
      %v2214 = vsel %vm2193, %v2181, %v1909
      %v2215 = vsel %vm2193, %v2182, %v1911
      %v2216 = vsel %vm2193, %v2183, %v1913
      %v2217 = vsel %vm2193, %v2184, %v1915
      %v2218 = vsel %vm2193, %v2185, %v1917
      %v2219 = vsel %vm2193, %v2186, %v1919
      %v2220 = vsel %vm2193, %v2187, %v1921
      %v2221 = vsel %vm2193, %v2188, %v1923
      %v2222 = vsel %vm2193, %v2189, %v1925
      %v2223 = vsel %vm2193, %v2190, %v1927
      %v2224 = vsel %vm2193, %v2191, %v1929
      %v2225 = vsel %vm2193, %v2192, %v1931
      %v2226 = vpack.c.bf16 %v2130, %v2129
      %v2227 = vpack.c.bf16 %v2195, %v2194
      %v2228 = vpack.c.bf16 %v2132, %v2131
      %v2229 = vpack.c.bf16 %v2197, %v2196
      %v2230 = vpack.c.bf16 %v2134, %v2133
      %v2231 = vpack.c.bf16 %v2199, %v2198
      %v2232 = vpack.c.bf16 %v2136, %v2135
      %v2233 = vpack.c.bf16 %v2201, %v2200
      %v2234 = vpack.c.bf16 %v2138, %v2137
      %v2235 = vpack.c.bf16 %v2203, %v2202
      %v2236 = vpack.c.bf16 %v2140, %v2139
      %v2237 = vpack.c.bf16 %v2205, %v2204
      %v2238 = vpack.c.bf16 %v2142, %v2141
      %v2239 = vpack.c.bf16 %v2207, %v2206
      %v2240 = vpack.c.bf16 %v2144, %v2143
      %v2241 = vpack.c.bf16 %v2209, %v2208
      %v2242 = vpack.c.bf16 %v2146, %v2145
      %v2243 = vpack.c.bf16 %v2211, %v2210
      %v2244 = vpack.c.bf16 %v2148, %v2147
      %v2245 = vpack.c.bf16 %v2213, %v2212
      %v2246 = vpack.c.bf16 %v2150, %v2149
      %v2247 = vpack.c.bf16 %v2215, %v2214
      %v2248 = vpack.c.bf16 %v2152, %v2151
      %v2249 = vpack.c.bf16 %v2217, %v2216
      %v2250 = vpack.c.bf16 %v2154, %v2153
      %v2251 = vpack.c.bf16 %v2219, %v2218
      %v2252 = vpack.c.bf16 %v2156, %v2155
      %v2253 = vpack.c.bf16 %v2221, %v2220
      %v2254 = vpack.c.bf16 %v2158, %v2157
      %v2255 = vpack.c.bf16 %v2223, %v2222
      %v2256 = vpack.c.bf16 %v2160, %v2159
      %v2257 = vpack.c.bf16 %v2225, %v2224
      %v2258 = vld [vmem:[%s3] sm:$0xf]
      %v2259 = vld [vmem:[%s3 + $0x4] sm:$0xf]
      %v2260 = vld [vmem:[%s3 + $0x8] sm:$0xf]
      %v2261 = vld [vmem:[%s3 + $0xc] sm:$0xf]
      %v2262 = vld [vmem:[%s3 + $0x10] sm:$0xf]
      %v2263 = vld [vmem:[%s3 + $0x14] sm:$0xf]
      %v2264 = vld [vmem:[%s3 + $0x18] sm:$0xf]
      %v2265 = vld [vmem:[%s3 + $0x1c] sm:$0xf]
      %v2266 = vld [vmem:[%s3 + $0x20] sm:$0xf]
      %v2267 = vld [vmem:[%s3 + $0x24] sm:$0xf]
      %v2268 = vld [vmem:[%s3 + $0x28] sm:$0xf]
      %v2269 = vld [vmem:[%s3 + $0x2c] sm:$0xf]
      %v2270 = vld [vmem:[%s3 + $0x30] sm:$0xf]
      %v2271 = vld [vmem:[%s3 + $0x34] sm:$0xf]
      %v2272 = vld [vmem:[%s3 + $0x38] sm:$0xf]
      %v2273 = vld [vmem:[%s3 + $0x3c] sm:$0xf]
      %v2274 = vld [vmem:[%s3 + $0x40] sm:$0xf]
      %v2275 = vld [vmem:[%s3 + $0x44] sm:$0xf]
      %v2276 = vld [vmem:[%s3 + $0x48] sm:$0xf]
      %v2277 = vld [vmem:[%s3 + $0x4c] sm:$0xf]
      %v2278 = vld [vmem:[%s3 + $0x50] sm:$0xf]
      %v2279 = vld [vmem:[%s3 + $0x54] sm:$0xf]
      %v2280 = vld [vmem:[%s3 + $0x58] sm:$0x3]
      %v2281 = vld [vmem:[%s4] sm:$0x1]
      %v2283 = vperm.slane %v2281, 0
      %v2308 = vunpack.c.l.b16 %v2258
      %v2309 = vunpack.c.l.b16 %v2259
      %v2310 = vunpack.c.l.b16 %v2260
      %v2311 = vunpack.c.l.b16 %v2261
      %v2312 = vunpack.c.l.b16 %v2262
      %v2313 = vunpack.c.l.b16 %v2263
      %v2314 = vunpack.c.l.b16 %v2264
      %v2315 = vunpack.c.l.b16 %v2265
      %v2316 = vunpack.c.l.b16 %v2266
      %v2317 = vunpack.c.l.b16 %v2267
      %v2318 = vunpack.c.l.b16 %v2268
      %v2319 = vunpack.c.l.b16 %v2269
      %v2320 = vunpack.c.l.b16 %v2270
      %v2321 = vunpack.c.l.b16 %v2271
      %v2322 = vunpack.c.l.b16 %v2272
      %v2323 = vunpack.c.l.b16 %v2273
      %v2324 = vunpack.c.l.b16 %v2274
      %v2325 = vunpack.c.l.b16 %v2275
      %v2326 = vunpack.c.l.b16 %v2276
      %v2327 = vunpack.c.l.b16 %v2277
      %v2328 = vunpack.c.l.b16 %v2278
      %v2329 = vunpack.c.l.b16 %v2279
      %v2330 = vunpack.c.l.b16 %v2280
      %v2331 = vpack.c.b16 %v2309, %v2308
      %v2332 = vpack.c.b16 %v2311, %v2310
      %v2333 = vpack.c.b16 %v2313, %v2312
      %v2334 = vpack.c.b16 %v2315, %v2314
      %v2335 = vpack.c.b16 %v2317, %v2316
      %v2336 = vpack.c.b16 %v2319, %v2318
      %v2337 = vpack.c.b16 %v2321, %v2320
      %v2338 = vpack.c.b16 %v2323, %v2322
      %v2339 = vpack.c.b16 %v2325, %v2324
      %v2340 = vpack.c.b16 %v2327, %v2326
      %v2341 = vpack.c.b16 %v2329, %v2328
      %v2342 = vpack.c.b16 %v2330, %v2330
      %vm2354 = vcmask 424960
      %v2356 = vsel %vm2354, %v2227, 0
      %v2359 = vsel %vm2354, %v2229, 0
      %v2362 = vsel %vm2354, %v2231, 0
      %v2365 = vsel %vm2354, %v2233, 0
      %v2368 = vsel %vm2354, %v2235, 0
      %v2371 = vsel %vm2354, %v2237, 0
      %v2374 = vsel %vm2354, %v2239, 0
      %v2377 = vsel %vm2354, %v2241, 0
      %v2380 = vsel %vm2354, %v2243, 0
      %v2383 = vsel %vm2354, %v2245, 0
      %v2386 = vsel %vm2354, %v2247, 0
      %v2389 = vsel %vm2354, %v2249, 0
      %v2392 = vsel %vm2354, %v2251, 0
      %v2395 = vsel %vm2354, %v2253, 0
      %v2398 = vsel %vm2354, %v2255, 0
      %v2401 = vsel %vm2354, %v2257, 0
      %vm2403 = vcmask 1041408
      %v2405 = vsel %vm2403, %v2342, 0
      %2407 = vmatpush.bf16.msra.mxu0 %v2338
      %2408 = vmatpush.bf16.msra.mxu0 %v2337
      %2409 = vmatpush.bf16.msra.mxu0 %v2336
      %2410 = vmatpush.bf16.msra.mxu0 %v2335
      %2411 = vmatpush.bf16.msra.mxu0 %v2334
      %2412 = vmatpush.bf16.msra.mxu0 %v2333
      %2413 = vmatpush.bf16.msra.mxu0 %v2332
      %2414 = vmatpush.bf16.msra.mxu0 %v2331
      %2415 = vmatmul.bf16.gmra.mxu0 %v2226
      %v2416 = vpop.f32.mrf.mxu0
      %v2417 = vadd.f32 %v2283, %v2416
      %v2418 = vpop.f32.mrf.mxu0
      %v2419 = vadd.f32 %v2283, %v2418
      %2420 = vmatmul.bf16.gmra.mxu0 %v2228
      %v2421 = vpop.f32.mrf.mxu0
      %v2422 = vadd.f32 %v2283, %v2421
      %v2423 = vpop.f32.mrf.mxu0
      %v2424 = vadd.f32 %v2283, %v2423
      %2425 = vmatmul.bf16.gmra.mxu0 %v2230
      %v2426 = vpop.f32.mrf.mxu0
      %v2427 = vadd.f32 %v2283, %v2426
      %v2428 = vpop.f32.mrf.mxu0
      %v2429 = vadd.f32 %v2283, %v2428
      %2430 = vmatmul.bf16.gmra.mxu0 %v2232
      %v2431 = vpop.f32.mrf.mxu0
      %v2432 = vadd.f32 %v2283, %v2431
      %v2433 = vpop.f32.mrf.mxu0
      %v2434 = vadd.f32 %v2283, %v2433
      %2435 = vmatmul.bf16.gmra.mxu0 %v2234
      %v2436 = vpop.f32.mrf.mxu0
      %v2437 = vadd.f32 %v2283, %v2436
      %v2438 = vpop.f32.mrf.mxu0
      %v2439 = vadd.f32 %v2283, %v2438
      %2440 = vmatmul.bf16.gmra.mxu0 %v2236
      %v2441 = vpop.f32.mrf.mxu0
      %v2442 = vadd.f32 %v2283, %v2441
      %v2443 = vpop.f32.mrf.mxu0
      %v2444 = vadd.f32 %v2283, %v2443
      %2445 = vmatmul.bf16.gmra.mxu0 %v2238
      %v2446 = vpop.f32.mrf.mxu0
      %v2447 = vadd.f32 %v2283, %v2446
      %v2448 = vpop.f32.mrf.mxu0
      %v2449 = vadd.f32 %v2283, %v2448
      %2450 = vmatmul.bf16.gmra.mxu0 %v2240
      %v2451 = vpop.f32.mrf.mxu0
      %v2452 = vadd.f32 %v2283, %v2451
      %v2453 = vpop.f32.mrf.mxu0
      %v2454 = vadd.f32 %v2283, %v2453
      %2455 = vmatmul.bf16.gmra.mxu0 %v2242
      %v2456 = vpop.f32.mrf.mxu0
      %v2457 = vadd.f32 %v2283, %v2456
      %v2458 = vpop.f32.mrf.mxu0
      %v2459 = vadd.f32 %v2283, %v2458
      %2460 = vmatmul.bf16.gmra.mxu0 %v2244
      %v2461 = vpop.f32.mrf.mxu0
      %v2462 = vadd.f32 %v2283, %v2461
      %v2463 = vpop.f32.mrf.mxu0
      %v2464 = vadd.f32 %v2283, %v2463
      %2465 = vmatmul.bf16.gmra.mxu0 %v2246
      %v2466 = vpop.f32.mrf.mxu0
      %v2467 = vadd.f32 %v2283, %v2466
      %v2468 = vpop.f32.mrf.mxu0
      %v2469 = vadd.f32 %v2283, %v2468
      %2470 = vmatmul.bf16.gmra.mxu0 %v2248
      %v2471 = vpop.f32.mrf.mxu0
      %v2472 = vadd.f32 %v2283, %v2471
      %v2473 = vpop.f32.mrf.mxu0
      %v2474 = vadd.f32 %v2283, %v2473
      %2475 = vmatmul.bf16.gmra.mxu0 %v2250
      %v2476 = vpop.f32.mrf.mxu0
      %v2477 = vadd.f32 %v2283, %v2476
      %v2478 = vpop.f32.mrf.mxu0
      %v2479 = vadd.f32 %v2283, %v2478
      %2480 = vmatmul.bf16.gmra.mxu0 %v2252
      %v2481 = vpop.f32.mrf.mxu0
      %v2482 = vadd.f32 %v2283, %v2481
      %v2483 = vpop.f32.mrf.mxu0
      %v2484 = vadd.f32 %v2283, %v2483
      %2485 = vmatmul.bf16.gmra.mxu0 %v2254
      %v2486 = vpop.f32.mrf.mxu0
      %v2487 = vadd.f32 %v2283, %v2486
      %v2488 = vpop.f32.mrf.mxu0
      %v2489 = vadd.f32 %v2283, %v2488
      %2490 = vmatmul.bf16.gmra.mxu0 %v2256
      %v2491 = vpop.f32.mrf.mxu0
      %v2492 = vadd.f32 %v2283, %v2491
      %v2493 = vpop.f32.mrf.mxu0
      %v2494 = vadd.f32 %v2283, %v2493
      %2495 = vdwg.mxu0
      %2496 = vmatpush.bf16.msra.mxu0 0
      %2497 = vmatpush.bf16.msra.mxu0 0
      %2498 = vmatpush.bf16.msra.mxu0 0
      %2499 = vmatpush.bf16.msra.mxu0 0
      %2500 = vmatpush.bf16.msra.mxu0 %v2405
      %2501 = vmatpush.bf16.msra.mxu0 %v2341
      %2502 = vmatpush.bf16.msra.mxu0 %v2340
      %2503 = vmatpush.bf16.msra.mxu0 %v2339
      %2504 = vmatmul.bf16.gmra.mxu0 %v2356
      %v2505 = vpop.f32.mrf.mxu0
      %v2506 = vadd.f32 %v2417, %v2505
      %v2507 = vpop.f32.mrf.mxu0
      %v2508 = vadd.f32 %v2419, %v2507
      %2509 = vmatmul.bf16.gmra.mxu0 %v2359
      %v2510 = vpop.f32.mrf.mxu0
      %v2511 = vadd.f32 %v2422, %v2510
      %v2512 = vpop.f32.mrf.mxu0
      %v2513 = vadd.f32 %v2424, %v2512
      %2514 = vmatmul.bf16.gmra.mxu0 %v2362
      %v2515 = vpop.f32.mrf.mxu0
      %v2516 = vadd.f32 %v2427, %v2515
      %v2517 = vpop.f32.mrf.mxu0
      %v2518 = vadd.f32 %v2429, %v2517
      %2519 = vmatmul.bf16.gmra.mxu0 %v2365
      %v2520 = vpop.f32.mrf.mxu0
      %v2521 = vadd.f32 %v2432, %v2520
      %v2522 = vpop.f32.mrf.mxu0
      %v2523 = vadd.f32 %v2434, %v2522
      %2524 = vmatmul.bf16.gmra.mxu0 %v2368
      %v2525 = vpop.f32.mrf.mxu0
      %v2526 = vadd.f32 %v2437, %v2525
      %v2527 = vpop.f32.mrf.mxu0
      %v2528 = vadd.f32 %v2439, %v2527
      %2529 = vmatmul.bf16.gmra.mxu0 %v2371
      %v2530 = vpop.f32.mrf.mxu0
      %v2531 = vadd.f32 %v2442, %v2530
      %v2532 = vpop.f32.mrf.mxu0
      %v2533 = vadd.f32 %v2444, %v2532
      %2534 = vmatmul.bf16.gmra.mxu0 %v2374
      %v2535 = vpop.f32.mrf.mxu0
      %v2536 = vadd.f32 %v2447, %v2535
      %v2537 = vpop.f32.mrf.mxu0
      %v2538 = vadd.f32 %v2449, %v2537
      %2539 = vmatmul.bf16.gmra.mxu0 %v2377
      %v2540 = vpop.f32.mrf.mxu0
      %v2541 = vadd.f32 %v2452, %v2540
      %v2542 = vpop.f32.mrf.mxu0
      %v2543 = vadd.f32 %v2454, %v2542
      %2544 = vmatmul.bf16.gmra.mxu0 %v2380
      %v2545 = vpop.f32.mrf.mxu0
      %v2546 = vadd.f32 %v2457, %v2545
      %v2547 = vpop.f32.mrf.mxu0
      %v2548 = vadd.f32 %v2459, %v2547
      %2549 = vmatmul.bf16.gmra.mxu0 %v2383
      %v2550 = vpop.f32.mrf.mxu0
      %v2551 = vadd.f32 %v2462, %v2550
      %v2552 = vpop.f32.mrf.mxu0
      %v2553 = vadd.f32 %v2464, %v2552
      %2554 = vmatmul.bf16.gmra.mxu0 %v2386
      %v2555 = vpop.f32.mrf.mxu0
      %v2556 = vadd.f32 %v2467, %v2555
      %v2557 = vpop.f32.mrf.mxu0
      %v2558 = vadd.f32 %v2469, %v2557
      %2559 = vmatmul.bf16.gmra.mxu0 %v2389
      %v2560 = vpop.f32.mrf.mxu0
      %v2561 = vadd.f32 %v2472, %v2560
      %v2562 = vpop.f32.mrf.mxu0
      %v2563 = vadd.f32 %v2474, %v2562
      %2564 = vmatmul.bf16.gmra.mxu0 %v2392
      %v2565 = vpop.f32.mrf.mxu0
      %v2566 = vadd.f32 %v2477, %v2565
      %v2567 = vpop.f32.mrf.mxu0
      %v2568 = vadd.f32 %v2479, %v2567
      %2569 = vmatmul.bf16.gmra.mxu0 %v2395
      %v2570 = vpop.f32.mrf.mxu0
      %v2571 = vadd.f32 %v2482, %v2570
      %v2572 = vpop.f32.mrf.mxu0
      %v2573 = vadd.f32 %v2484, %v2572
      %2574 = vmatmul.bf16.gmra.mxu0 %v2398
      %v2575 = vpop.f32.mrf.mxu0
      %v2576 = vadd.f32 %v2487, %v2575
      %v2577 = vpop.f32.mrf.mxu0
      %v2578 = vadd.f32 %v2489, %v2577
      %2579 = vmatmul.bf16.gmra.mxu0 %v2401
      %v2580 = vpop.f32.mrf.mxu0
      %v2581 = vadd.f32 %v2492, %v2580
      %v2582 = vpop.f32.mrf.mxu0
      %v2583 = vadd.f32 %v2494, %v2582
      %2584 = vdwg.mxu0
      %v2585 = vadd.f32 %v2506, -1.0
      %v2586 = vadd.f32 %v2508, -1.0
      %v2587 = vadd.f32 %v2511, -1.0
      %v2588 = vadd.f32 %v2513, -1.0
      %v2589 = vadd.f32 %v2516, -1.0
      %v2590 = vadd.f32 %v2518, -1.0
      %v2591 = vadd.f32 %v2521, -1.0
      %v2592 = vadd.f32 %v2523, -1.0
      %v2593 = vadd.f32 %v2526, -1.0
      %v2594 = vadd.f32 %v2528, -1.0
      %v2595 = vadd.f32 %v2531, -1.0
      %v2596 = vadd.f32 %v2533, -1.0
      %v2597 = vadd.f32 %v2536, -1.0
      %v2598 = vadd.f32 %v2538, -1.0
      %v2599 = vadd.f32 %v2541, -1.0
      %v2600 = vadd.f32 %v2543, -1.0
      %v2601 = vadd.f32 %v2546, -1.0
      %v2602 = vadd.f32 %v2548, -1.0
      %v2603 = vadd.f32 %v2551, -1.0
      %v2604 = vadd.f32 %v2553, -1.0
      %v2605 = vadd.f32 %v2556, -1.0
      %v2606 = vadd.f32 %v2558, -1.0
      %v2607 = vadd.f32 %v2561, -1.0
      %v2608 = vadd.f32 %v2563, -1.0
      %v2609 = vadd.f32 %v2566, -1.0
      %v2610 = vadd.f32 %v2568, -1.0
      %v2611 = vadd.f32 %v2571, -1.0
      %v2612 = vadd.f32 %v2573, -1.0
      %v2613 = vadd.f32 %v2576, -1.0
      %v2614 = vadd.f32 %v2578, -1.0
      %v2615 = vadd.f32 %v2581, -1.0
      %v2616 = vadd.f32 %v2583, -1.0
      %v2617 = vxor.u32 %v2585, 2147483648
      %v2618 = vxor.u32 %v2586, 2147483648
      %v2619 = vxor.u32 %v2587, 2147483648
      %v2620 = vxor.u32 %v2588, 2147483648
      %v2621 = vxor.u32 %v2589, 2147483648
      %v2622 = vxor.u32 %v2590, 2147483648
      %v2623 = vxor.u32 %v2591, 2147483648
      %v2624 = vxor.u32 %v2592, 2147483648
      %v2625 = vxor.u32 %v2593, 2147483648
      %v2626 = vxor.u32 %v2594, 2147483648
      %v2627 = vxor.u32 %v2595, 2147483648
      %v2628 = vxor.u32 %v2596, 2147483648
      %v2629 = vxor.u32 %v2597, 2147483648
      %v2630 = vxor.u32 %v2598, 2147483648
      %v2631 = vxor.u32 %v2599, 2147483648
      %v2632 = vxor.u32 %v2600, 2147483648
      %v2633 = vxor.u32 %v2601, 2147483648
      %v2634 = vxor.u32 %v2602, 2147483648
      %v2635 = vxor.u32 %v2603, 2147483648
      %v2636 = vxor.u32 %v2604, 2147483648
      %v2637 = vxor.u32 %v2605, 2147483648
      %v2638 = vxor.u32 %v2606, 2147483648
      %v2639 = vxor.u32 %v2607, 2147483648
      %v2640 = vxor.u32 %v2608, 2147483648
      %v2641 = vxor.u32 %v2609, 2147483648
      %v2642 = vxor.u32 %v2610, 2147483648
      %v2643 = vxor.u32 %v2611, 2147483648
      %v2644 = vxor.u32 %v2612, 2147483648
      %v2645 = vxor.u32 %v2613, 2147483648
      %v2646 = vxor.u32 %v2614, 2147483648
      %v2647 = vxor.u32 %v2615, 2147483648
      %v2648 = vxor.u32 %v2616, 2147483648
      %v2649 = vmul.f32 %v2617, 1.442695
      %v2650 = vpow.pop %v2649
      %v2651 = vmul.f32 %v2618, 1.442695
      %v2652 = vpow.pop %v2651
      %v2653 = vmul.f32 %v2619, 1.442695
      %v2654 = vpow.pop %v2653
      %v2655 = vmul.f32 %v2620, 1.442695
      %v2656 = vpow.pop %v2655
      %v2657 = vmul.f32 %v2621, 1.442695
      %v2658 = vpow.pop %v2657
      %v2659 = vmul.f32 %v2622, 1.442695
      %v2660 = vpow.pop %v2659
      %v2661 = vmul.f32 %v2623, 1.442695
      %v2662 = vpow.pop %v2661
      %v2663 = vmul.f32 %v2624, 1.442695
      %v2664 = vpow.pop %v2663
      %v2665 = vmul.f32 %v2625, 1.442695
      %v2666 = vpow.pop %v2665
      %v2667 = vmul.f32 %v2626, 1.442695
      %v2668 = vpow.pop %v2667
      %v2669 = vmul.f32 %v2627, 1.442695
      %v2670 = vpow.pop %v2669
      %v2671 = vmul.f32 %v2628, 1.442695
      %v2672 = vpow.pop %v2671
      %v2673 = vmul.f32 %v2629, 1.442695
      %v2674 = vpow.pop %v2673
      %v2675 = vmul.f32 %v2630, 1.442695
      %v2676 = vpow.pop %v2675
      %v2677 = vmul.f32 %v2631, 1.442695
      %v2678 = vpow.pop %v2677
      %v2679 = vmul.f32 %v2632, 1.442695
      %v2680 = vpow.pop %v2679
      %v2681 = vmul.f32 %v2633, 1.442695
      %v2682 = vpow.pop %v2681
      %v2683 = vmul.f32 %v2634, 1.442695
      %v2684 = vpow.pop %v2683
      %v2685 = vmul.f32 %v2635, 1.442695
      %v2686 = vpow.pop %v2685
      %v2687 = vmul.f32 %v2636, 1.442695
      %v2688 = vpow.pop %v2687
      %v2689 = vmul.f32 %v2637, 1.442695
      %v2690 = vpow.pop %v2689
      %v2691 = vmul.f32 %v2638, 1.442695
      %v2692 = vpow.pop %v2691
      %v2693 = vmul.f32 %v2639, 1.442695
      %v2694 = vpow.pop %v2693
      %v2695 = vmul.f32 %v2640, 1.442695
      %v2696 = vpow.pop %v2695
      %v2697 = vmul.f32 %v2641, 1.442695
      %v2698 = vpow.pop %v2697
      %v2699 = vmul.f32 %v2642, 1.442695
      %v2700 = vpow.pop %v2699
      %v2701 = vmul.f32 %v2643, 1.442695
      %v2702 = vpow.pop %v2701
      %v2703 = vmul.f32 %v2644, 1.442695
      %v2704 = vpow.pop %v2703
      %v2705 = vmul.f32 %v2645, 1.442695
      %v2706 = vpow.pop %v2705
      %v2707 = vmul.f32 %v2646, 1.442695
      %v2708 = vpow.pop %v2707
      %v2709 = vmul.f32 %v2647, 1.442695
      %v2710 = vpow.pop %v2709
      %v2711 = vmul.f32 %v2648, 1.442695
      %v2712 = vpow.pop %v2711
      %v2713 = vadd.f32 %v2650, 1.0
      %v2714 = vadd.f32 %v2652, 1.0
      %v2715 = vadd.f32 %v2654, 1.0
      %v2716 = vadd.f32 %v2656, 1.0
      %v2717 = vadd.f32 %v2658, 1.0
      %v2718 = vadd.f32 %v2660, 1.0
      %v2719 = vadd.f32 %v2662, 1.0
      %v2720 = vadd.f32 %v2664, 1.0
      %v2721 = vadd.f32 %v2666, 1.0
      %v2722 = vadd.f32 %v2668, 1.0
      %v2723 = vadd.f32 %v2670, 1.0
      %v2724 = vadd.f32 %v2672, 1.0
      %v2725 = vadd.f32 %v2674, 1.0
      %v2726 = vadd.f32 %v2676, 1.0
      %v2727 = vadd.f32 %v2678, 1.0
      %v2728 = vadd.f32 %v2680, 1.0
      %v2729 = vadd.f32 %v2682, 1.0
      %v2730 = vadd.f32 %v2684, 1.0
      %v2731 = vadd.f32 %v2686, 1.0
      %v2732 = vadd.f32 %v2688, 1.0
      %v2733 = vadd.f32 %v2690, 1.0
      %v2734 = vadd.f32 %v2692, 1.0
      %v2735 = vadd.f32 %v2694, 1.0
      %v2736 = vadd.f32 %v2696, 1.0
      %v2737 = vadd.f32 %v2698, 1.0
      %v2738 = vadd.f32 %v2700, 1.0
      %v2739 = vadd.f32 %v2702, 1.0
      %v2740 = vadd.f32 %v2704, 1.0
      %v2741 = vadd.f32 %v2706, 1.0
      %v2742 = vadd.f32 %v2708, 1.0
      %v2743 = vadd.f32 %v2710, 1.0
      %v2744 = vadd.f32 %v2712, 1.0
      %v2745 = vrcp.pop %v2713
      %v2746 = vmul.f32 %v2713, %v2745
      %v2747 = vsub.f32 1.0, %v2746
      %v2748 = vmul.f32 %v2745, %v2747
      %v2749 = vadd.f32 %v2745, %v2748
      %vm2750 = vweird.f32 %v2713
      %vm2751 = vweird.f32 %v2745
      %vm2752 = vmor %vm2750, %vm2751
      %v2753 = vsel %vm2752, %v2745, %v2749
      %v2754 = vand.u32 2147483647, %v2713
      %vm2755 = vcmp.eq.f32.partialorder %v2754, 8.507059e+37
      %v2756 = vand.u32 %v2713, 2147483648
      %v2757 = vor.u32 1.1754944e-38, %v2756
      %v2758 = vsel %vm2755, %v2757, %v2753
      %v2759 = vmul.f32 1.0, %v2758
      %v2760 = vrcp.pop %v2714
      %v2761 = vmul.f32 %v2714, %v2760
      %v2762 = vsub.f32 1.0, %v2761
      %v2763 = vmul.f32 %v2760, %v2762
      %v2764 = vadd.f32 %v2760, %v2763
      %vm2765 = vweird.f32 %v2714
      %vm2766 = vweird.f32 %v2760
      %vm2767 = vmor %vm2765, %vm2766
      %v2768 = vsel %vm2767, %v2760, %v2764
      %v2769 = vand.u32 2147483647, %v2714
      %vm2770 = vcmp.eq.f32.partialorder %v2769, 8.507059e+37
      %v2771 = vand.u32 %v2714, 2147483648
      %v2772 = vor.u32 1.1754944e-38, %v2771
      %v2773 = vsel %vm2770, %v2772, %v2768
      %v2774 = vmul.f32 1.0, %v2773
      %v2775 = vrcp.pop %v2715
      %v2776 = vmul.f32 %v2715, %v2775
      %v2777 = vsub.f32 1.0, %v2776
      %v2778 = vmul.f32 %v2775, %v2777
      %v2779 = vadd.f32 %v2775, %v2778
      %vm2780 = vweird.f32 %v2715
      %vm2781 = vweird.f32 %v2775
      %vm2782 = vmor %vm2780, %vm2781
      %v2783 = vsel %vm2782, %v2775, %v2779
      %v2784 = vand.u32 2147483647, %v2715
      %vm2785 = vcmp.eq.f32.partialorder %v2784, 8.507059e+37
      %v2786 = vand.u32 %v2715, 2147483648
      %v2787 = vor.u32 1.1754944e-38, %v2786
      %v2788 = vsel %vm2785, %v2787, %v2783
      %v2789 = vmul.f32 1.0, %v2788
      %v2790 = vrcp.pop %v2716
      %v2791 = vmul.f32 %v2716, %v2790
      %v2792 = vsub.f32 1.0, %v2791
      %v2793 = vmul.f32 %v2790, %v2792
      %v2794 = vadd.f32 %v2790, %v2793
      %vm2795 = vweird.f32 %v2716
      %vm2796 = vweird.f32 %v2790
      %vm2797 = vmor %vm2795, %vm2796
      %v2798 = vsel %vm2797, %v2790, %v2794
      %v2799 = vand.u32 2147483647, %v2716
      %vm2800 = vcmp.eq.f32.partialorder %v2799, 8.507059e+37
      %v2801 = vand.u32 %v2716, 2147483648
      %v2802 = vor.u32 1.1754944e-38, %v2801
      %v2803 = vsel %vm2800, %v2802, %v2798
      %v2804 = vmul.f32 1.0, %v2803
      %v2805 = vrcp.pop %v2717
      %v2806 = vmul.f32 %v2717, %v2805
      %v2807 = vsub.f32 1.0, %v2806
      %v2808 = vmul.f32 %v2805, %v2807
      %v2809 = vadd.f32 %v2805, %v2808
      %vm2810 = vweird.f32 %v2717
      %vm2811 = vweird.f32 %v2805
      %vm2812 = vmor %vm2810, %vm2811
      %v2813 = vsel %vm2812, %v2805, %v2809
      %v2814 = vand.u32 2147483647, %v2717
      %vm2815 = vcmp.eq.f32.partialorder %v2814, 8.507059e+37
      %v2816 = vand.u32 %v2717, 2147483648
      %v2817 = vor.u32 1.1754944e-38, %v2816
      %v2818 = vsel %vm2815, %v2817, %v2813
      %v2819 = vmul.f32 1.0, %v2818
      %v2820 = vrcp.pop %v2718
      %v2821 = vmul.f32 %v2718, %v2820
      %v2822 = vsub.f32 1.0, %v2821
      %v2823 = vmul.f32 %v2820, %v2822
      %v2824 = vadd.f32 %v2820, %v2823
      %vm2825 = vweird.f32 %v2718
      %vm2826 = vweird.f32 %v2820
      %vm2827 = vmor %vm2825, %vm2826
      %v2828 = vsel %vm2827, %v2820, %v2824
      %v2829 = vand.u32 2147483647, %v2718
      %vm2830 = vcmp.eq.f32.partialorder %v2829, 8.507059e+37
      %v2831 = vand.u32 %v2718, 2147483648
      %v2832 = vor.u32 1.1754944e-38, %v2831
      %v2833 = vsel %vm2830, %v2832, %v2828
      %v2834 = vmul.f32 1.0, %v2833
      %v2835 = vrcp.pop %v2719
      %v2836 = vmul.f32 %v2719, %v2835
      %v2837 = vsub.f32 1.0, %v2836
      %v2838 = vmul.f32 %v2835, %v2837
      %v2839 = vadd.f32 %v2835, %v2838
      %vm2840 = vweird.f32 %v2719
      %vm2841 = vweird.f32 %v2835
      %vm2842 = vmor %vm2840, %vm2841
      %v2843 = vsel %vm2842, %v2835, %v2839
      %v2844 = vand.u32 2147483647, %v2719
      %vm2845 = vcmp.eq.f32.partialorder %v2844, 8.507059e+37
      %v2846 = vand.u32 %v2719, 2147483648
      %v2847 = vor.u32 1.1754944e-38, %v2846
      %v2848 = vsel %vm2845, %v2847, %v2843
      %v2849 = vmul.f32 1.0, %v2848
      %v2850 = vrcp.pop %v2720
      %v2851 = vmul.f32 %v2720, %v2850
      %v2852 = vsub.f32 1.0, %v2851
      %v2853 = vmul.f32 %v2850, %v2852
      %v2854 = vadd.f32 %v2850, %v2853
      %vm2855 = vweird.f32 %v2720
      %vm2856 = vweird.f32 %v2850
      %vm2857 = vmor %vm2855, %vm2856
      %v2858 = vsel %vm2857, %v2850, %v2854
      %v2859 = vand.u32 2147483647, %v2720
      %vm2860 = vcmp.eq.f32.partialorder %v2859, 8.507059e+37
      %v2861 = vand.u32 %v2720, 2147483648
      %v2862 = vor.u32 1.1754944e-38, %v2861
      %v2863 = vsel %vm2860, %v2862, %v2858
      %v2864 = vmul.f32 1.0, %v2863
      %v2865 = vrcp.pop %v2721
      %v2866 = vmul.f32 %v2721, %v2865
      %v2867 = vsub.f32 1.0, %v2866
      %v2868 = vmul.f32 %v2865, %v2867
      %v2869 = vadd.f32 %v2865, %v2868
      %vm2870 = vweird.f32 %v2721
      %vm2871 = vweird.f32 %v2865
      %vm2872 = vmor %vm2870, %vm2871
      %v2873 = vsel %vm2872, %v2865, %v2869
      %v2874 = vand.u32 2147483647, %v2721
      %vm2875 = vcmp.eq.f32.partialorder %v2874, 8.507059e+37
      %v2876 = vand.u32 %v2721, 2147483648
      %v2877 = vor.u32 1.1754944e-38, %v2876
      %v2878 = vsel %vm2875, %v2877, %v2873
      %v2879 = vmul.f32 1.0, %v2878
      %v2880 = vrcp.pop %v2722
      %v2881 = vmul.f32 %v2722, %v2880
      %v2882 = vsub.f32 1.0, %v2881
      %v2883 = vmul.f32 %v2880, %v2882
      %v2884 = vadd.f32 %v2880, %v2883
      %vm2885 = vweird.f32 %v2722
      %vm2886 = vweird.f32 %v2880
      %vm2887 = vmor %vm2885, %vm2886
      %v2888 = vsel %vm2887, %v2880, %v2884
      %v2889 = vand.u32 2147483647, %v2722
      %vm2890 = vcmp.eq.f32.partialorder %v2889, 8.507059e+37
      %v2891 = vand.u32 %v2722, 2147483648
      %v2892 = vor.u32 1.1754944e-38, %v2891
      %v2893 = vsel %vm2890, %v2892, %v2888
      %v2894 = vmul.f32 1.0, %v2893
      %v2895 = vrcp.pop %v2723
      %v2896 = vmul.f32 %v2723, %v2895
      %v2897 = vsub.f32 1.0, %v2896
      %v2898 = vmul.f32 %v2895, %v2897
      %v2899 = vadd.f32 %v2895, %v2898
      %vm2900 = vweird.f32 %v2723
      %vm2901 = vweird.f32 %v2895
      %vm2902 = vmor %vm2900, %vm2901
      %v2903 = vsel %vm2902, %v2895, %v2899
      %v2904 = vand.u32 2147483647, %v2723
      %vm2905 = vcmp.eq.f32.partialorder %v2904, 8.507059e+37
      %v2906 = vand.u32 %v2723, 2147483648
      %v2907 = vor.u32 1.1754944e-38, %v2906
      %v2908 = vsel %vm2905, %v2907, %v2903
      %v2909 = vmul.f32 1.0, %v2908
      %v2910 = vrcp.pop %v2724
      %v2911 = vmul.f32 %v2724, %v2910
      %v2912 = vsub.f32 1.0, %v2911
      %v2913 = vmul.f32 %v2910, %v2912
      %v2914 = vadd.f32 %v2910, %v2913
      %vm2915 = vweird.f32 %v2724
      %vm2916 = vweird.f32 %v2910
      %vm2917 = vmor %vm2915, %vm2916
      %v2918 = vsel %vm2917, %v2910, %v2914
      %v2919 = vand.u32 2147483647, %v2724
      %vm2920 = vcmp.eq.f32.partialorder %v2919, 8.507059e+37
      %v2921 = vand.u32 %v2724, 2147483648
      %v2922 = vor.u32 1.1754944e-38, %v2921
      %v2923 = vsel %vm2920, %v2922, %v2918
      %v2924 = vmul.f32 1.0, %v2923
      %v2925 = vrcp.pop %v2725
      %v2926 = vmul.f32 %v2725, %v2925
      %v2927 = vsub.f32 1.0, %v2926
      %v2928 = vmul.f32 %v2925, %v2927
      %v2929 = vadd.f32 %v2925, %v2928
      %vm2930 = vweird.f32 %v2725
      %vm2931 = vweird.f32 %v2925
      %vm2932 = vmor %vm2930, %vm2931
      %v2933 = vsel %vm2932, %v2925, %v2929
      %v2934 = vand.u32 2147483647, %v2725
      %vm2935 = vcmp.eq.f32.partialorder %v2934, 8.507059e+37
      %v2936 = vand.u32 %v2725, 2147483648
      %v2937 = vor.u32 1.1754944e-38, %v2936
      %v2938 = vsel %vm2935, %v2937, %v2933
      %v2939 = vmul.f32 1.0, %v2938
      %v2940 = vrcp.pop %v2726
      %v2941 = vmul.f32 %v2726, %v2940
      %v2942 = vsub.f32 1.0, %v2941
      %v2943 = vmul.f32 %v2940, %v2942
      %v2944 = vadd.f32 %v2940, %v2943
      %vm2945 = vweird.f32 %v2726
      %vm2946 = vweird.f32 %v2940
      %vm2947 = vmor %vm2945, %vm2946
      %v2948 = vsel %vm2947, %v2940, %v2944
      %v2949 = vand.u32 2147483647, %v2726
      %vm2950 = vcmp.eq.f32.partialorder %v2949, 8.507059e+37
      %v2951 = vand.u32 %v2726, 2147483648
      %v2952 = vor.u32 1.1754944e-38, %v2951
      %v2953 = vsel %vm2950, %v2952, %v2948
      %v2954 = vmul.f32 1.0, %v2953
      %v2955 = vrcp.pop %v2727
      %v2956 = vmul.f32 %v2727, %v2955
      %v2957 = vsub.f32 1.0, %v2956
      %v2958 = vmul.f32 %v2955, %v2957
      %v2959 = vadd.f32 %v2955, %v2958
      %vm2960 = vweird.f32 %v2727
      %vm2961 = vweird.f32 %v2955
      %vm2962 = vmor %vm2960, %vm2961
      %v2963 = vsel %vm2962, %v2955, %v2959
      %v2964 = vand.u32 2147483647, %v2727
      %vm2965 = vcmp.eq.f32.partialorder %v2964, 8.507059e+37
      %v2966 = vand.u32 %v2727, 2147483648
      %v2967 = vor.u32 1.1754944e-38, %v2966
      %v2968 = vsel %vm2965, %v2967, %v2963
      %v2969 = vmul.f32 1.0, %v2968
      %v2970 = vrcp.pop %v2728
      %v2971 = vmul.f32 %v2728, %v2970
      %v2972 = vsub.f32 1.0, %v2971
      %v2973 = vmul.f32 %v2970, %v2972
      %v2974 = vadd.f32 %v2970, %v2973
      %vm2975 = vweird.f32 %v2728
      %vm2976 = vweird.f32 %v2970
      %vm2977 = vmor %vm2975, %vm2976
      %v2978 = vsel %vm2977, %v2970, %v2974
      %v2979 = vand.u32 2147483647, %v2728
      %vm2980 = vcmp.eq.f32.partialorder %v2979, 8.507059e+37
      %v2981 = vand.u32 %v2728, 2147483648
      %v2982 = vor.u32 1.1754944e-38, %v2981
      %v2983 = vsel %vm2980, %v2982, %v2978
      %v2984 = vmul.f32 1.0, %v2983
      %v2985 = vrcp.pop %v2729
      %v2986 = vmul.f32 %v2729, %v2985
      %v2987 = vsub.f32 1.0, %v2986
      %v2988 = vmul.f32 %v2985, %v2987
      %v2989 = vadd.f32 %v2985, %v2988
      %vm2990 = vweird.f32 %v2729
      %vm2991 = vweird.f32 %v2985
      %vm2992 = vmor %vm2990, %vm2991
      %v2993 = vsel %vm2992, %v2985, %v2989
      %v2994 = vand.u32 2147483647, %v2729
      %vm2995 = vcmp.eq.f32.partialorder %v2994, 8.507059e+37
      %v2996 = vand.u32 %v2729, 2147483648
      %v2997 = vor.u32 1.1754944e-38, %v2996
      %v2998 = vsel %vm2995, %v2997, %v2993
      %v2999 = vmul.f32 1.0, %v2998
      %v3000 = vrcp.pop %v2730
      %v3001 = vmul.f32 %v2730, %v3000
      %v3002 = vsub.f32 1.0, %v3001
      %v3003 = vmul.f32 %v3000, %v3002
      %v3004 = vadd.f32 %v3000, %v3003
      %vm3005 = vweird.f32 %v2730
      %vm3006 = vweird.f32 %v3000
      %vm3007 = vmor %vm3005, %vm3006
      %v3008 = vsel %vm3007, %v3000, %v3004
      %v3009 = vand.u32 2147483647, %v2730
      %vm3010 = vcmp.eq.f32.partialorder %v3009, 8.507059e+37
      %v3011 = vand.u32 %v2730, 2147483648
      %v3012 = vor.u32 1.1754944e-38, %v3011
      %v3013 = vsel %vm3010, %v3012, %v3008
      %v3014 = vmul.f32 1.0, %v3013
      %v3015 = vrcp.pop %v2731
      %v3016 = vmul.f32 %v2731, %v3015
      %v3017 = vsub.f32 1.0, %v3016
      %v3018 = vmul.f32 %v3015, %v3017
      %v3019 = vadd.f32 %v3015, %v3018
      %vm3020 = vweird.f32 %v2731
      %vm3021 = vweird.f32 %v3015
      %vm3022 = vmor %vm3020, %vm3021
      %v3023 = vsel %vm3022, %v3015, %v3019
      %v3024 = vand.u32 2147483647, %v2731
      %vm3025 = vcmp.eq.f32.partialorder %v3024, 8.507059e+37
      %v3026 = vand.u32 %v2731, 2147483648
      %v3027 = vor.u32 1.1754944e-38, %v3026
      %v3028 = vsel %vm3025, %v3027, %v3023
      %v3029 = vmul.f32 1.0, %v3028
      %v3030 = vrcp.pop %v2732
      %v3031 = vmul.f32 %v2732, %v3030
      %v3032 = vsub.f32 1.0, %v3031
      %v3033 = vmul.f32 %v3030, %v3032
      %v3034 = vadd.f32 %v3030, %v3033
      %vm3035 = vweird.f32 %v2732
      %vm3036 = vweird.f32 %v3030
      %vm3037 = vmor %vm3035, %vm3036
      %v3038 = vsel %vm3037, %v3030, %v3034
      %v3039 = vand.u32 2147483647, %v2732
      %vm3040 = vcmp.eq.f32.partialorder %v3039, 8.507059e+37
      %v3041 = vand.u32 %v2732, 2147483648
      %v3042 = vor.u32 1.1754944e-38, %v3041
      %v3043 = vsel %vm3040, %v3042, %v3038
      %v3044 = vmul.f32 1.0, %v3043
      %v3045 = vrcp.pop %v2733
      %v3046 = vmul.f32 %v2733, %v3045
      %v3047 = vsub.f32 1.0, %v3046
      %v3048 = vmul.f32 %v3045, %v3047
      %v3049 = vadd.f32 %v3045, %v3048
      %vm3050 = vweird.f32 %v2733
      %vm3051 = vweird.f32 %v3045
      %vm3052 = vmor %vm3050, %vm3051
      %v3053 = vsel %vm3052, %v3045, %v3049
      %v3054 = vand.u32 2147483647, %v2733
      %vm3055 = vcmp.eq.f32.partialorder %v3054, 8.507059e+37
      %v3056 = vand.u32 %v2733, 2147483648
      %v3057 = vor.u32 1.1754944e-38, %v3056
      %v3058 = vsel %vm3055, %v3057, %v3053
      %v3059 = vmul.f32 1.0, %v3058
      %v3060 = vrcp.pop %v2734
      %v3061 = vmul.f32 %v2734, %v3060
      %v3062 = vsub.f32 1.0, %v3061
      %v3063 = vmul.f32 %v3060, %v3062
      %v3064 = vadd.f32 %v3060, %v3063
      %vm3065 = vweird.f32 %v2734
      %vm3066 = vweird.f32 %v3060
      %vm3067 = vmor %vm3065, %vm3066
      %v3068 = vsel %vm3067, %v3060, %v3064
      %v3069 = vand.u32 2147483647, %v2734
      %vm3070 = vcmp.eq.f32.partialorder %v3069, 8.507059e+37
      %v3071 = vand.u32 %v2734, 2147483648
      %v3072 = vor.u32 1.1754944e-38, %v3071
      %v3073 = vsel %vm3070, %v3072, %v3068
      %v3074 = vmul.f32 1.0, %v3073
      %v3075 = vrcp.pop %v2735
      %v3076 = vmul.f32 %v2735, %v3075
      %v3077 = vsub.f32 1.0, %v3076
      %v3078 = vmul.f32 %v3075, %v3077
      %v3079 = vadd.f32 %v3075, %v3078
      %vm3080 = vweird.f32 %v2735
      %vm3081 = vweird.f32 %v3075
      %vm3082 = vmor %vm3080, %vm3081
      %v3083 = vsel %vm3082, %v3075, %v3079
      %v3084 = vand.u32 2147483647, %v2735
      %vm3085 = vcmp.eq.f32.partialorder %v3084, 8.507059e+37
      %v3086 = vand.u32 %v2735, 2147483648
      %v3087 = vor.u32 1.1754944e-38, %v3086
      %v3088 = vsel %vm3085, %v3087, %v3083
      %v3089 = vmul.f32 1.0, %v3088
      %v3090 = vrcp.pop %v2736
      %v3091 = vmul.f32 %v2736, %v3090
      %v3092 = vsub.f32 1.0, %v3091
      %v3093 = vmul.f32 %v3090, %v3092
      %v3094 = vadd.f32 %v3090, %v3093
      %vm3095 = vweird.f32 %v2736
      %vm3096 = vweird.f32 %v3090
      %vm3097 = vmor %vm3095, %vm3096
      %v3098 = vsel %vm3097, %v3090, %v3094
      %v3099 = vand.u32 2147483647, %v2736
      %vm3100 = vcmp.eq.f32.partialorder %v3099, 8.507059e+37
      %v3101 = vand.u32 %v2736, 2147483648
      %v3102 = vor.u32 1.1754944e-38, %v3101
      %v3103 = vsel %vm3100, %v3102, %v3098
      %v3104 = vmul.f32 1.0, %v3103
      %v3105 = vrcp.pop %v2737
      %v3106 = vmul.f32 %v2737, %v3105
      %v3107 = vsub.f32 1.0, %v3106
      %v3108 = vmul.f32 %v3105, %v3107
      %v3109 = vadd.f32 %v3105, %v3108
      %vm3110 = vweird.f32 %v2737
      %vm3111 = vweird.f32 %v3105
      %vm3112 = vmor %vm3110, %vm3111
      %v3113 = vsel %vm3112, %v3105, %v3109
      %v3114 = vand.u32 2147483647, %v2737
      %vm3115 = vcmp.eq.f32.partialorder %v3114, 8.507059e+37
      %v3116 = vand.u32 %v2737, 2147483648
      %v3117 = vor.u32 1.1754944e-38, %v3116
      %v3118 = vsel %vm3115, %v3117, %v3113
      %v3119 = vmul.f32 1.0, %v3118
      %v3120 = vrcp.pop %v2738
      %v3121 = vmul.f32 %v2738, %v3120
      %v3122 = vsub.f32 1.0, %v3121
      %v3123 = vmul.f32 %v3120, %v3122
      %v3124 = vadd.f32 %v3120, %v3123
      %vm3125 = vweird.f32 %v2738
      %vm3126 = vweird.f32 %v3120
      %vm3127 = vmor %vm3125, %vm3126
      %v3128 = vsel %vm3127, %v3120, %v3124
      %v3129 = vand.u32 2147483647, %v2738
      %vm3130 = vcmp.eq.f32.partialorder %v3129, 8.507059e+37
      %v3131 = vand.u32 %v2738, 2147483648
      %v3132 = vor.u32 1.1754944e-38, %v3131
      %v3133 = vsel %vm3130, %v3132, %v3128
      %v3134 = vmul.f32 1.0, %v3133
      %v3135 = vrcp.pop %v2739
      %v3136 = vmul.f32 %v2739, %v3135
      %v3137 = vsub.f32 1.0, %v3136
      %v3138 = vmul.f32 %v3135, %v3137
      %v3139 = vadd.f32 %v3135, %v3138
      %vm3140 = vweird.f32 %v2739
      %vm3141 = vweird.f32 %v3135
      %vm3142 = vmor %vm3140, %vm3141
      %v3143 = vsel %vm3142, %v3135, %v3139
      %v3144 = vand.u32 2147483647, %v2739
      %vm3145 = vcmp.eq.f32.partialorder %v3144, 8.507059e+37
      %v3146 = vand.u32 %v2739, 2147483648
      %v3147 = vor.u32 1.1754944e-38, %v3146
      %v3148 = vsel %vm3145, %v3147, %v3143
      %v3149 = vmul.f32 1.0, %v3148
      %v3150 = vrcp.pop %v2740
      %v3151 = vmul.f32 %v2740, %v3150
      %v3152 = vsub.f32 1.0, %v3151
      %v3153 = vmul.f32 %v3150, %v3152
      %v3154 = vadd.f32 %v3150, %v3153
      %vm3155 = vweird.f32 %v2740
      %vm3156 = vweird.f32 %v3150
      %vm3157 = vmor %vm3155, %vm3156
      %v3158 = vsel %vm3157, %v3150, %v3154
      %v3159 = vand.u32 2147483647, %v2740
      %vm3160 = vcmp.eq.f32.partialorder %v3159, 8.507059e+37
      %v3161 = vand.u32 %v2740, 2147483648
      %v3162 = vor.u32 1.1754944e-38, %v3161
      %v3163 = vsel %vm3160, %v3162, %v3158
      %v3164 = vmul.f32 1.0, %v3163
      %v3165 = vrcp.pop %v2741
      %v3166 = vmul.f32 %v2741, %v3165
      %v3167 = vsub.f32 1.0, %v3166
      %v3168 = vmul.f32 %v3165, %v3167
      %v3169 = vadd.f32 %v3165, %v3168
      %vm3170 = vweird.f32 %v2741
      %vm3171 = vweird.f32 %v3165
      %vm3172 = vmor %vm3170, %vm3171
      %v3173 = vsel %vm3172, %v3165, %v3169
      %v3174 = vand.u32 2147483647, %v2741
      %vm3175 = vcmp.eq.f32.partialorder %v3174, 8.507059e+37
      %v3176 = vand.u32 %v2741, 2147483648
      %v3177 = vor.u32 1.1754944e-38, %v3176
      %v3178 = vsel %vm3175, %v3177, %v3173
      %v3179 = vmul.f32 1.0, %v3178
      %v3180 = vrcp.pop %v2742
      %v3181 = vmul.f32 %v2742, %v3180
      %v3182 = vsub.f32 1.0, %v3181
      %v3183 = vmul.f32 %v3180, %v3182
      %v3184 = vadd.f32 %v3180, %v3183
      %vm3185 = vweird.f32 %v2742
      %vm3186 = vweird.f32 %v3180
      %vm3187 = vmor %vm3185, %vm3186
      %v3188 = vsel %vm3187, %v3180, %v3184
      %v3189 = vand.u32 2147483647, %v2742
      %vm3190 = vcmp.eq.f32.partialorder %v3189, 8.507059e+37
      %v3191 = vand.u32 %v2742, 2147483648
      %v3192 = vor.u32 1.1754944e-38, %v3191
      %v3193 = vsel %vm3190, %v3192, %v3188
      %v3194 = vmul.f32 1.0, %v3193
      %v3195 = vrcp.pop %v2743
      %v3196 = vmul.f32 %v2743, %v3195
      %v3197 = vsub.f32 1.0, %v3196
      %v3198 = vmul.f32 %v3195, %v3197
      %v3199 = vadd.f32 %v3195, %v3198
      %vm3200 = vweird.f32 %v2743
      %vm3201 = vweird.f32 %v3195
      %vm3202 = vmor %vm3200, %vm3201
      %v3203 = vsel %vm3202, %v3195, %v3199
      %v3204 = vand.u32 2147483647, %v2743
      %vm3205 = vcmp.eq.f32.partialorder %v3204, 8.507059e+37
      %v3206 = vand.u32 %v2743, 2147483648
      %v3207 = vor.u32 1.1754944e-38, %v3206
      %v3208 = vsel %vm3205, %v3207, %v3203
      %v3209 = vmul.f32 1.0, %v3208
      %v3210 = vrcp.pop %v2744
      %v3211 = vmul.f32 %v2744, %v3210
      %v3212 = vsub.f32 1.0, %v3211
      %v3213 = vmul.f32 %v3210, %v3212
      %v3214 = vadd.f32 %v3210, %v3213
      %vm3215 = vweird.f32 %v2744
      %vm3216 = vweird.f32 %v3210
      %vm3217 = vmor %vm3215, %vm3216
      %v3218 = vsel %vm3217, %v3210, %v3214
      %v3219 = vand.u32 2147483647, %v2744
      %vm3220 = vcmp.eq.f32.partialorder %v3219, 8.507059e+37
      %v3221 = vand.u32 %v2744, 2147483648
      %v3222 = vor.u32 1.1754944e-38, %v3221
      %v3223 = vsel %vm3220, %v3222, %v3218
      %v3224 = vmul.f32 1.0, %v3223
      %3225 = vrot.lane.b32.xlu0 %v431, 8
      %v3226 = vpop.permute.xlu0 %3225
      %3227 = vrot.lane.b32.xlu0 %v432, 8
      %v3228 = vpop.permute.xlu0 %3227
      %3229 = vrot.lane.b32.xlu0 %v433, 8
      %v3230 = vpop.permute.xlu0 %3229
      %3231 = vrot.lane.b32.xlu0 %v434, 8
      %v3232 = vpop.permute.xlu0 %3231
      %3233 = vrot.lane.b32.xlu0 %v435, 8
      %v3234 = vpop.permute.xlu0 %3233
      %3235 = vrot.lane.b32.xlu0 %v436, 8
      %v3236 = vpop.permute.xlu0 %3235
      %3237 = vrot.lane.b32.xlu0 %v437, 8
      %v3238 = vpop.permute.xlu0 %3237
      %3239 = vrot.lane.b32.xlu0 %v438, 8
      %v3240 = vpop.permute.xlu0 %3239
      %3241 = vrot.lane.b32.xlu0 %v439, 8
      %v3242 = vpop.permute.xlu0 %3241
      %3243 = vrot.lane.b32.xlu0 %v440, 8
      %v3244 = vpop.permute.xlu0 %3243
      %3245 = vrot.lane.b32.xlu0 %v441, 8
      %v3246 = vpop.permute.xlu0 %3245
      %3247 = vrot.lane.b32.xlu0 %v442, 8
      %v3248 = vpop.permute.xlu0 %3247
      %3249 = vrot.lane.b32.xlu0 %v443, 8
      %v3250 = vpop.permute.xlu0 %3249
      %3251 = vrot.lane.b32.xlu0 %v444, 8
      %v3252 = vpop.permute.xlu0 %3251
      %3253 = vrot.lane.b32.xlu0 %v445, 8
      %v3254 = vpop.permute.xlu0 %3253
      %3255 = vrot.lane.b32.xlu0 %v446, 8
      %v3256 = vpop.permute.xlu0 %3255
      %3257 = vrot.lane.b32.xlu0 %v447, 8
      %v3258 = vpop.permute.xlu0 %3257
      %3259 = vrot.lane.b32.xlu0 %v448, 8
      %v3260 = vpop.permute.xlu0 %3259
      %3261 = vrot.lane.b32.xlu0 %v449, 8
      %v3262 = vpop.permute.xlu0 %3261
      %3263 = vrot.lane.b32.xlu0 %v450, 8
      %v3264 = vpop.permute.xlu0 %3263
      %3265 = vrot.lane.b32.xlu0 %v451, 8
      %v3266 = vpop.permute.xlu0 %3265
      %3267 = vrot.lane.b32.xlu0 %v452, 8
      %v3268 = vpop.permute.xlu0 %3267
      %3269 = vrot.lane.b32.xlu0 %v453, 8
      %v3270 = vpop.permute.xlu0 %3269
      %3271 = vrot.lane.b32.xlu0 %v454, 8
      %v3272 = vpop.permute.xlu0 %3271
      %3273 = vrot.lane.b32.xlu0 %v455, 8
      %v3274 = vpop.permute.xlu0 %3273
      %3275 = vrot.lane.b32.xlu0 %v456, 8
      %v3276 = vpop.permute.xlu0 %3275
      %3277 = vrot.lane.b32.xlu0 %v457, 8
      %v3278 = vpop.permute.xlu0 %3277
      %3279 = vrot.lane.b32.xlu0 %v458, 8
      %v3280 = vpop.permute.xlu0 %3279
      %3281 = vrot.lane.b32.xlu0 %v459, 8
      %v3282 = vpop.permute.xlu0 %3281
      %3283 = vrot.lane.b32.xlu0 %v460, 8
      %v3284 = vpop.permute.xlu0 %3283
      %3285 = vrot.lane.b32.xlu0 %v461, 8
      %v3286 = vpop.permute.xlu0 %3285
      %3287 = vrot.lane.b32.xlu0 %v462, 8
      %v3288 = vpop.permute.xlu0 %3287
      %v3321 = vmul.f32 %v2759, %v3226
      %v3322 = vmul.f32 %v2774, %v3228
      %v3323 = vmul.f32 %v2789, %v3230
      %v3324 = vmul.f32 %v2804, %v3232
      %v3325 = vmul.f32 %v2819, %v3234
      %v3326 = vmul.f32 %v2834, %v3236
      %v3327 = vmul.f32 %v2849, %v3238
      %v3328 = vmul.f32 %v2864, %v3240
      %v3329 = vmul.f32 %v2879, %v3242
      %v3330 = vmul.f32 %v2894, %v3244
      %v3331 = vmul.f32 %v2909, %v3246
      %v3332 = vmul.f32 %v2924, %v3248
      %v3333 = vmul.f32 %v2939, %v3250
      %v3334 = vmul.f32 %v2954, %v3252
      %v3335 = vmul.f32 %v2969, %v3254
      %v3336 = vmul.f32 %v2984, %v3256
      %v3337 = vmul.f32 %v2999, %v3258
      %v3338 = vmul.f32 %v3014, %v3260
      %v3339 = vmul.f32 %v3029, %v3262
      %v3340 = vmul.f32 %v3044, %v3264
      %v3341 = vmul.f32 %v3059, %v3266
      %v3342 = vmul.f32 %v3074, %v3268
      %v3343 = vmul.f32 %v3089, %v3270
      %v3344 = vmul.f32 %v3104, %v3272
      %v3345 = vmul.f32 %v3119, %v3274
      %v3346 = vmul.f32 %v3134, %v3276
      %v3347 = vmul.f32 %v3149, %v3278
      %v3348 = vmul.f32 %v3164, %v3280
      %v3349 = vmul.f32 %v3179, %v3282
      %v3350 = vmul.f32 %v3194, %v3284
      %v3351 = vmul.f32 %v3209, %v3286
      %v3352 = vmul.f32 %v3224, %v3288
      %v3353 = vsub.f32 1.0, %v2759
      %v3354 = vsub.f32 1.0, %v2774
      %v3355 = vsub.f32 1.0, %v2789
      %v3356 = vsub.f32 1.0, %v2804
      %v3357 = vsub.f32 1.0, %v2819
      %v3358 = vsub.f32 1.0, %v2834
      %v3359 = vsub.f32 1.0, %v2849
      %v3360 = vsub.f32 1.0, %v2864
      %v3361 = vsub.f32 1.0, %v2879
      %v3362 = vsub.f32 1.0, %v2894
      %v3363 = vsub.f32 1.0, %v2909
      %v3364 = vsub.f32 1.0, %v2924
      %v3365 = vsub.f32 1.0, %v2939
      %v3366 = vsub.f32 1.0, %v2954
      %v3367 = vsub.f32 1.0, %v2969
      %v3368 = vsub.f32 1.0, %v2984
      %v3369 = vsub.f32 1.0, %v2999
      %v3370 = vsub.f32 1.0, %v3014
      %v3371 = vsub.f32 1.0, %v3029
      %v3372 = vsub.f32 1.0, %v3044
      %v3373 = vsub.f32 1.0, %v3059
      %v3374 = vsub.f32 1.0, %v3074
      %v3375 = vsub.f32 1.0, %v3089
      %v3376 = vsub.f32 1.0, %v3104
      %v3377 = vsub.f32 1.0, %v3119
      %v3378 = vsub.f32 1.0, %v3134
      %v3379 = vsub.f32 1.0, %v3149
      %v3380 = vsub.f32 1.0, %v3164
      %v3381 = vsub.f32 1.0, %v3179
      %v3382 = vsub.f32 1.0, %v3194
      %v3383 = vsub.f32 1.0, %v3209
      %v3384 = vsub.f32 1.0, %v3224
      %v3385 = vtanh.pop %v2506
      %v3386 = vtanh.pop %v2508
      %v3387 = vtanh.pop %v2511
      %v3388 = vtanh.pop %v2513
      %v3389 = vtanh.pop %v2516
      %v3390 = vtanh.pop %v2518
      %v3391 = vtanh.pop %v2521
      %v3392 = vtanh.pop %v2523
      %v3393 = vtanh.pop %v2526
      %v3394 = vtanh.pop %v2528
      %v3395 = vtanh.pop %v2531
      %v3396 = vtanh.pop %v2533
      %v3397 = vtanh.pop %v2536
      %v3398 = vtanh.pop %v2538
      %v3399 = vtanh.pop %v2541
      %v3400 = vtanh.pop %v2543
      %v3401 = vtanh.pop %v2546
      %v3402 = vtanh.pop %v2548
      %v3403 = vtanh.pop %v2551
      %v3404 = vtanh.pop %v2553
      %v3405 = vtanh.pop %v2556
      %v3406 = vtanh.pop %v2558
      %v3407 = vtanh.pop %v2561
      %v3408 = vtanh.pop %v2563
      %v3409 = vtanh.pop %v2566
      %v3410 = vtanh.pop %v2568
      %v3411 = vtanh.pop %v2571
      %v3412 = vtanh.pop %v2573
      %v3413 = vtanh.pop %v2576
      %v3414 = vtanh.pop %v2578
      %v3415 = vtanh.pop %v2581
      %v3416 = vtanh.pop %v2583
      %3449 = vrot.lane.b32.xlu0 %v3385, 8
      %v3450 = vpop.permute.xlu0 %3449
      %3451 = vrot.lane.b32.xlu0 %v3386, 8
      %v3452 = vpop.permute.xlu0 %3451
      %3453 = vrot.lane.b32.xlu0 %v3387, 8
      %v3454 = vpop.permute.xlu0 %3453
      %3455 = vrot.lane.b32.xlu0 %v3388, 8
      %v3456 = vpop.permute.xlu0 %3455
      %3457 = vrot.lane.b32.xlu0 %v3389, 8
      %v3458 = vpop.permute.xlu0 %3457
      %3459 = vrot.lane.b32.xlu0 %v3390, 8
      %v3460 = vpop.permute.xlu0 %3459
      %3461 = vrot.lane.b32.xlu0 %v3391, 8
      %v3462 = vpop.permute.xlu0 %3461
      %3463 = vrot.lane.b32.xlu0 %v3392, 8
      %v3464 = vpop.permute.xlu0 %3463
      %3465 = vrot.lane.b32.xlu0 %v3393, 8
      %v3466 = vpop.permute.xlu0 %3465
      %3467 = vrot.lane.b32.xlu0 %v3394, 8
      %v3468 = vpop.permute.xlu0 %3467
      %3469 = vrot.lane.b32.xlu0 %v3395, 8
      %v3470 = vpop.permute.xlu0 %3469
      %3471 = vrot.lane.b32.xlu0 %v3396, 8
      %v3472 = vpop.permute.xlu0 %3471
      %3473 = vrot.lane.b32.xlu0 %v3397, 8
      %v3474 = vpop.permute.xlu0 %3473
      %3475 = vrot.lane.b32.xlu0 %v3398, 8
      %v3476 = vpop.permute.xlu0 %3475
      %3477 = vrot.lane.b32.xlu0 %v3399, 8
      %v3478 = vpop.permute.xlu0 %3477
      %3479 = vrot.lane.b32.xlu0 %v3400, 8
      %v3480 = vpop.permute.xlu0 %3479
      %3481 = vrot.lane.b32.xlu0 %v3401, 8
      %v3482 = vpop.permute.xlu0 %3481
      %3483 = vrot.lane.b32.xlu0 %v3402, 8
      %v3484 = vpop.permute.xlu0 %3483
      %3485 = vrot.lane.b32.xlu0 %v3403, 8
      %v3486 = vpop.permute.xlu0 %3485
      %3487 = vrot.lane.b32.xlu0 %v3404, 8
      %v3488 = vpop.permute.xlu0 %3487
      %3489 = vrot.lane.b32.xlu0 %v3405, 8
      %v3490 = vpop.permute.xlu0 %3489
      %3491 = vrot.lane.b32.xlu0 %v3406, 8
      %v3492 = vpop.permute.xlu0 %3491
      %3493 = vrot.lane.b32.xlu0 %v3407, 8
      %v3494 = vpop.permute.xlu0 %3493
      %3495 = vrot.lane.b32.xlu0 %v3408, 8
      %v3496 = vpop.permute.xlu0 %3495
      %3497 = vrot.lane.b32.xlu0 %v3409, 8
      %v3498 = vpop.permute.xlu0 %3497
      %3499 = vrot.lane.b32.xlu0 %v3410, 8
      %v3500 = vpop.permute.xlu0 %3499
      %3501 = vrot.lane.b32.xlu0 %v3411, 8
      %v3502 = vpop.permute.xlu0 %3501
      %3503 = vrot.lane.b32.xlu0 %v3412, 8
      %v3504 = vpop.permute.xlu0 %3503
      %3505 = vrot.lane.b32.xlu0 %v3413, 8
      %v3506 = vpop.permute.xlu0 %3505
      %3507 = vrot.lane.b32.xlu0 %v3414, 8
      %v3508 = vpop.permute.xlu0 %3507
      %3509 = vrot.lane.b32.xlu0 %v3415, 8
      %v3510 = vpop.permute.xlu0 %3509
      %3511 = vrot.lane.b32.xlu0 %v3416, 8
      %v3512 = vpop.permute.xlu0 %3511
      %v3545 = vmul.f32 %v3353, %v3450
      %v3546 = vmul.f32 %v3354, %v3452
      %v3547 = vmul.f32 %v3355, %v3454
      %v3548 = vmul.f32 %v3356, %v3456
      %v3549 = vmul.f32 %v3357, %v3458
      %v3550 = vmul.f32 %v3358, %v3460
      %v3551 = vmul.f32 %v3359, %v3462
      %v3552 = vmul.f32 %v3360, %v3464
      %v3553 = vmul.f32 %v3361, %v3466
      %v3554 = vmul.f32 %v3362, %v3468
      %v3555 = vmul.f32 %v3363, %v3470
      %v3556 = vmul.f32 %v3364, %v3472
      %v3557 = vmul.f32 %v3365, %v3474
      %v3558 = vmul.f32 %v3366, %v3476
      %v3559 = vmul.f32 %v3367, %v3478
      %v3560 = vmul.f32 %v3368, %v3480
      %v3561 = vmul.f32 %v3369, %v3482
      %v3562 = vmul.f32 %v3370, %v3484
      %v3563 = vmul.f32 %v3371, %v3486
      %v3564 = vmul.f32 %v3372, %v3488
      %v3565 = vmul.f32 %v3373, %v3490
      %v3566 = vmul.f32 %v3374, %v3492
      %v3567 = vmul.f32 %v3375, %v3494
      %v3568 = vmul.f32 %v3376, %v3496
      %v3569 = vmul.f32 %v3377, %v3498
      %v3570 = vmul.f32 %v3378, %v3500
      %v3571 = vmul.f32 %v3379, %v3502
      %v3572 = vmul.f32 %v3380, %v3504
      %v3573 = vmul.f32 %v3381, %v3506
      %v3574 = vmul.f32 %v3382, %v3508
      %v3575 = vmul.f32 %v3383, %v3510
      %v3576 = vmul.f32 %v3384, %v3512
      %v3577 = vadd.f32 %v3321, %v3545
      %v3578 = vadd.f32 %v3322, %v3546
      %v3579 = vadd.f32 %v3323, %v3547
      %v3580 = vadd.f32 %v3324, %v3548
      %v3581 = vadd.f32 %v3325, %v3549
      %v3582 = vadd.f32 %v3326, %v3550
      %v3583 = vadd.f32 %v3327, %v3551
      %v3584 = vadd.f32 %v3328, %v3552
      %v3585 = vadd.f32 %v3329, %v3553
      %v3586 = vadd.f32 %v3330, %v3554
      %v3587 = vadd.f32 %v3331, %v3555
      %v3588 = vadd.f32 %v3332, %v3556
      %v3589 = vadd.f32 %v3333, %v3557
      %v3590 = vadd.f32 %v3334, %v3558
      %v3591 = vadd.f32 %v3335, %v3559
      %v3592 = vadd.f32 %v3336, %v3560
      %v3593 = vadd.f32 %v3337, %v3561
      %v3594 = vadd.f32 %v3338, %v3562
      %v3595 = vadd.f32 %v3339, %v3563
      %v3596 = vadd.f32 %v3340, %v3564
      %v3597 = vadd.f32 %v3341, %v3565
      %v3598 = vadd.f32 %v3342, %v3566
      %v3599 = vadd.f32 %v3343, %v3567
      %v3600 = vadd.f32 %v3344, %v3568
      %v3601 = vadd.f32 %v3345, %v3569
      %v3602 = vadd.f32 %v3346, %v3570
      %v3603 = vadd.f32 %v3347, %v3571
      %v3604 = vadd.f32 %v3348, %v3572
      %v3605 = vadd.f32 %v3349, %v3573
      %v3606 = vadd.f32 %v3350, %v3574
      %v3607 = vadd.f32 %v3351, %v3575
      %v3608 = vadd.f32 %v3352, %v3576
      %3609 = vrot.lane.b32.xlu0 %v463, 24
      %v3610 = vpop.permute.xlu0 %3609
      %3611 = vrot.lane.b32.xlu0 %v464, 24
      %v3612 = vpop.permute.xlu0 %3611
      %3613 = vrot.lane.b32.xlu0 %v465, 24
      %v3614 = vpop.permute.xlu0 %3613
      %3615 = vrot.lane.b32.xlu0 %v466, 24
      %v3616 = vpop.permute.xlu0 %3615
      %3617 = vrot.lane.b32.xlu0 %v467, 24
      %v3618 = vpop.permute.xlu0 %3617
      %3619 = vrot.lane.b32.xlu0 %v468, 24
      %v3620 = vpop.permute.xlu0 %3619
      %3621 = vrot.lane.b32.xlu0 %v469, 24
      %v3622 = vpop.permute.xlu0 %3621
      %3623 = vrot.lane.b32.xlu0 %v470, 24
      %v3624 = vpop.permute.xlu0 %3623
      %3625 = vrot.lane.b32.xlu0 %v471, 24
      %v3626 = vpop.permute.xlu0 %3625
      %3627 = vrot.lane.b32.xlu0 %v472, 24
      %v3628 = vpop.permute.xlu0 %3627
      %3629 = vrot.lane.b32.xlu0 %v473, 24
      %v3630 = vpop.permute.xlu0 %3629
      %3631 = vrot.lane.b32.xlu0 %v474, 24
      %v3632 = vpop.permute.xlu0 %3631
      %3633 = vrot.lane.b32.xlu0 %v475, 24
      %v3634 = vpop.permute.xlu0 %3633
      %3635 = vrot.lane.b32.xlu0 %v476, 24
      %v3636 = vpop.permute.xlu0 %3635
      %3637 = vrot.lane.b32.xlu0 %v477, 24
      %v3638 = vpop.permute.xlu0 %3637
      %3639 = vrot.lane.b32.xlu0 %v478, 24
      %v3640 = vpop.permute.xlu0 %3639
      %3641 = vrot.lane.b32.xlu0 %v479, 24
      %v3642 = vpop.permute.xlu0 %3641
      %3643 = vrot.lane.b32.xlu0 %v480, 24
      %v3644 = vpop.permute.xlu0 %3643
      %3645 = vrot.lane.b32.xlu0 %v481, 24
      %v3646 = vpop.permute.xlu0 %3645
      %3647 = vrot.lane.b32.xlu0 %v482, 24
      %v3648 = vpop.permute.xlu0 %3647
      %3649 = vrot.lane.b32.xlu0 %v483, 24
      %v3650 = vpop.permute.xlu0 %3649
      %3651 = vrot.lane.b32.xlu0 %v484, 24
      %v3652 = vpop.permute.xlu0 %3651
      %3653 = vrot.lane.b32.xlu0 %v485, 24
      %v3654 = vpop.permute.xlu0 %3653
      %3655 = vrot.lane.b32.xlu0 %v486, 24
      %v3656 = vpop.permute.xlu0 %3655
      %3657 = vrot.lane.b32.xlu0 %v487, 24
      %v3658 = vpop.permute.xlu0 %3657
      %3659 = vrot.lane.b32.xlu0 %v488, 24
      %v3660 = vpop.permute.xlu0 %3659
      %3661 = vrot.lane.b32.xlu0 %v489, 24
      %v3662 = vpop.permute.xlu0 %3661
      %3663 = vrot.lane.b32.xlu0 %v490, 24
      %v3664 = vpop.permute.xlu0 %3663
      %3665 = vrot.lane.b32.xlu0 %v491, 24
      %v3666 = vpop.permute.xlu0 %3665
      %3667 = vrot.lane.b32.xlu0 %v492, 24
      %v3668 = vpop.permute.xlu0 %3667
      %3669 = vrot.lane.b32.xlu0 %v493, 24
      %v3670 = vpop.permute.xlu0 %3669
      %3671 = vrot.lane.b32.xlu0 %v494, 24
      %v3672 = vpop.permute.xlu0 %3671
      %v3705 = vmul.f32 %v2759, %v3610
      %v3706 = vmul.f32 %v2774, %v3612
      %v3707 = vmul.f32 %v2789, %v3614
      %v3708 = vmul.f32 %v2804, %v3616
      %v3709 = vmul.f32 %v2819, %v3618
      %v3710 = vmul.f32 %v2834, %v3620
      %v3711 = vmul.f32 %v2849, %v3622
      %v3712 = vmul.f32 %v2864, %v3624
      %v3713 = vmul.f32 %v2879, %v3626
      %v3714 = vmul.f32 %v2894, %v3628
      %v3715 = vmul.f32 %v2909, %v3630
      %v3716 = vmul.f32 %v2924, %v3632
      %v3717 = vmul.f32 %v2939, %v3634
      %v3718 = vmul.f32 %v2954, %v3636
      %v3719 = vmul.f32 %v2969, %v3638
      %v3720 = vmul.f32 %v2984, %v3640
      %v3721 = vmul.f32 %v2999, %v3642
      %v3722 = vmul.f32 %v3014, %v3644
      %v3723 = vmul.f32 %v3029, %v3646
      %v3724 = vmul.f32 %v3044, %v3648
      %v3725 = vmul.f32 %v3059, %v3650
      %v3726 = vmul.f32 %v3074, %v3652
      %v3727 = vmul.f32 %v3089, %v3654
      %v3728 = vmul.f32 %v3104, %v3656
      %v3729 = vmul.f32 %v3119, %v3658
      %v3730 = vmul.f32 %v3134, %v3660
      %v3731 = vmul.f32 %v3149, %v3662
      %v3732 = vmul.f32 %v3164, %v3664
      %v3733 = vmul.f32 %v3179, %v3666
      %v3734 = vmul.f32 %v3194, %v3668
      %v3735 = vmul.f32 %v3209, %v3670
      %v3736 = vmul.f32 %v3224, %v3672
      %v3737 = vadd.f32 %v3705, %v3545
      %v3738 = vadd.f32 %v3706, %v3546
      %v3739 = vadd.f32 %v3707, %v3547
      %v3740 = vadd.f32 %v3708, %v3548
      %v3741 = vadd.f32 %v3709, %v3549
      %v3742 = vadd.f32 %v3710, %v3550
      %v3743 = vadd.f32 %v3711, %v3551
      %v3744 = vadd.f32 %v3712, %v3552
      %v3745 = vadd.f32 %v3713, %v3553
      %v3746 = vadd.f32 %v3714, %v3554
      %v3747 = vadd.f32 %v3715, %v3555
      %v3748 = vadd.f32 %v3716, %v3556
      %v3749 = vadd.f32 %v3717, %v3557
      %v3750 = vadd.f32 %v3718, %v3558
      %v3751 = vadd.f32 %v3719, %v3559
      %v3752 = vadd.f32 %v3720, %v3560
      %v3753 = vadd.f32 %v3721, %v3561
      %v3754 = vadd.f32 %v3722, %v3562
      %v3755 = vadd.f32 %v3723, %v3563
      %v3756 = vadd.f32 %v3724, %v3564
      %v3757 = vadd.f32 %v3725, %v3565
      %v3758 = vadd.f32 %v3726, %v3566
      %v3759 = vadd.f32 %v3727, %v3567
      %v3760 = vadd.f32 %v3728, %v3568
      %v3761 = vadd.f32 %v3729, %v3569
      %v3762 = vadd.f32 %v3730, %v3570
      %v3763 = vadd.f32 %v3731, %v3571
      %v3764 = vadd.f32 %v3732, %v3572
      %v3765 = vadd.f32 %v3733, %v3573
      %v3766 = vadd.f32 %v3734, %v3574
      %v3767 = vadd.f32 %v3735, %v3575
      %v3768 = vadd.f32 %v3736, %v3576
      %3801 = vrot.lane.b32.xlu0 %v3577, 120
      %v3802 = vpop.permute.xlu0 %3801
      %3803 = vrot.lane.b32.xlu0 %v3578, 120
      %v3804 = vpop.permute.xlu0 %3803
      %3805 = vrot.lane.b32.xlu0 %v3579, 120
      %v3806 = vpop.permute.xlu0 %3805
      %3807 = vrot.lane.b32.xlu0 %v3580, 120
      %v3808 = vpop.permute.xlu0 %3807
      %3809 = vrot.lane.b32.xlu0 %v3581, 120
      %v3810 = vpop.permute.xlu0 %3809
      %3811 = vrot.lane.b32.xlu0 %v3582, 120
      %v3812 = vpop.permute.xlu0 %3811
      %3813 = vrot.lane.b32.xlu0 %v3583, 120
      %v3814 = vpop.permute.xlu0 %3813
      %3815 = vrot.lane.b32.xlu0 %v3584, 120
      %v3816 = vpop.permute.xlu0 %3815
      %3817 = vrot.lane.b32.xlu0 %v3585, 120
      %v3818 = vpop.permute.xlu0 %3817
      %3819 = vrot.lane.b32.xlu0 %v3586, 120
      %v3820 = vpop.permute.xlu0 %3819
      %3821 = vrot.lane.b32.xlu0 %v3587, 120
      %v3822 = vpop.permute.xlu0 %3821
      %3823 = vrot.lane.b32.xlu0 %v3588, 120
      %v3824 = vpop.permute.xlu0 %3823
      %3825 = vrot.lane.b32.xlu0 %v3589, 120
      %v3826 = vpop.permute.xlu0 %3825
      %3827 = vrot.lane.b32.xlu0 %v3590, 120
      %v3828 = vpop.permute.xlu0 %3827
      %3829 = vrot.lane.b32.xlu0 %v3591, 120
      %v3830 = vpop.permute.xlu0 %3829
      %3831 = vrot.lane.b32.xlu0 %v3592, 120
      %v3832 = vpop.permute.xlu0 %3831
      %3833 = vrot.lane.b32.xlu0 %v3593, 120
      %v3834 = vpop.permute.xlu0 %3833
      %3835 = vrot.lane.b32.xlu0 %v3594, 120
      %v3836 = vpop.permute.xlu0 %3835
      %3837 = vrot.lane.b32.xlu0 %v3595, 120
      %v3838 = vpop.permute.xlu0 %3837
      %3839 = vrot.lane.b32.xlu0 %v3596, 120
      %v3840 = vpop.permute.xlu0 %3839
      %3841 = vrot.lane.b32.xlu0 %v3597, 120
      %v3842 = vpop.permute.xlu0 %3841
      %3843 = vrot.lane.b32.xlu0 %v3598, 120
      %v3844 = vpop.permute.xlu0 %3843
      %3845 = vrot.lane.b32.xlu0 %v3599, 120
      %v3846 = vpop.permute.xlu0 %3845
      %3847 = vrot.lane.b32.xlu0 %v3600, 120
      %v3848 = vpop.permute.xlu0 %3847
      %3849 = vrot.lane.b32.xlu0 %v3601, 120
      %v3850 = vpop.permute.xlu0 %3849
      %3851 = vrot.lane.b32.xlu0 %v3602, 120
      %v3852 = vpop.permute.xlu0 %3851
      %3853 = vrot.lane.b32.xlu0 %v3603, 120
      %v3854 = vpop.permute.xlu0 %3853
      %3855 = vrot.lane.b32.xlu0 %v3604, 120
      %v3856 = vpop.permute.xlu0 %3855
      %3857 = vrot.lane.b32.xlu0 %v3605, 120
      %v3858 = vpop.permute.xlu0 %3857
      %3859 = vrot.lane.b32.xlu0 %v3606, 120
      %v3860 = vpop.permute.xlu0 %3859
      %3861 = vrot.lane.b32.xlu0 %v3607, 120
      %v3862 = vpop.permute.xlu0 %3861
      %3863 = vrot.lane.b32.xlu0 %v3608, 120
      %v3864 = vpop.permute.xlu0 %3863
      %vm3897 = vcmask 64512
      %3898 = vst.msk [vmem:[%s392] sm:$0xff] %vm3897, %v3802
      %3899 = vst.msk [vmem:[%s392 + $0x8] sm:$0xff] %vm3897, %v3804
      %3900 = vst.msk [vmem:[%s392 + $0x10] sm:$0xff] %vm3897, %v3806
      %3901 = vst.msk [vmem:[%s392 + $0x18] sm:$0xff] %vm3897, %v3808
      %3902 = vst.msk [vmem:[%s392 + $0x20] sm:$0xff] %vm3897, %v3810
      %3903 = vst.msk [vmem:[%s392 + $0x28] sm:$0xff] %vm3897, %v3812
      %3904 = vst.msk [vmem:[%s392 + $0x30] sm:$0xff] %vm3897, %v3814
      %3905 = vst.msk [vmem:[%s392 + $0x38] sm:$0xff] %vm3897, %v3816
      %3906 = vst.msk [vmem:[%s392 + $0x40] sm:$0xff] %vm3897, %v3818
      %3907 = vst.msk [vmem:[%s392 + $0x48] sm:$0xff] %vm3897, %v3820
      %3908 = vst.msk [vmem:[%s392 + $0x50] sm:$0xff] %vm3897, %v3822
      %3909 = vst.msk [vmem:[%s392 + $0x58] sm:$0xff] %vm3897, %v3824
      %3910 = vst.msk [vmem:[%s392 + $0x60] sm:$0xff] %vm3897, %v3826
      %3911 = vst.msk [vmem:[%s392 + $0x68] sm:$0xff] %vm3897, %v3828
      %3912 = vst.msk [vmem:[%s392 + $0x70] sm:$0xff] %vm3897, %v3830
      %3913 = vst.msk [vmem:[%s392 + $0x78] sm:$0xff] %vm3897, %v3832
      %3914 = vst.msk [vmem:[%s392 + $0x80] sm:$0xff] %vm3897, %v3834
      %3915 = vst.msk [vmem:[%s392 + $0x88] sm:$0xff] %vm3897, %v3836
      %3916 = vst.msk [vmem:[%s392 + $0x90] sm:$0xff] %vm3897, %v3838
      %3917 = vst.msk [vmem:[%s392 + $0x98] sm:$0xff] %vm3897, %v3840
      %3918 = vst.msk [vmem:[%s392 + $0xa0] sm:$0xff] %vm3897, %v3842
      %3919 = vst.msk [vmem:[%s392 + $0xa8] sm:$0xff] %vm3897, %v3844
      %3920 = vst.msk [vmem:[%s392 + $0xb0] sm:$0xff] %vm3897, %v3846
      %3921 = vst.msk [vmem:[%s392 + $0xb8] sm:$0xff] %vm3897, %v3848
      %3922 = vst.msk [vmem:[%s392 + $0xc0] sm:$0xff] %vm3897, %v3850
      %3923 = vst.msk [vmem:[%s392 + $0xc8] sm:$0xff] %vm3897, %v3852
      %3924 = vst.msk [vmem:[%s392 + $0xd0] sm:$0xff] %vm3897, %v3854
      %3925 = vst.msk [vmem:[%s392 + $0xd8] sm:$0xff] %vm3897, %v3856
      %3926 = vst.msk [vmem:[%s392 + $0xe0] sm:$0xff] %vm3897, %v3858
      %3927 = vst.msk [vmem:[%s392 + $0xe8] sm:$0xff] %vm3897, %v3860
      %3928 = vst.msk [vmem:[%s392 + $0xf0] sm:$0xff] %vm3897, %v3862
      %3929 = vst.msk [vmem:[%s392 + $0xf8] sm:$0xff] %vm3897, %v3864
      %3962 = vrot.lane.b32.xlu0 %v3737, 104
      %v3963 = vpop.permute.xlu0 %3962
      %3964 = vrot.lane.b32.xlu0 %v3738, 104
      %v3965 = vpop.permute.xlu0 %3964
      %3966 = vrot.lane.b32.xlu0 %v3739, 104
      %v3967 = vpop.permute.xlu0 %3966
      %3968 = vrot.lane.b32.xlu0 %v3740, 104
      %v3969 = vpop.permute.xlu0 %3968
      %3970 = vrot.lane.b32.xlu0 %v3741, 104
      %v3971 = vpop.permute.xlu0 %3970
      %3972 = vrot.lane.b32.xlu0 %v3742, 104
      %v3973 = vpop.permute.xlu0 %3972
      %3974 = vrot.lane.b32.xlu0 %v3743, 104
      %v3975 = vpop.permute.xlu0 %3974
      %3976 = vrot.lane.b32.xlu0 %v3744, 104
      %v3977 = vpop.permute.xlu0 %3976
      %3978 = vrot.lane.b32.xlu0 %v3745, 104
      %v3979 = vpop.permute.xlu0 %3978
      %3980 = vrot.lane.b32.xlu0 %v3746, 104
      %v3981 = vpop.permute.xlu0 %3980
      %3982 = vrot.lane.b32.xlu0 %v3747, 104
      %v3983 = vpop.permute.xlu0 %3982
      %3984 = vrot.lane.b32.xlu0 %v3748, 104
      %v3985 = vpop.permute.xlu0 %3984
      %3986 = vrot.lane.b32.xlu0 %v3749, 104
      %v3987 = vpop.permute.xlu0 %3986
      %3988 = vrot.lane.b32.xlu0 %v3750, 104
      %v3989 = vpop.permute.xlu0 %3988
      %3990 = vrot.lane.b32.xlu0 %v3751, 104
      %v3991 = vpop.permute.xlu0 %3990
      %3992 = vrot.lane.b32.xlu0 %v3752, 104
      %v3993 = vpop.permute.xlu0 %3992
      %3994 = vrot.lane.b32.xlu0 %v3753, 104
      %v3995 = vpop.permute.xlu0 %3994
      %3996 = vrot.lane.b32.xlu0 %v3754, 104
      %v3997 = vpop.permute.xlu0 %3996
      %3998 = vrot.lane.b32.xlu0 %v3755, 104
      %v3999 = vpop.permute.xlu0 %3998
      %4000 = vrot.lane.b32.xlu0 %v3756, 104
      %v4001 = vpop.permute.xlu0 %4000
      %4002 = vrot.lane.b32.xlu0 %v3757, 104
      %v4003 = vpop.permute.xlu0 %4002
      %4004 = vrot.lane.b32.xlu0 %v3758, 104
      %v4005 = vpop.permute.xlu0 %4004
      %4006 = vrot.lane.b32.xlu0 %v3759, 104
      %v4007 = vpop.permute.xlu0 %4006
      %4008 = vrot.lane.b32.xlu0 %v3760, 104
      %v4009 = vpop.permute.xlu0 %4008
      %4010 = vrot.lane.b32.xlu0 %v3761, 104
      %v4011 = vpop.permute.xlu0 %4010
      %4012 = vrot.lane.b32.xlu0 %v3762, 104
      %v4013 = vpop.permute.xlu0 %4012
      %4014 = vrot.lane.b32.xlu0 %v3763, 104
      %v4015 = vpop.permute.xlu0 %4014
      %4016 = vrot.lane.b32.xlu0 %v3764, 104
      %v4017 = vpop.permute.xlu0 %4016
      %4018 = vrot.lane.b32.xlu0 %v3765, 104
      %v4019 = vpop.permute.xlu0 %4018
      %4020 = vrot.lane.b32.xlu0 %v3766, 104
      %v4021 = vpop.permute.xlu0 %4020
      %4022 = vrot.lane.b32.xlu0 %v3767, 104
      %v4023 = vpop.permute.xlu0 %4022
      %4024 = vrot.lane.b32.xlu0 %v3768, 104
      %v4025 = vpop.permute.xlu0 %4024
      %4058 = vst.msk [vmem:[%s397] sm:$0xff] %vm3897, %v3963
      %4059 = vst.msk [vmem:[%s397 + $0x8] sm:$0xff] %vm3897, %v3965
      %4060 = vst.msk [vmem:[%s397 + $0x10] sm:$0xff] %vm3897, %v3967
      %4061 = vst.msk [vmem:[%s397 + $0x18] sm:$0xff] %vm3897, %v3969
      %4062 = vst.msk [vmem:[%s397 + $0x20] sm:$0xff] %vm3897, %v3971
      %4063 = vst.msk [vmem:[%s397 + $0x28] sm:$0xff] %vm3897, %v3973
      %4064 = vst.msk [vmem:[%s397 + $0x30] sm:$0xff] %vm3897, %v3975
      %4065 = vst.msk [vmem:[%s397 + $0x38] sm:$0xff] %vm3897, %v3977
      %4066 = vst.msk [vmem:[%s397 + $0x40] sm:$0xff] %vm3897, %v3979
      %4067 = vst.msk [vmem:[%s397 + $0x48] sm:$0xff] %vm3897, %v3981
      %4068 = vst.msk [vmem:[%s397 + $0x50] sm:$0xff] %vm3897, %v3983
      %4069 = vst.msk [vmem:[%s397 + $0x58] sm:$0xff] %vm3897, %v3985
      %4070 = vst.msk [vmem:[%s397 + $0x60] sm:$0xff] %vm3897, %v3987
      %4071 = vst.msk [vmem:[%s397 + $0x68] sm:$0xff] %vm3897, %v3989
      %4072 = vst.msk [vmem:[%s397 + $0x70] sm:$0xff] %vm3897, %v3991
      %4073 = vst.msk [vmem:[%s397 + $0x78] sm:$0xff] %vm3897, %v3993
      %4074 = vst.msk [vmem:[%s397 + $0x80] sm:$0xff] %vm3897, %v3995
      %4075 = vst.msk [vmem:[%s397 + $0x88] sm:$0xff] %vm3897, %v3997
      %4076 = vst.msk [vmem:[%s397 + $0x90] sm:$0xff] %vm3897, %v3999
      %4077 = vst.msk [vmem:[%s397 + $0x98] sm:$0xff] %vm3897, %v4001
      %4078 = vst.msk [vmem:[%s397 + $0xa0] sm:$0xff] %vm3897, %v4003
      %4079 = vst.msk [vmem:[%s397 + $0xa8] sm:$0xff] %vm3897, %v4005
      %4080 = vst.msk [vmem:[%s397 + $0xb0] sm:$0xff] %vm3897, %v4007
      %4081 = vst.msk [vmem:[%s397 + $0xb8] sm:$0xff] %vm3897, %v4009
      %4082 = vst.msk [vmem:[%s397 + $0xc0] sm:$0xff] %vm3897, %v4011
      %4083 = vst.msk [vmem:[%s397 + $0xc8] sm:$0xff] %vm3897, %v4013
      %4084 = vst.msk [vmem:[%s397 + $0xd0] sm:$0xff] %vm3897, %v4015
      %4085 = vst.msk [vmem:[%s397 + $0xd8] sm:$0xff] %vm3897, %v4017
      %4086 = vst.msk [vmem:[%s397 + $0xe0] sm:$0xff] %vm3897, %v4019
      %4087 = vst.msk [vmem:[%s397 + $0xe8] sm:$0xff] %vm3897, %v4021
      %4088 = vst.msk [vmem:[%s397 + $0xf0] sm:$0xff] %vm3897, %v4023
      %4089 = vst.msk [vmem:[%s397 + $0xf8] sm:$0xff] %vm3897, %v4025
      %vm4090 = vcmask 130048
      %4091 = vst.msk [vmem:[#allocation3] sm:$0xff] %vm4090, 0.0
      %4092 = vst.msk [vmem:[#allocation3 + $0x8] sm:$0xff] %vm4090, 0.0
      %vm4093 = vcmask 123904
      %4094 = vst.msk [vmem:[#allocation3 + $0x10] sm:$0x3] %vm4093, 0.0
      %4095 = vst.msk [vmem:[#allocation3 + $0x18] sm:$0xff] %vm4090, 0.0
      %4096 = vst.msk [vmem:[#allocation3 + $0x20] sm:$0xff] %vm4090, 0.0
      %4097 = vst.msk [vmem:[#allocation3 + $0x28] sm:$0x3] %vm4093, 0.0
      %4098 = vst.msk [vmem:[#allocation3 + $0x30] sm:$0xff] %vm4090, 0.0
      %4099 = vst.msk [vmem:[#allocation3 + $0x38] sm:$0xff] %vm4090, 0.0
      %4100 = vst.msk [vmem:[#allocation3 + $0x40] sm:$0x3] %vm4093, 0.0
      %4101 = vst.msk [vmem:[#allocation3 + $0x48] sm:$0xff] %vm4090, 0.0
      %4102 = vst.msk [vmem:[#allocation3 + $0x50] sm:$0xff] %vm4090, 0.0
      %4103 = vst.msk [vmem:[#allocation3 + $0x58] sm:$0x3] %vm4093, 0.0
      %4104 = vst.msk [vmem:[#allocation3 + $0x60] sm:$0xff] %vm4090, 0.0
      %4105 = vst.msk [vmem:[#allocation3 + $0x68] sm:$0xff] %vm4090, 0.0
      %4106 = vst.msk [vmem:[#allocation3 + $0x70] sm:$0x3] %vm4093, 0.0
      %4107 = vst.msk [vmem:[#allocation3 + $0x78] sm:$0xff] %vm4090, 0.0
      %4108 = vst.msk [vmem:[#allocation3 + $0x80] sm:$0xff] %vm4090, 0.0
      %4109 = vst.msk [vmem:[#allocation3 + $0x88] sm:$0x3] %vm4093, 0.0
      %4110 = vst.msk [vmem:[#allocation3 + $0x90] sm:$0xff] %vm4090, 0.0
      %4111 = vst.msk [vmem:[#allocation3 + $0x98] sm:$0xff] %vm4090, 0.0
      %4112 = vst.msk [vmem:[#allocation3 + $0xa0] sm:$0x3] %vm4093, 0.0
      %4113 = vst.msk [vmem:[#allocation3 + $0xa8] sm:$0xff] %vm4090, 0.0
      %4114 = vst.msk [vmem:[#allocation3 + $0xb0] sm:$0xff] %vm4090, 0.0
      %4115 = vst.msk [vmem:[#allocation3 + $0xb8] sm:$0x3] %vm4093, 0.0
      %4116 = vst.msk [vmem:[#allocation3 + $0xc0] sm:$0xff] %vm4090, 0.0
      %4117 = vst.msk [vmem:[#allocation3 + $0xc8] sm:$0xff] %vm4090, 0.0
      %4118 = vst.msk [vmem:[#allocation3 + $0xd0] sm:$0x3] %vm4093, 0.0
      %4119 = vst.msk [vmem:[#allocation3 + $0xd8] sm:$0xff] %vm4090, 0.0
      %4120 = vst.msk [vmem:[#allocation3 + $0xe0] sm:$0xff] %vm4090, 0.0
      %4121 = vst.msk [vmem:[#allocation3 + $0xe8] sm:$0x3] %vm4093, 0.0
      %4122 = vst.msk [vmem:[#allocation3 + $0xf0] sm:$0xff] %vm4090, 0.0
      %4123 = vst.msk [vmem:[#allocation3 + $0xf8] sm:$0xff] %vm4090, 0.0
      %4124 = vst.msk [vmem:[#allocation3 + $0x100] sm:$0x3] %vm4093, 0.0
      %4125 = vst.msk [vmem:[#allocation3 + $0x108] sm:$0xff] %vm4090, 0.0
      %4126 = vst.msk [vmem:[#allocation3 + $0x110] sm:$0xff] %vm4090, 0.0
      %4127 = vst.msk [vmem:[#allocation3 + $0x118] sm:$0x3] %vm4093, 0.0
      %4128 = vst.msk [vmem:[#allocation3 + $0x120] sm:$0xff] %vm4090, 0.0
      %4129 = vst.msk [vmem:[#allocation3 + $0x128] sm:$0xff] %vm4090, 0.0
      %4130 = vst.msk [vmem:[#allocation3 + $0x130] sm:$0x3] %vm4093, 0.0
      %4131 = vst.msk [vmem:[#allocation3 + $0x138] sm:$0xff] %vm4090, 0.0
      %4132 = vst.msk [vmem:[#allocation3 + $0x140] sm:$0xff] %vm4090, 0.0
      %4133 = vst.msk [vmem:[#allocation3 + $0x148] sm:$0x3] %vm4093, 0.0
      %4134 = vst.msk [vmem:[#allocation3 + $0x150] sm:$0xff] %vm4090, 0.0
      %4135 = vst.msk [vmem:[#allocation3 + $0x158] sm:$0xff] %vm4090, 0.0
      %4136 = vst.msk [vmem:[#allocation3 + $0x160] sm:$0x3] %vm4093, 0.0
      %4137 = vst.msk [vmem:[#allocation3 + $0x168] sm:$0xff] %vm4090, 0.0
      %4138 = vst.msk [vmem:[#allocation3 + $0x170] sm:$0xff] %vm4090, 0.0
      %4139 = vst.msk [vmem:[#allocation3 + $0x178] sm:$0x3] %vm4093, 0.0
      %4140 = vst.msk [vmem:[#allocation3 + $0x180] sm:$0xff] %vm4090, 0.0
      %4141 = vst.msk [vmem:[#allocation3 + $0x188] sm:$0xff] %vm4090, 0.0
      %4142 = vst.msk [vmem:[#allocation3 + $0x190] sm:$0x3] %vm4093, 0.0
      %4143 = vst.msk [vmem:[#allocation3 + $0x198] sm:$0xff] %vm4090, 0.0
      %4144 = vst.msk [vmem:[#allocation3 + $0x1a0] sm:$0xff] %vm4090, 0.0
      %4145 = vst.msk [vmem:[#allocation3 + $0x1a8] sm:$0x3] %vm4093, 0.0
      %4146 = vrot.lane.b32.xlu0 %v3737, 112
      %v4147 = vpop.permute.xlu0 %4146
      %4148 = vrot.lane.b32.xlu0 %v3738, 112
      %v4149 = vpop.permute.xlu0 %4148
      %4150 = vrot.lane.b32.xlu0 %v3739, 112
      %v4151 = vpop.permute.xlu0 %4150
      %4152 = vrot.lane.b32.xlu0 %v3740, 112
      %v4153 = vpop.permute.xlu0 %4152
      %4154 = vrot.lane.b32.xlu0 %v3741, 112
      %v4155 = vpop.permute.xlu0 %4154
      %4156 = vrot.lane.b32.xlu0 %v3742, 112
      %v4157 = vpop.permute.xlu0 %4156
      %4158 = vrot.lane.b32.xlu0 %v3743, 112
      %v4159 = vpop.permute.xlu0 %4158
      %4160 = vrot.lane.b32.xlu0 %v3744, 112
      %v4161 = vpop.permute.xlu0 %4160
      %4162 = vrot.lane.b32.xlu0 %v3745, 112
      %v4163 = vpop.permute.xlu0 %4162
      %4164 = vrot.lane.b32.xlu0 %v3746, 112
      %v4165 = vpop.permute.xlu0 %4164
      %4166 = vrot.lane.b32.xlu0 %v3747, 112
      %v4167 = vpop.permute.xlu0 %4166
      %4168 = vrot.lane.b32.xlu0 %v3748, 112
      %v4169 = vpop.permute.xlu0 %4168
      %4170 = vrot.lane.b32.xlu0 %v3749, 112
      %v4171 = vpop.permute.xlu0 %4170
      %4172 = vrot.lane.b32.xlu0 %v3750, 112
      %v4173 = vpop.permute.xlu0 %4172
      %4174 = vrot.lane.b32.xlu0 %v3751, 112
      %v4175 = vpop.permute.xlu0 %4174
      %4176 = vrot.lane.b32.xlu0 %v3752, 112
      %v4177 = vpop.permute.xlu0 %4176
      %4178 = vrot.lane.b32.xlu0 %v3753, 112
      %v4179 = vpop.permute.xlu0 %4178
      %4180 = vrot.lane.b32.xlu0 %v3754, 112
      %v4181 = vpop.permute.xlu0 %4180
      %4182 = vrot.lane.b32.xlu0 %v3755, 112
      %v4183 = vpop.permute.xlu0 %4182
      %4184 = vrot.lane.b32.xlu0 %v3756, 112
      %v4185 = vpop.permute.xlu0 %4184
      %4186 = vrot.lane.b32.xlu0 %v3757, 112
      %v4187 = vpop.permute.xlu0 %4186
      %4188 = vrot.lane.b32.xlu0 %v3758, 112
      %v4189 = vpop.permute.xlu0 %4188
      %4190 = vrot.lane.b32.xlu0 %v3759, 112
      %v4191 = vpop.permute.xlu0 %4190
      %4192 = vrot.lane.b32.xlu0 %v3760, 112
      %v4193 = vpop.permute.xlu0 %4192
      %4194 = vrot.lane.b32.xlu0 %v3761, 112
      %v4195 = vpop.permute.xlu0 %4194
      %4196 = vrot.lane.b32.xlu0 %v3762, 112
      %v4197 = vpop.permute.xlu0 %4196
      %4198 = vrot.lane.b32.xlu0 %v3763, 112
      %v4199 = vpop.permute.xlu0 %4198
      %4200 = vrot.lane.b32.xlu0 %v3764, 112
      %v4201 = vpop.permute.xlu0 %4200
      %4202 = vrot.lane.b32.xlu0 %v3765, 112
      %v4203 = vpop.permute.xlu0 %4202
      %4204 = vrot.lane.b32.xlu0 %v3766, 112
      %v4205 = vpop.permute.xlu0 %4204
      %4206 = vrot.lane.b32.xlu0 %v3767, 112
      %v4207 = vpop.permute.xlu0 %4206
      %4208 = vrot.lane.b32.xlu0 %v3768, 112
      %v4209 = vpop.permute.xlu0 %4208
      %v4242 = vsel %vm3897, %v3802, %v4147
      %v4243 = vsel %vm3897, %v3804, %v4149
      %v4244 = vsel %vm3897, %v3806, %v4151
      %v4245 = vsel %vm3897, %v3808, %v4153
      %v4246 = vsel %vm3897, %v3810, %v4155
      %v4247 = vsel %vm3897, %v3812, %v4157
      %v4248 = vsel %vm3897, %v3814, %v4159
      %v4249 = vsel %vm3897, %v3816, %v4161
      %v4250 = vsel %vm3897, %v3818, %v4163
      %v4251 = vsel %vm3897, %v3820, %v4165
      %v4252 = vsel %vm3897, %v3822, %v4167
      %v4253 = vsel %vm3897, %v3824, %v4169
      %v4254 = vsel %vm3897, %v3826, %v4171
      %v4255 = vsel %vm3897, %v3828, %v4173
      %v4256 = vsel %vm3897, %v3830, %v4175
      %v4257 = vsel %vm3897, %v3832, %v4177
      %v4258 = vsel %vm3897, %v3834, %v4179
      %v4259 = vsel %vm3897, %v3836, %v4181
      %v4260 = vsel %vm3897, %v3838, %v4183
      %v4261 = vsel %vm3897, %v3840, %v4185
      %v4262 = vsel %vm3897, %v3842, %v4187
      %v4263 = vsel %vm3897, %v3844, %v4189
      %v4264 = vsel %vm3897, %v3846, %v4191
      %v4265 = vsel %vm3897, %v3848, %v4193
      %v4266 = vsel %vm3897, %v3850, %v4195
      %v4267 = vsel %vm3897, %v3852, %v4197
      %v4268 = vsel %vm3897, %v3854, %v4199
      %v4269 = vsel %vm3897, %v3856, %v4201
      %v4270 = vsel %vm3897, %v3858, %v4203
      %v4271 = vsel %vm3897, %v3860, %v4205
      %v4272 = vsel %vm3897, %v3862, %v4207
      %v4273 = vsel %vm3897, %v3864, %v4209
      %s4274 = scalar_lea.vmem [#allocation3], 24
      %4275 = vst.msk [vmem:[%s4274 + $0x1] sm:$0xff] %vm4090, %v4242
      %4276 = vst.msk [vmem:[%s4274 + $0x9] sm:$0xff] %vm4090, %v4243
      %4277 = vst.msk [vmem:[%s4274 + $0x19] sm:$0xff] %vm4090, %v4244
      %4278 = vst.msk [vmem:[%s4274 + $0x21] sm:$0xff] %vm4090, %v4245
      %4279 = vst.msk [vmem:[%s4274 + $0x31] sm:$0xff] %vm4090, %v4246
      %4280 = vst.msk [vmem:[%s4274 + $0x39] sm:$0xff] %vm4090, %v4247
      %4281 = vst.msk [vmem:[%s4274 + $0x49] sm:$0xff] %vm4090, %v4248
      %4282 = vst.msk [vmem:[%s4274 + $0x51] sm:$0xff] %vm4090, %v4249
      %4283 = vst.msk [vmem:[%s4274 + $0x61] sm:$0xff] %vm4090, %v4250
      %4284 = vst.msk [vmem:[%s4274 + $0x69] sm:$0xff] %vm4090, %v4251
      %4285 = vst.msk [vmem:[%s4274 + $0x79] sm:$0xff] %vm4090, %v4252
      %4286 = vst.msk [vmem:[%s4274 + $0x81] sm:$0xff] %vm4090, %v4253
      %4287 = vst.msk [vmem:[%s4274 + $0x91] sm:$0xff] %vm4090, %v4254
      %4288 = vst.msk [vmem:[%s4274 + $0x99] sm:$0xff] %vm4090, %v4255
      %4289 = vst.msk [vmem:[%s4274 + $0xa9] sm:$0xff] %vm4090, %v4256
      %4290 = vst.msk [vmem:[%s4274 + $0xb1] sm:$0xff] %vm4090, %v4257
      %4291 = vst.msk [vmem:[%s4274 + $0xc1] sm:$0xff] %vm4090, %v4258
      %4292 = vst.msk [vmem:[%s4274 + $0xc9] sm:$0xff] %vm4090, %v4259
      %4293 = vst.msk [vmem:[%s4274 + $0xd9] sm:$0xff] %vm4090, %v4260
      %4294 = vst.msk [vmem:[%s4274 + $0xe1] sm:$0xff] %vm4090, %v4261
      %4295 = vst.msk [vmem:[%s4274 + $0xf1] sm:$0xff] %vm4090, %v4262
      %4296 = vst.msk [vmem:[%s4274 + $0xf9] sm:$0xff] %vm4090, %v4263
      %4297 = vst.msk [vmem:[%s4274 + $0x109] sm:$0xff] %vm4090, %v4264
      %4298 = vst.msk [vmem:[%s4274 + $0x111] sm:$0xff] %vm4090, %v4265
      %4299 = vst.msk [vmem:[%s4274 + $0x121] sm:$0xff] %vm4090, %v4266
      %4300 = vst.msk [vmem:[%s4274 + $0x129] sm:$0xff] %vm4090, %v4267
      %4301 = vst.msk [vmem:[%s4274 + $0x139] sm:$0xff] %vm4090, %v4268
      %4302 = vst.msk [vmem:[%s4274 + $0x141] sm:$0xff] %vm4090, %v4269
      %4303 = vst.msk [vmem:[%s4274 + $0x151] sm:$0xff] %vm4090, %v4270
      %4304 = vst.msk [vmem:[%s4274 + $0x159] sm:$0xff] %vm4090, %v4271
      %4305 = vst.msk [vmem:[%s4274 + $0x169] sm:$0xff] %vm4090, %v4272
      %4306 = vst.msk [vmem:[%s4274 + $0x171] sm:$0xff] %vm4090, %v4273
      %v4307 = vld [vmem:[#allocation3] sm:$0xff]
      %v4308 = vld [vmem:[#allocation3 + $0x8] sm:$0xff]
      %v4309 = vld [vmem:[#allocation3 + $0x10] sm:$0x3]
      %v4310 = vld [vmem:[#allocation3 + $0x18] sm:$0xff]
      %v4311 = vld [vmem:[#allocation3 + $0x20] sm:$0xff]
      %v4312 = vld [vmem:[#allocation3 + $0x28] sm:$0x3]
      %v4313 = vld [vmem:[#allocation3 + $0x30] sm:$0xff]
      %v4314 = vld [vmem:[#allocation3 + $0x38] sm:$0xff]
      %v4315 = vld [vmem:[#allocation3 + $0x40] sm:$0x3]
      %v4316 = vld [vmem:[#allocation3 + $0x48] sm:$0xff]
      %v4317 = vld [vmem:[#allocation3 + $0x50] sm:$0xff]
      %v4318 = vld [vmem:[#allocation3 + $0x58] sm:$0x3]
      %v4319 = vld [vmem:[#allocation3 + $0x60] sm:$0xff]
      %v4320 = vld [vmem:[#allocation3 + $0x68] sm:$0xff]
      %v4321 = vld [vmem:[#allocation3 + $0x70] sm:$0x3]
      %v4322 = vld [vmem:[#allocation3 + $0x78] sm:$0xff]
      %v4323 = vld [vmem:[#allocation3 + $0x80] sm:$0xff]
      %v4324 = vld [vmem:[#allocation3 + $0x88] sm:$0x3]
      %v4325 = vld [vmem:[#allocation3 + $0x90] sm:$0xff]
      %v4326 = vld [vmem:[#allocation3 + $0x98] sm:$0xff]
      %v4327 = vld [vmem:[#allocation3 + $0xa0] sm:$0x3]
      %v4328 = vld [vmem:[#allocation3 + $0xa8] sm:$0xff]
      %v4329 = vld [vmem:[#allocation3 + $0xb0] sm:$0xff]
      %v4330 = vld [vmem:[#allocation3 + $0xb8] sm:$0x3]
      %v4331 = vld [vmem:[#allocation3 + $0xc0] sm:$0xff]
      %v4332 = vld [vmem:[#allocation3 + $0xc8] sm:$0xff]
      %v4333 = vld [vmem:[#allocation3 + $0xd0] sm:$0x3]
      %v4334 = vld [vmem:[#allocation3 + $0xd8] sm:$0xff]
      %v4335 = vld [vmem:[#allocation3 + $0xe0] sm:$0xff]
      %v4336 = vld [vmem:[#allocation3 + $0xe8] sm:$0x3]
      %v4337 = vld [vmem:[#allocation3 + $0xf0] sm:$0xff]
      %v4338 = vld [vmem:[#allocation3 + $0xf8] sm:$0xff]
      %v4339 = vld [vmem:[#allocation3 + $0x100] sm:$0x3]
      %v4340 = vld [vmem:[#allocation3 + $0x108] sm:$0xff]
      %v4341 = vld [vmem:[#allocation3 + $0x110] sm:$0xff]
      %v4342 = vld [vmem:[#allocation3 + $0x118] sm:$0x3]
      %v4343 = vld [vmem:[#allocation3 + $0x120] sm:$0xff]
      %v4344 = vld [vmem:[#allocation3 + $0x128] sm:$0xff]
      %v4345 = vld [vmem:[#allocation3 + $0x130] sm:$0x3]
      %v4346 = vld [vmem:[#allocation3 + $0x138] sm:$0xff]
      %v4347 = vld [vmem:[#allocation3 + $0x140] sm:$0xff]
      %v4348 = vld [vmem:[#allocation3 + $0x148] sm:$0x3]
      %v4349 = vld [vmem:[#allocation3 + $0x150] sm:$0xff]
      %v4350 = vld [vmem:[#allocation3 + $0x158] sm:$0xff]
      %v4351 = vld [vmem:[#allocation3 + $0x160] sm:$0x3]
      %v4352 = vld [vmem:[#allocation3 + $0x168] sm:$0xff]
      %v4353 = vld [vmem:[#allocation3 + $0x170] sm:$0xff]
      %v4354 = vld [vmem:[#allocation3 + $0x178] sm:$0x3]
      %v4355 = vld [vmem:[#allocation3 + $0x180] sm:$0xff]
      %v4356 = vld [vmem:[#allocation3 + $0x188] sm:$0xff]
      %v4357 = vld [vmem:[#allocation3 + $0x190] sm:$0x3]
      %v4358 = vld [vmem:[#allocation3 + $0x198] sm:$0xff]
      %v4359 = vld [vmem:[#allocation3 + $0x1a0] sm:$0xff]
      %v4360 = vld [vmem:[#allocation3 + $0x1a8] sm:$0x3]
      %v4409 = vrot.slane %v4307, 1
      %v4410 = vrot.slane %v4308, 1
      %v4411 = vsel %vm1008, %v4409, %v4410
      %v4412 = vrot.slane %v4309, 1
      %v4413 = vsel %vm1008, %v4410, %v4412
      %v4414 = vrot.slane %v4310, 1
      %v4415 = vrot.slane %v4311, 1
      %v4416 = vsel %vm1008, %v4414, %v4415
      %v4417 = vrot.slane %v4312, 1
      %v4418 = vsel %vm1008, %v4415, %v4417
      %v4419 = vrot.slane %v4313, 1
      %v4420 = vrot.slane %v4314, 1
      %v4421 = vsel %vm1008, %v4419, %v4420
      %v4422 = vrot.slane %v4315, 1
      %v4423 = vsel %vm1008, %v4420, %v4422
      %v4424 = vrot.slane %v4316, 1
      %v4425 = vrot.slane %v4317, 1
      %v4426 = vsel %vm1008, %v4424, %v4425
      %v4427 = vrot.slane %v4318, 1
      %v4428 = vsel %vm1008, %v4425, %v4427
      %v4429 = vrot.slane %v4319, 1
      %v4430 = vrot.slane %v4320, 1
      %v4431 = vsel %vm1008, %v4429, %v4430
      %v4432 = vrot.slane %v4321, 1
      %v4433 = vsel %vm1008, %v4430, %v4432
      %v4434 = vrot.slane %v4322, 1
      %v4435 = vrot.slane %v4323, 1
      %v4436 = vsel %vm1008, %v4434, %v4435
      %v4437 = vrot.slane %v4324, 1
      %v4438 = vsel %vm1008, %v4435, %v4437
      %v4439 = vrot.slane %v4325, 1
      %v4440 = vrot.slane %v4326, 1
      %v4441 = vsel %vm1008, %v4439, %v4440
      %v4442 = vrot.slane %v4327, 1
      %v4443 = vsel %vm1008, %v4440, %v4442
      %v4444 = vrot.slane %v4328, 1
      %v4445 = vrot.slane %v4329, 1
      %v4446 = vsel %vm1008, %v4444, %v4445
      %v4447 = vrot.slane %v4330, 1
      %v4448 = vsel %vm1008, %v4445, %v4447
      %v4449 = vrot.slane %v4331, 1
      %v4450 = vrot.slane %v4332, 1
      %v4451 = vsel %vm1008, %v4449, %v4450
      %v4452 = vrot.slane %v4333, 1
      %v4453 = vsel %vm1008, %v4450, %v4452
      %v4454 = vrot.slane %v4334, 1
      %v4455 = vrot.slane %v4335, 1
      %v4456 = vsel %vm1008, %v4454, %v4455
      %v4457 = vrot.slane %v4336, 1
      %v4458 = vsel %vm1008, %v4455, %v4457
      %v4459 = vrot.slane %v4337, 1
      %v4460 = vrot.slane %v4338, 1
      %v4461 = vsel %vm1008, %v4459, %v4460
      %v4462 = vrot.slane %v4339, 1
      %v4463 = vsel %vm1008, %v4460, %v4462
      %v4464 = vrot.slane %v4340, 1
      %v4465 = vrot.slane %v4341, 1
      %v4466 = vsel %vm1008, %v4464, %v4465
      %v4467 = vrot.slane %v4342, 1
      %v4468 = vsel %vm1008, %v4465, %v4467
      %v4469 = vrot.slane %v4343, 1
      %v4470 = vrot.slane %v4344, 1
      %v4471 = vsel %vm1008, %v4469, %v4470
      %v4472 = vrot.slane %v4345, 1
      %v4473 = vsel %vm1008, %v4470, %v4472
      %v4474 = vrot.slane %v4346, 1
      %v4475 = vrot.slane %v4347, 1
      %v4476 = vsel %vm1008, %v4474, %v4475
      %v4477 = vrot.slane %v4348, 1
      %v4478 = vsel %vm1008, %v4475, %v4477
      %v4479 = vrot.slane %v4349, 1
      %v4480 = vrot.slane %v4350, 1
      %v4481 = vsel %vm1008, %v4479, %v4480
      %v4482 = vrot.slane %v4351, 1
      %v4483 = vsel %vm1008, %v4480, %v4482
      %v4484 = vrot.slane %v4352, 1
      %v4485 = vrot.slane %v4353, 1
      %v4486 = vsel %vm1008, %v4484, %v4485
      %v4487 = vrot.slane %v4354, 1
      %v4488 = vsel %vm1008, %v4485, %v4487
      %v4489 = vrot.slane %v4307, 2
      %v4490 = vrot.slane %v4308, 2
      %v4491 = vsel %vm1089, %v4489, %v4490
      %v4492 = vrot.slane %v4309, 2
      %v4493 = vsel %vm1089, %v4490, %v4492
      %v4494 = vrot.slane %v4310, 2
      %v4495 = vrot.slane %v4311, 2
      %v4496 = vsel %vm1089, %v4494, %v4495
      %v4497 = vrot.slane %v4312, 2
      %v4498 = vsel %vm1089, %v4495, %v4497
      %v4499 = vrot.slane %v4313, 2
      %v4500 = vrot.slane %v4314, 2
      %v4501 = vsel %vm1089, %v4499, %v4500
      %v4502 = vrot.slane %v4315, 2
      %v4503 = vsel %vm1089, %v4500, %v4502
      %v4504 = vrot.slane %v4316, 2
      %v4505 = vrot.slane %v4317, 2
      %v4506 = vsel %vm1089, %v4504, %v4505
      %v4507 = vrot.slane %v4318, 2
      %v4508 = vsel %vm1089, %v4505, %v4507
      %v4509 = vrot.slane %v4319, 2
      %v4510 = vrot.slane %v4320, 2
      %v4511 = vsel %vm1089, %v4509, %v4510
      %v4512 = vrot.slane %v4321, 2
      %v4513 = vsel %vm1089, %v4510, %v4512
      %v4514 = vrot.slane %v4322, 2
      %v4515 = vrot.slane %v4323, 2
      %v4516 = vsel %vm1089, %v4514, %v4515
      %v4517 = vrot.slane %v4324, 2
      %v4518 = vsel %vm1089, %v4515, %v4517
      %v4519 = vrot.slane %v4325, 2
      %v4520 = vrot.slane %v4326, 2
      %v4521 = vsel %vm1089, %v4519, %v4520
      %v4522 = vrot.slane %v4327, 2
      %v4523 = vsel %vm1089, %v4520, %v4522
      %v4524 = vrot.slane %v4328, 2
      %v4525 = vrot.slane %v4329, 2
      %v4526 = vsel %vm1089, %v4524, %v4525
      %v4527 = vrot.slane %v4330, 2
      %v4528 = vsel %vm1089, %v4525, %v4527
      %v4529 = vrot.slane %v4331, 2
      %v4530 = vrot.slane %v4332, 2
      %v4531 = vsel %vm1089, %v4529, %v4530
      %v4532 = vrot.slane %v4333, 2
      %v4533 = vsel %vm1089, %v4530, %v4532
      %v4534 = vrot.slane %v4334, 2
      %v4535 = vrot.slane %v4335, 2
      %v4536 = vsel %vm1089, %v4534, %v4535
      %v4537 = vrot.slane %v4336, 2
      %v4538 = vsel %vm1089, %v4535, %v4537
      %v4539 = vrot.slane %v4337, 2
      %v4540 = vrot.slane %v4338, 2
      %v4541 = vsel %vm1089, %v4539, %v4540
      %v4542 = vrot.slane %v4339, 2
      %v4543 = vsel %vm1089, %v4540, %v4542
      %v4544 = vrot.slane %v4340, 2
      %v4545 = vrot.slane %v4341, 2
      %v4546 = vsel %vm1089, %v4544, %v4545
      %v4547 = vrot.slane %v4342, 2
      %v4548 = vsel %vm1089, %v4545, %v4547
      %v4549 = vrot.slane %v4343, 2
      %v4550 = vrot.slane %v4344, 2
      %v4551 = vsel %vm1089, %v4549, %v4550
      %v4552 = vrot.slane %v4345, 2
      %v4553 = vsel %vm1089, %v4550, %v4552
      %v4554 = vrot.slane %v4346, 2
      %v4555 = vrot.slane %v4347, 2
      %v4556 = vsel %vm1089, %v4554, %v4555
      %v4557 = vrot.slane %v4348, 2
      %v4558 = vsel %vm1089, %v4555, %v4557
      %v4559 = vrot.slane %v4349, 2
      %v4560 = vrot.slane %v4350, 2
      %v4561 = vsel %vm1089, %v4559, %v4560
      %v4562 = vrot.slane %v4351, 2
      %v4563 = vsel %vm1089, %v4560, %v4562
      %v4564 = vrot.slane %v4352, 2
      %v4565 = vrot.slane %v4353, 2
      %v4566 = vsel %vm1089, %v4564, %v4565
      %v4567 = vrot.slane %v4354, 2
      %v4568 = vsel %vm1089, %v4565, %v4567
      %v4572 = vrot.slane %v4355, 1
      %v4573 = vrot.slane %v4356, 1
      %v4574 = vsel %vm1008, %v4572, %v4573
      %v4575 = vrot.slane %v4357, 1
      %v4576 = vsel %vm1008, %v4573, %v4575
      %v4577 = vrot.slane %v4355, 2
      %v4578 = vrot.slane %v4356, 2
      %v4579 = vsel %vm1089, %v4577, %v4578
      %v4580 = vrot.slane %v4357, 2
      %v4581 = vsel %vm1089, %v4578, %v4580
      %v4585 = vrot.slane %v4358, 1
      %v4586 = vrot.slane %v4359, 1
      %v4587 = vsel %vm1008, %v4585, %v4586
      %v4588 = vrot.slane %v4360, 1
      %v4589 = vsel %vm1008, %v4586, %v4588
      %v4590 = vrot.slane %v4358, 2
      %v4591 = vrot.slane %v4359, 2
      %v4592 = vsel %vm1089, %v4590, %v4591
      %v4593 = vrot.slane %v4360, 2
      %v4594 = vsel %vm1089, %v4591, %v4593
      %4627 = vrot.lane.b32.xlu0 %v4411, 16
      %v4628 = vpop.permute.xlu0 %4627
      %4629 = vrot.lane.b32.xlu0 %v4413, 16
      %v4630 = vpop.permute.xlu0 %4629
      %4631 = vrot.lane.b32.xlu0 %v4416, 16
      %v4632 = vpop.permute.xlu0 %4631
      %4633 = vrot.lane.b32.xlu0 %v4418, 16
      %v4634 = vpop.permute.xlu0 %4633
      %4635 = vrot.lane.b32.xlu0 %v4421, 16
      %v4636 = vpop.permute.xlu0 %4635
      %4637 = vrot.lane.b32.xlu0 %v4423, 16
      %v4638 = vpop.permute.xlu0 %4637
      %4639 = vrot.lane.b32.xlu0 %v4426, 16
      %v4640 = vpop.permute.xlu0 %4639
      %4641 = vrot.lane.b32.xlu0 %v4428, 16
      %v4642 = vpop.permute.xlu0 %4641
      %4643 = vrot.lane.b32.xlu0 %v4431, 16
      %v4644 = vpop.permute.xlu0 %4643
      %4645 = vrot.lane.b32.xlu0 %v4433, 16
      %v4646 = vpop.permute.xlu0 %4645
      %4647 = vrot.lane.b32.xlu0 %v4436, 16
      %v4648 = vpop.permute.xlu0 %4647
      %4649 = vrot.lane.b32.xlu0 %v4438, 16
      %v4650 = vpop.permute.xlu0 %4649
      %4651 = vrot.lane.b32.xlu0 %v4441, 16
      %v4652 = vpop.permute.xlu0 %4651
      %4653 = vrot.lane.b32.xlu0 %v4443, 16
      %v4654 = vpop.permute.xlu0 %4653
      %4655 = vrot.lane.b32.xlu0 %v4446, 16
      %v4656 = vpop.permute.xlu0 %4655
      %4657 = vrot.lane.b32.xlu0 %v4448, 16
      %v4658 = vpop.permute.xlu0 %4657
      %4659 = vrot.lane.b32.xlu0 %v4451, 16
      %v4660 = vpop.permute.xlu0 %4659
      %4661 = vrot.lane.b32.xlu0 %v4453, 16
      %v4662 = vpop.permute.xlu0 %4661
      %4663 = vrot.lane.b32.xlu0 %v4456, 16
      %v4664 = vpop.permute.xlu0 %4663
      %4665 = vrot.lane.b32.xlu0 %v4458, 16
      %v4666 = vpop.permute.xlu0 %4665
      %4667 = vrot.lane.b32.xlu0 %v4461, 16
      %v4668 = vpop.permute.xlu0 %4667
      %4669 = vrot.lane.b32.xlu0 %v4463, 16
      %v4670 = vpop.permute.xlu0 %4669
      %4671 = vrot.lane.b32.xlu0 %v4466, 16
      %v4672 = vpop.permute.xlu0 %4671
      %4673 = vrot.lane.b32.xlu0 %v4468, 16
      %v4674 = vpop.permute.xlu0 %4673
      %4675 = vrot.lane.b32.xlu0 %v4471, 16
      %v4676 = vpop.permute.xlu0 %4675
      %4677 = vrot.lane.b32.xlu0 %v4473, 16
      %v4678 = vpop.permute.xlu0 %4677
      %4679 = vrot.lane.b32.xlu0 %v4476, 16
      %v4680 = vpop.permute.xlu0 %4679
      %4681 = vrot.lane.b32.xlu0 %v4478, 16
      %v4682 = vpop.permute.xlu0 %4681
      %4683 = vrot.lane.b32.xlu0 %v4481, 16
      %v4684 = vpop.permute.xlu0 %4683
      %4685 = vrot.lane.b32.xlu0 %v4483, 16
      %v4686 = vpop.permute.xlu0 %4685
      %4687 = vrot.lane.b32.xlu0 %v4486, 16
      %v4688 = vpop.permute.xlu0 %4687
      %4689 = vrot.lane.b32.xlu0 %v4488, 16
      %v4690 = vpop.permute.xlu0 %4689
      %4723 = vrot.lane.b32.xlu0 %v4491, 32
      %v4724 = vpop.permute.xlu0 %4723
      %4725 = vrot.lane.b32.xlu0 %v4493, 32
      %v4726 = vpop.permute.xlu0 %4725
      %4727 = vrot.lane.b32.xlu0 %v4496, 32
      %v4728 = vpop.permute.xlu0 %4727
      %4729 = vrot.lane.b32.xlu0 %v4498, 32
      %v4730 = vpop.permute.xlu0 %4729
      %4731 = vrot.lane.b32.xlu0 %v4501, 32
      %v4732 = vpop.permute.xlu0 %4731
      %4733 = vrot.lane.b32.xlu0 %v4503, 32
      %v4734 = vpop.permute.xlu0 %4733
      %4735 = vrot.lane.b32.xlu0 %v4506, 32
      %v4736 = vpop.permute.xlu0 %4735
      %4737 = vrot.lane.b32.xlu0 %v4508, 32
      %v4738 = vpop.permute.xlu0 %4737
      %4739 = vrot.lane.b32.xlu0 %v4511, 32
      %v4740 = vpop.permute.xlu0 %4739
      %4741 = vrot.lane.b32.xlu0 %v4513, 32
      %v4742 = vpop.permute.xlu0 %4741
      %4743 = vrot.lane.b32.xlu0 %v4516, 32
      %v4744 = vpop.permute.xlu0 %4743
      %4745 = vrot.lane.b32.xlu0 %v4518, 32
      %v4746 = vpop.permute.xlu0 %4745
      %4747 = vrot.lane.b32.xlu0 %v4521, 32
      %v4748 = vpop.permute.xlu0 %4747
      %4749 = vrot.lane.b32.xlu0 %v4523, 32
      %v4750 = vpop.permute.xlu0 %4749
      %4751 = vrot.lane.b32.xlu0 %v4526, 32
      %v4752 = vpop.permute.xlu0 %4751
      %4753 = vrot.lane.b32.xlu0 %v4528, 32
      %v4754 = vpop.permute.xlu0 %4753
      %4755 = vrot.lane.b32.xlu0 %v4531, 32
      %v4756 = vpop.permute.xlu0 %4755
      %4757 = vrot.lane.b32.xlu0 %v4533, 32
      %v4758 = vpop.permute.xlu0 %4757
      %4759 = vrot.lane.b32.xlu0 %v4536, 32
      %v4760 = vpop.permute.xlu0 %4759
      %4761 = vrot.lane.b32.xlu0 %v4538, 32
      %v4762 = vpop.permute.xlu0 %4761
      %4763 = vrot.lane.b32.xlu0 %v4541, 32
      %v4764 = vpop.permute.xlu0 %4763
      %4765 = vrot.lane.b32.xlu0 %v4543, 32
      %v4766 = vpop.permute.xlu0 %4765
      %4767 = vrot.lane.b32.xlu0 %v4546, 32
      %v4768 = vpop.permute.xlu0 %4767
      %4769 = vrot.lane.b32.xlu0 %v4548, 32
      %v4770 = vpop.permute.xlu0 %4769
      %4771 = vrot.lane.b32.xlu0 %v4551, 32
      %v4772 = vpop.permute.xlu0 %4771
      %4773 = vrot.lane.b32.xlu0 %v4553, 32
      %v4774 = vpop.permute.xlu0 %4773
      %4775 = vrot.lane.b32.xlu0 %v4556, 32
      %v4776 = vpop.permute.xlu0 %4775
      %4777 = vrot.lane.b32.xlu0 %v4558, 32
      %v4778 = vpop.permute.xlu0 %4777
      %4779 = vrot.lane.b32.xlu0 %v4561, 32
      %v4780 = vpop.permute.xlu0 %4779
      %4781 = vrot.lane.b32.xlu0 %v4563, 32
      %v4782 = vpop.permute.xlu0 %4781
      %4783 = vrot.lane.b32.xlu0 %v4566, 32
      %v4784 = vpop.permute.xlu0 %4783
      %4785 = vrot.lane.b32.xlu0 %v4568, 32
      %v4786 = vpop.permute.xlu0 %4785
      %4819 = vrot.lane.b32.xlu0 %v4310, 48
      %v4820 = vpop.permute.xlu0 %4819
      %4821 = vrot.lane.b32.xlu0 %v4311, 48
      %v4822 = vpop.permute.xlu0 %4821
      %4823 = vrot.lane.b32.xlu0 %v4313, 48
      %v4824 = vpop.permute.xlu0 %4823
      %4825 = vrot.lane.b32.xlu0 %v4314, 48
      %v4826 = vpop.permute.xlu0 %4825
      %4827 = vrot.lane.b32.xlu0 %v4316, 48
      %v4828 = vpop.permute.xlu0 %4827
      %4829 = vrot.lane.b32.xlu0 %v4317, 48
      %v4830 = vpop.permute.xlu0 %4829
      %4831 = vrot.lane.b32.xlu0 %v4319, 48
      %v4832 = vpop.permute.xlu0 %4831
      %4833 = vrot.lane.b32.xlu0 %v4320, 48
      %v4834 = vpop.permute.xlu0 %4833
      %4835 = vrot.lane.b32.xlu0 %v4322, 48
      %v4836 = vpop.permute.xlu0 %4835
      %4837 = vrot.lane.b32.xlu0 %v4323, 48
      %v4838 = vpop.permute.xlu0 %4837
      %4839 = vrot.lane.b32.xlu0 %v4325, 48
      %v4840 = vpop.permute.xlu0 %4839
      %4841 = vrot.lane.b32.xlu0 %v4326, 48
      %v4842 = vpop.permute.xlu0 %4841
      %4843 = vrot.lane.b32.xlu0 %v4328, 48
      %v4844 = vpop.permute.xlu0 %4843
      %4845 = vrot.lane.b32.xlu0 %v4329, 48
      %v4846 = vpop.permute.xlu0 %4845
      %4847 = vrot.lane.b32.xlu0 %v4331, 48
      %v4848 = vpop.permute.xlu0 %4847
      %4849 = vrot.lane.b32.xlu0 %v4332, 48
      %v4850 = vpop.permute.xlu0 %4849
      %4851 = vrot.lane.b32.xlu0 %v4334, 48
      %v4852 = vpop.permute.xlu0 %4851
      %4853 = vrot.lane.b32.xlu0 %v4335, 48
      %v4854 = vpop.permute.xlu0 %4853
      %4855 = vrot.lane.b32.xlu0 %v4337, 48
      %v4856 = vpop.permute.xlu0 %4855
      %4857 = vrot.lane.b32.xlu0 %v4338, 48
      %v4858 = vpop.permute.xlu0 %4857
      %4859 = vrot.lane.b32.xlu0 %v4340, 48
      %v4860 = vpop.permute.xlu0 %4859
      %4861 = vrot.lane.b32.xlu0 %v4341, 48
      %v4862 = vpop.permute.xlu0 %4861
      %4863 = vrot.lane.b32.xlu0 %v4343, 48
      %v4864 = vpop.permute.xlu0 %4863
      %4865 = vrot.lane.b32.xlu0 %v4344, 48
      %v4866 = vpop.permute.xlu0 %4865
      %4867 = vrot.lane.b32.xlu0 %v4346, 48
      %v4868 = vpop.permute.xlu0 %4867
      %4869 = vrot.lane.b32.xlu0 %v4347, 48
      %v4870 = vpop.permute.xlu0 %4869
      %4871 = vrot.lane.b32.xlu0 %v4349, 48
      %v4872 = vpop.permute.xlu0 %4871
      %4873 = vrot.lane.b32.xlu0 %v4350, 48
      %v4874 = vpop.permute.xlu0 %4873
      %4875 = vrot.lane.b32.xlu0 %v4352, 48
      %v4876 = vpop.permute.xlu0 %4875
      %4877 = vrot.lane.b32.xlu0 %v4353, 48
      %v4878 = vpop.permute.xlu0 %4877
      %4879 = vrot.lane.b32.xlu0 %v4355, 48
      %v4880 = vpop.permute.xlu0 %4879
      %4881 = vrot.lane.b32.xlu0 %v4356, 48
      %v4882 = vpop.permute.xlu0 %4881
      %4915 = vrot.lane.b32.xlu0 %v4416, 64
      %v4916 = vpop.permute.xlu0 %4915
      %4917 = vrot.lane.b32.xlu0 %v4418, 64
      %v4918 = vpop.permute.xlu0 %4917
      %4919 = vrot.lane.b32.xlu0 %v4421, 64
      %v4920 = vpop.permute.xlu0 %4919
      %4921 = vrot.lane.b32.xlu0 %v4423, 64
      %v4922 = vpop.permute.xlu0 %4921
      %4923 = vrot.lane.b32.xlu0 %v4426, 64
      %v4924 = vpop.permute.xlu0 %4923
      %4925 = vrot.lane.b32.xlu0 %v4428, 64
      %v4926 = vpop.permute.xlu0 %4925
      %4927 = vrot.lane.b32.xlu0 %v4431, 64
      %v4928 = vpop.permute.xlu0 %4927
      %4929 = vrot.lane.b32.xlu0 %v4433, 64
      %v4930 = vpop.permute.xlu0 %4929
      %4931 = vrot.lane.b32.xlu0 %v4436, 64
      %v4932 = vpop.permute.xlu0 %4931
      %4933 = vrot.lane.b32.xlu0 %v4438, 64
      %v4934 = vpop.permute.xlu0 %4933
      %4935 = vrot.lane.b32.xlu0 %v4441, 64
      %v4936 = vpop.permute.xlu0 %4935
      %4937 = vrot.lane.b32.xlu0 %v4443, 64
      %v4938 = vpop.permute.xlu0 %4937
      %4939 = vrot.lane.b32.xlu0 %v4446, 64
      %v4940 = vpop.permute.xlu0 %4939
      %4941 = vrot.lane.b32.xlu0 %v4448, 64
      %v4942 = vpop.permute.xlu0 %4941
      %4943 = vrot.lane.b32.xlu0 %v4451, 64
      %v4944 = vpop.permute.xlu0 %4943
      %4945 = vrot.lane.b32.xlu0 %v4453, 64
      %v4946 = vpop.permute.xlu0 %4945
      %4947 = vrot.lane.b32.xlu0 %v4456, 64
      %v4948 = vpop.permute.xlu0 %4947
      %4949 = vrot.lane.b32.xlu0 %v4458, 64
      %v4950 = vpop.permute.xlu0 %4949
      %4951 = vrot.lane.b32.xlu0 %v4461, 64
      %v4952 = vpop.permute.xlu0 %4951
      %4953 = vrot.lane.b32.xlu0 %v4463, 64
      %v4954 = vpop.permute.xlu0 %4953
      %4955 = vrot.lane.b32.xlu0 %v4466, 64
      %v4956 = vpop.permute.xlu0 %4955
      %4957 = vrot.lane.b32.xlu0 %v4468, 64
      %v4958 = vpop.permute.xlu0 %4957
      %4959 = vrot.lane.b32.xlu0 %v4471, 64
      %v4960 = vpop.permute.xlu0 %4959
      %4961 = vrot.lane.b32.xlu0 %v4473, 64
      %v4962 = vpop.permute.xlu0 %4961
      %4963 = vrot.lane.b32.xlu0 %v4476, 64
      %v4964 = vpop.permute.xlu0 %4963
      %4965 = vrot.lane.b32.xlu0 %v4478, 64
      %v4966 = vpop.permute.xlu0 %4965
      %4967 = vrot.lane.b32.xlu0 %v4481, 64
      %v4968 = vpop.permute.xlu0 %4967
      %4969 = vrot.lane.b32.xlu0 %v4483, 64
      %v4970 = vpop.permute.xlu0 %4969
      %4971 = vrot.lane.b32.xlu0 %v4486, 64
      %v4972 = vpop.permute.xlu0 %4971
      %4973 = vrot.lane.b32.xlu0 %v4488, 64
      %v4974 = vpop.permute.xlu0 %4973
      %4975 = vrot.lane.b32.xlu0 %v4574, 64
      %v4976 = vpop.permute.xlu0 %4975
      %4977 = vrot.lane.b32.xlu0 %v4576, 64
      %v4978 = vpop.permute.xlu0 %4977
      %5011 = vrot.lane.b32.xlu0 %v4496, 80
      %v5012 = vpop.permute.xlu0 %5011
      %5013 = vrot.lane.b32.xlu0 %v4498, 80
      %v5014 = vpop.permute.xlu0 %5013
      %5015 = vrot.lane.b32.xlu0 %v4501, 80
      %v5016 = vpop.permute.xlu0 %5015
      %5017 = vrot.lane.b32.xlu0 %v4503, 80
      %v5018 = vpop.permute.xlu0 %5017
      %5019 = vrot.lane.b32.xlu0 %v4506, 80
      %v5020 = vpop.permute.xlu0 %5019
      %5021 = vrot.lane.b32.xlu0 %v4508, 80
      %v5022 = vpop.permute.xlu0 %5021
      %5023 = vrot.lane.b32.xlu0 %v4511, 80
      %v5024 = vpop.permute.xlu0 %5023
      %5025 = vrot.lane.b32.xlu0 %v4513, 80
      %v5026 = vpop.permute.xlu0 %5025
      %5027 = vrot.lane.b32.xlu0 %v4516, 80
      %v5028 = vpop.permute.xlu0 %5027
      %5029 = vrot.lane.b32.xlu0 %v4518, 80
      %v5030 = vpop.permute.xlu0 %5029
      %5031 = vrot.lane.b32.xlu0 %v4521, 80
      %v5032 = vpop.permute.xlu0 %5031
      %5033 = vrot.lane.b32.xlu0 %v4523, 80
      %v5034 = vpop.permute.xlu0 %5033
      %5035 = vrot.lane.b32.xlu0 %v4526, 80
      %v5036 = vpop.permute.xlu0 %5035
      %5037 = vrot.lane.b32.xlu0 %v4528, 80
      %v5038 = vpop.permute.xlu0 %5037
      %5039 = vrot.lane.b32.xlu0 %v4531, 80
      %v5040 = vpop.permute.xlu0 %5039
      %5041 = vrot.lane.b32.xlu0 %v4533, 80
      %v5042 = vpop.permute.xlu0 %5041
      %5043 = vrot.lane.b32.xlu0 %v4536, 80
      %v5044 = vpop.permute.xlu0 %5043
      %5045 = vrot.lane.b32.xlu0 %v4538, 80
      %v5046 = vpop.permute.xlu0 %5045
      %5047 = vrot.lane.b32.xlu0 %v4541, 80
      %v5048 = vpop.permute.xlu0 %5047
      %5049 = vrot.lane.b32.xlu0 %v4543, 80
      %v5050 = vpop.permute.xlu0 %5049
      %5051 = vrot.lane.b32.xlu0 %v4546, 80
      %v5052 = vpop.permute.xlu0 %5051
      %5053 = vrot.lane.b32.xlu0 %v4548, 80
      %v5054 = vpop.permute.xlu0 %5053
      %5055 = vrot.lane.b32.xlu0 %v4551, 80
      %v5056 = vpop.permute.xlu0 %5055
      %5057 = vrot.lane.b32.xlu0 %v4553, 80
      %v5058 = vpop.permute.xlu0 %5057
      %5059 = vrot.lane.b32.xlu0 %v4556, 80
      %v5060 = vpop.permute.xlu0 %5059
      %5061 = vrot.lane.b32.xlu0 %v4558, 80
      %v5062 = vpop.permute.xlu0 %5061
      %5063 = vrot.lane.b32.xlu0 %v4561, 80
      %v5064 = vpop.permute.xlu0 %5063
      %5065 = vrot.lane.b32.xlu0 %v4563, 80
      %v5066 = vpop.permute.xlu0 %5065
      %5067 = vrot.lane.b32.xlu0 %v4566, 80
      %v5068 = vpop.permute.xlu0 %5067
      %5069 = vrot.lane.b32.xlu0 %v4568, 80
      %v5070 = vpop.permute.xlu0 %5069
      %5071 = vrot.lane.b32.xlu0 %v4579, 80
      %v5072 = vpop.permute.xlu0 %5071
      %5073 = vrot.lane.b32.xlu0 %v4581, 80
      %v5074 = vpop.permute.xlu0 %5073
      %5107 = vrot.lane.b32.xlu0 %v4313, 96
      %v5108 = vpop.permute.xlu0 %5107
      %5109 = vrot.lane.b32.xlu0 %v4314, 96
      %v5110 = vpop.permute.xlu0 %5109
      %5111 = vrot.lane.b32.xlu0 %v4316, 96
      %v5112 = vpop.permute.xlu0 %5111
      %5113 = vrot.lane.b32.xlu0 %v4317, 96
      %v5114 = vpop.permute.xlu0 %5113
      %5115 = vrot.lane.b32.xlu0 %v4319, 96
      %v5116 = vpop.permute.xlu0 %5115
      %5117 = vrot.lane.b32.xlu0 %v4320, 96
      %v5118 = vpop.permute.xlu0 %5117
      %5119 = vrot.lane.b32.xlu0 %v4322, 96
      %v5120 = vpop.permute.xlu0 %5119
      %5121 = vrot.lane.b32.xlu0 %v4323, 96
      %v5122 = vpop.permute.xlu0 %5121
      %5123 = vrot.lane.b32.xlu0 %v4325, 96
      %v5124 = vpop.permute.xlu0 %5123
      %5125 = vrot.lane.b32.xlu0 %v4326, 96
      %v5126 = vpop.permute.xlu0 %5125
      %5127 = vrot.lane.b32.xlu0 %v4328, 96
      %v5128 = vpop.permute.xlu0 %5127
      %5129 = vrot.lane.b32.xlu0 %v4329, 96
      %v5130 = vpop.permute.xlu0 %5129
      %5131 = vrot.lane.b32.xlu0 %v4331, 96
      %v5132 = vpop.permute.xlu0 %5131
      %5133 = vrot.lane.b32.xlu0 %v4332, 96
      %v5134 = vpop.permute.xlu0 %5133
      %5135 = vrot.lane.b32.xlu0 %v4334, 96
      %v5136 = vpop.permute.xlu0 %5135
      %5137 = vrot.lane.b32.xlu0 %v4335, 96
      %v5138 = vpop.permute.xlu0 %5137
      %5139 = vrot.lane.b32.xlu0 %v4337, 96
      %v5140 = vpop.permute.xlu0 %5139
      %5141 = vrot.lane.b32.xlu0 %v4338, 96
      %v5142 = vpop.permute.xlu0 %5141
      %5143 = vrot.lane.b32.xlu0 %v4340, 96
      %v5144 = vpop.permute.xlu0 %5143
      %5145 = vrot.lane.b32.xlu0 %v4341, 96
      %v5146 = vpop.permute.xlu0 %5145
      %5147 = vrot.lane.b32.xlu0 %v4343, 96
      %v5148 = vpop.permute.xlu0 %5147
      %5149 = vrot.lane.b32.xlu0 %v4344, 96
      %v5150 = vpop.permute.xlu0 %5149
      %5151 = vrot.lane.b32.xlu0 %v4346, 96
      %v5152 = vpop.permute.xlu0 %5151
      %5153 = vrot.lane.b32.xlu0 %v4347, 96
      %v5154 = vpop.permute.xlu0 %5153
      %5155 = vrot.lane.b32.xlu0 %v4349, 96
      %v5156 = vpop.permute.xlu0 %5155
      %5157 = vrot.lane.b32.xlu0 %v4350, 96
      %v5158 = vpop.permute.xlu0 %5157
      %5159 = vrot.lane.b32.xlu0 %v4352, 96
      %v5160 = vpop.permute.xlu0 %5159
      %5161 = vrot.lane.b32.xlu0 %v4353, 96
      %v5162 = vpop.permute.xlu0 %5161
      %5163 = vrot.lane.b32.xlu0 %v4355, 96
      %v5164 = vpop.permute.xlu0 %5163
      %5165 = vrot.lane.b32.xlu0 %v4356, 96
      %v5166 = vpop.permute.xlu0 %5165
      %5167 = vrot.lane.b32.xlu0 %v4358, 96
      %v5168 = vpop.permute.xlu0 %5167
      %5169 = vrot.lane.b32.xlu0 %v4359, 96
      %v5170 = vpop.permute.xlu0 %5169
      %5203 = vrot.lane.b32.xlu0 %v4421, 112
      %v5204 = vpop.permute.xlu0 %5203
      %5205 = vrot.lane.b32.xlu0 %v4423, 112
      %v5206 = vpop.permute.xlu0 %5205
      %5207 = vrot.lane.b32.xlu0 %v4426, 112
      %v5208 = vpop.permute.xlu0 %5207
      %5209 = vrot.lane.b32.xlu0 %v4428, 112
      %v5210 = vpop.permute.xlu0 %5209
      %5211 = vrot.lane.b32.xlu0 %v4431, 112
      %v5212 = vpop.permute.xlu0 %5211
      %5213 = vrot.lane.b32.xlu0 %v4433, 112
      %v5214 = vpop.permute.xlu0 %5213
      %5215 = vrot.lane.b32.xlu0 %v4436, 112
      %v5216 = vpop.permute.xlu0 %5215
      %5217 = vrot.lane.b32.xlu0 %v4438, 112
      %v5218 = vpop.permute.xlu0 %5217
      %5219 = vrot.lane.b32.xlu0 %v4441, 112
      %v5220 = vpop.permute.xlu0 %5219
      %5221 = vrot.lane.b32.xlu0 %v4443, 112
      %v5222 = vpop.permute.xlu0 %5221
      %5223 = vrot.lane.b32.xlu0 %v4446, 112
      %v5224 = vpop.permute.xlu0 %5223
      %5225 = vrot.lane.b32.xlu0 %v4448, 112
      %v5226 = vpop.permute.xlu0 %5225
      %5227 = vrot.lane.b32.xlu0 %v4451, 112
      %v5228 = vpop.permute.xlu0 %5227
      %5229 = vrot.lane.b32.xlu0 %v4453, 112
      %v5230 = vpop.permute.xlu0 %5229
      %5231 = vrot.lane.b32.xlu0 %v4456, 112
      %v5232 = vpop.permute.xlu0 %5231
      %5233 = vrot.lane.b32.xlu0 %v4458, 112
      %v5234 = vpop.permute.xlu0 %5233
      %5235 = vrot.lane.b32.xlu0 %v4461, 112
      %v5236 = vpop.permute.xlu0 %5235
      %5237 = vrot.lane.b32.xlu0 %v4463, 112
      %v5238 = vpop.permute.xlu0 %5237
      %5239 = vrot.lane.b32.xlu0 %v4466, 112
      %v5240 = vpop.permute.xlu0 %5239
      %5241 = vrot.lane.b32.xlu0 %v4468, 112
      %v5242 = vpop.permute.xlu0 %5241
      %5243 = vrot.lane.b32.xlu0 %v4471, 112
      %v5244 = vpop.permute.xlu0 %5243
      %5245 = vrot.lane.b32.xlu0 %v4473, 112
      %v5246 = vpop.permute.xlu0 %5245
      %5247 = vrot.lane.b32.xlu0 %v4476, 112
      %v5248 = vpop.permute.xlu0 %5247
      %5249 = vrot.lane.b32.xlu0 %v4478, 112
      %v5250 = vpop.permute.xlu0 %5249
      %5251 = vrot.lane.b32.xlu0 %v4481, 112
      %v5252 = vpop.permute.xlu0 %5251
      %5253 = vrot.lane.b32.xlu0 %v4483, 112
      %v5254 = vpop.permute.xlu0 %5253
      %5255 = vrot.lane.b32.xlu0 %v4486, 112
      %v5256 = vpop.permute.xlu0 %5255
      %5257 = vrot.lane.b32.xlu0 %v4488, 112
      %v5258 = vpop.permute.xlu0 %5257
      %5259 = vrot.lane.b32.xlu0 %v4574, 112
      %v5260 = vpop.permute.xlu0 %5259
      %5261 = vrot.lane.b32.xlu0 %v4576, 112
      %v5262 = vpop.permute.xlu0 %5261
      %5263 = vrot.lane.b32.xlu0 %v4587, 112
      %v5264 = vpop.permute.xlu0 %5263
      %5265 = vrot.lane.b32.xlu0 %v4589, 112
      %v5266 = vpop.permute.xlu0 %5265
      %v5299 = vsel %vm4090, %v4307, %v4628
      %v5300 = vsel %vm4090, %v4308, %v4630
      %v5301 = vsel %vm4090, %v4310, %v4632
      %v5302 = vsel %vm4090, %v4311, %v4634
      %v5303 = vsel %vm4090, %v4313, %v4636
      %v5304 = vsel %vm4090, %v4314, %v4638
      %v5305 = vsel %vm4090, %v4316, %v4640
      %v5306 = vsel %vm4090, %v4317, %v4642
      %v5307 = vsel %vm4090, %v4319, %v4644
      %v5308 = vsel %vm4090, %v4320, %v4646
      %v5309 = vsel %vm4090, %v4322, %v4648
      %v5310 = vsel %vm4090, %v4323, %v4650
      %v5311 = vsel %vm4090, %v4325, %v4652
      %v5312 = vsel %vm4090, %v4326, %v4654
      %v5313 = vsel %vm4090, %v4328, %v4656
      %v5314 = vsel %vm4090, %v4329, %v4658
      %v5315 = vsel %vm4090, %v4331, %v4660
      %v5316 = vsel %vm4090, %v4332, %v4662
      %v5317 = vsel %vm4090, %v4334, %v4664
      %v5318 = vsel %vm4090, %v4335, %v4666
      %v5319 = vsel %vm4090, %v4337, %v4668
      %v5320 = vsel %vm4090, %v4338, %v4670
      %v5321 = vsel %vm4090, %v4340, %v4672
      %v5322 = vsel %vm4090, %v4341, %v4674
      %v5323 = vsel %vm4090, %v4343, %v4676
      %v5324 = vsel %vm4090, %v4344, %v4678
      %v5325 = vsel %vm4090, %v4346, %v4680
      %v5326 = vsel %vm4090, %v4347, %v4682
      %v5327 = vsel %vm4090, %v4349, %v4684
      %v5328 = vsel %vm4090, %v4350, %v4686
      %v5329 = vsel %vm4090, %v4352, %v4688
      %v5330 = vsel %vm4090, %v4353, %v4690
      %v5331 = vsel %vm2193, %v5299, %v4724
      %v5332 = vsel %vm2193, %v5300, %v4726
      %v5333 = vsel %vm2193, %v5301, %v4728
      %v5334 = vsel %vm2193, %v5302, %v4730
      %v5335 = vsel %vm2193, %v5303, %v4732
      %v5336 = vsel %vm2193, %v5304, %v4734
      %v5337 = vsel %vm2193, %v5305, %v4736
      %v5338 = vsel %vm2193, %v5306, %v4738
      %v5339 = vsel %vm2193, %v5307, %v4740
      %v5340 = vsel %vm2193, %v5308, %v4742
      %v5341 = vsel %vm2193, %v5309, %v4744
      %v5342 = vsel %vm2193, %v5310, %v4746
      %v5343 = vsel %vm2193, %v5311, %v4748
      %v5344 = vsel %vm2193, %v5312, %v4750
      %v5345 = vsel %vm2193, %v5313, %v4752
      %v5346 = vsel %vm2193, %v5314, %v4754
      %v5347 = vsel %vm2193, %v5315, %v4756
      %v5348 = vsel %vm2193, %v5316, %v4758
      %v5349 = vsel %vm2193, %v5317, %v4760
      %v5350 = vsel %vm2193, %v5318, %v4762
      %v5351 = vsel %vm2193, %v5319, %v4764
      %v5352 = vsel %vm2193, %v5320, %v4766
      %v5353 = vsel %vm2193, %v5321, %v4768
      %v5354 = vsel %vm2193, %v5322, %v4770
      %v5355 = vsel %vm2193, %v5323, %v4772
      %v5356 = vsel %vm2193, %v5324, %v4774
      %v5357 = vsel %vm2193, %v5325, %v4776
      %v5358 = vsel %vm2193, %v5326, %v4778
      %v5359 = vsel %vm2193, %v5327, %v4780
      %v5360 = vsel %vm2193, %v5328, %v4782
      %v5361 = vsel %vm2193, %v5329, %v4784
      %v5362 = vsel %vm2193, %v5330, %v4786
      %vm5363 = vcmask 392192
      %v5364 = vsel %vm5363, %v5331, %v4820
      %v5365 = vsel %vm5363, %v5332, %v4822
      %v5366 = vsel %vm5363, %v5333, %v4824
      %v5367 = vsel %vm5363, %v5334, %v4826
      %v5368 = vsel %vm5363, %v5335, %v4828
      %v5369 = vsel %vm5363, %v5336, %v4830
      %v5370 = vsel %vm5363, %v5337, %v4832
      %v5371 = vsel %vm5363, %v5338, %v4834
      %v5372 = vsel %vm5363, %v5339, %v4836
      %v5373 = vsel %vm5363, %v5340, %v4838
      %v5374 = vsel %vm5363, %v5341, %v4840
      %v5375 = vsel %vm5363, %v5342, %v4842
      %v5376 = vsel %vm5363, %v5343, %v4844
      %v5377 = vsel %vm5363, %v5344, %v4846
      %v5378 = vsel %vm5363, %v5345, %v4848
      %v5379 = vsel %vm5363, %v5346, %v4850
      %v5380 = vsel %vm5363, %v5347, %v4852
      %v5381 = vsel %vm5363, %v5348, %v4854
      %v5382 = vsel %vm5363, %v5349, %v4856
      %v5383 = vsel %vm5363, %v5350, %v4858
      %v5384 = vsel %vm5363, %v5351, %v4860
      %v5385 = vsel %vm5363, %v5352, %v4862
      %v5386 = vsel %vm5363, %v5353, %v4864
      %v5387 = vsel %vm5363, %v5354, %v4866
      %v5388 = vsel %vm5363, %v5355, %v4868
      %v5389 = vsel %vm5363, %v5356, %v4870
      %v5390 = vsel %vm5363, %v5357, %v4872
      %v5391 = vsel %vm5363, %v5358, %v4874
      %v5392 = vsel %vm5363, %v5359, %v4876
      %v5393 = vsel %vm5363, %v5360, %v4878
      %v5394 = vsel %vm5363, %v5361, %v4880
      %v5395 = vsel %vm5363, %v5362, %v4882
      %vm5396 = vcmask 523264
      %v5397 = vsel %vm5396, %v5364, %v4916
      %v5398 = vsel %vm5396, %v5365, %v4918
      %v5399 = vsel %vm5396, %v5366, %v4920
      %v5400 = vsel %vm5396, %v5367, %v4922
      %v5401 = vsel %vm5396, %v5368, %v4924
      %v5402 = vsel %vm5396, %v5369, %v4926
      %v5403 = vsel %vm5396, %v5370, %v4928
      %v5404 = vsel %vm5396, %v5371, %v4930
      %v5405 = vsel %vm5396, %v5372, %v4932
      %v5406 = vsel %vm5396, %v5373, %v4934
      %v5407 = vsel %vm5396, %v5374, %v4936
      %v5408 = vsel %vm5396, %v5375, %v4938
      %v5409 = vsel %vm5396, %v5376, %v4940
      %v5410 = vsel %vm5396, %v5377, %v4942
      %v5411 = vsel %vm5396, %v5378, %v4944
      %v5412 = vsel %vm5396, %v5379, %v4946
      %v5413 = vsel %vm5396, %v5380, %v4948
      %v5414 = vsel %vm5396, %v5381, %v4950
      %v5415 = vsel %vm5396, %v5382, %v4952
      %v5416 = vsel %vm5396, %v5383, %v4954
      %v5417 = vsel %vm5396, %v5384, %v4956
      %v5418 = vsel %vm5396, %v5385, %v4958
      %v5419 = vsel %vm5396, %v5386, %v4960
      %v5420 = vsel %vm5396, %v5387, %v4962
      %v5421 = vsel %vm5396, %v5388, %v4964
      %v5422 = vsel %vm5396, %v5389, %v4966
      %v5423 = vsel %vm5396, %v5390, %v4968
      %v5424 = vsel %vm5396, %v5391, %v4970
      %v5425 = vsel %vm5396, %v5392, %v4972
      %v5426 = vsel %vm5396, %v5393, %v4974
      %v5427 = vsel %vm5396, %v5394, %v4976
      %v5428 = vsel %vm5396, %v5395, %v4978
      %v5429 = vsel %vm2062, %v5397, %v5012
      %v5430 = vsel %vm2062, %v5398, %v5014
      %v5431 = vsel %vm2062, %v5399, %v5016
      %v5432 = vsel %vm2062, %v5400, %v5018
      %v5433 = vsel %vm2062, %v5401, %v5020
      %v5434 = vsel %vm2062, %v5402, %v5022
      %v5435 = vsel %vm2062, %v5403, %v5024
      %v5436 = vsel %vm2062, %v5404, %v5026
      %v5437 = vsel %vm2062, %v5405, %v5028
      %v5438 = vsel %vm2062, %v5406, %v5030
      %v5439 = vsel %vm2062, %v5407, %v5032
      %v5440 = vsel %vm2062, %v5408, %v5034
      %v5441 = vsel %vm2062, %v5409, %v5036
      %v5442 = vsel %vm2062, %v5410, %v5038
      %v5443 = vsel %vm2062, %v5411, %v5040
      %v5444 = vsel %vm2062, %v5412, %v5042
      %v5445 = vsel %vm2062, %v5413, %v5044
      %v5446 = vsel %vm2062, %v5414, %v5046
      %v5447 = vsel %vm2062, %v5415, %v5048
      %v5448 = vsel %vm2062, %v5416, %v5050
      %v5449 = vsel %vm2062, %v5417, %v5052
      %v5450 = vsel %vm2062, %v5418, %v5054
      %v5451 = vsel %vm2062, %v5419, %v5056
      %v5452 = vsel %vm2062, %v5420, %v5058
      %v5453 = vsel %vm2062, %v5421, %v5060
      %v5454 = vsel %vm2062, %v5422, %v5062
      %v5455 = vsel %vm2062, %v5423, %v5064
      %v5456 = vsel %vm2062, %v5424, %v5066
      %v5457 = vsel %vm2062, %v5425, %v5068
      %v5458 = vsel %vm2062, %v5426, %v5070
      %v5459 = vsel %vm2062, %v5427, %v5072
      %v5460 = vsel %vm2062, %v5428, %v5074
      %vm5461 = vcmask 785408
      %v5462 = vsel %vm5461, %v5429, %v5108
      %v5463 = vsel %vm5461, %v5430, %v5110
      %v5464 = vsel %vm5461, %v5431, %v5112
      %v5465 = vsel %vm5461, %v5432, %v5114
      %v5466 = vsel %vm5461, %v5433, %v5116
      %v5467 = vsel %vm5461, %v5434, %v5118
      %v5468 = vsel %vm5461, %v5435, %v5120
      %v5469 = vsel %vm5461, %v5436, %v5122
      %v5470 = vsel %vm5461, %v5437, %v5124
      %v5471 = vsel %vm5461, %v5438, %v5126
      %v5472 = vsel %vm5461, %v5439, %v5128
      %v5473 = vsel %vm5461, %v5440, %v5130
      %v5474 = vsel %vm5461, %v5441, %v5132
      %v5475 = vsel %vm5461, %v5442, %v5134
      %v5476 = vsel %vm5461, %v5443, %v5136
      %v5477 = vsel %vm5461, %v5444, %v5138
      %v5478 = vsel %vm5461, %v5445, %v5140
      %v5479 = vsel %vm5461, %v5446, %v5142
      %v5480 = vsel %vm5461, %v5447, %v5144
      %v5481 = vsel %vm5461, %v5448, %v5146
      %v5482 = vsel %vm5461, %v5449, %v5148
      %v5483 = vsel %vm5461, %v5450, %v5150
      %v5484 = vsel %vm5461, %v5451, %v5152
      %v5485 = vsel %vm5461, %v5452, %v5154
      %v5486 = vsel %vm5461, %v5453, %v5156
      %v5487 = vsel %vm5461, %v5454, %v5158
      %v5488 = vsel %vm5461, %v5455, %v5160
      %v5489 = vsel %vm5461, %v5456, %v5162
      %v5490 = vsel %vm5461, %v5457, %v5164
      %v5491 = vsel %vm5461, %v5458, %v5166
      %v5492 = vsel %vm5461, %v5459, %v5168
      %v5493 = vsel %vm5461, %v5460, %v5170
      %vm5494 = vcmask 916480
      %v5495 = vsel %vm5494, %v5462, %v5204
      %v5496 = vsel %vm5494, %v5463, %v5206
      %v5497 = vsel %vm5494, %v5464, %v5208
      %v5498 = vsel %vm5494, %v5465, %v5210
      %v5499 = vsel %vm5494, %v5466, %v5212
      %v5500 = vsel %vm5494, %v5467, %v5214
      %v5501 = vsel %vm5494, %v5468, %v5216
      %v5502 = vsel %vm5494, %v5469, %v5218
      %v5503 = vsel %vm5494, %v5470, %v5220
      %v5504 = vsel %vm5494, %v5471, %v5222
      %v5505 = vsel %vm5494, %v5472, %v5224
      %v5506 = vsel %vm5494, %v5473, %v5226
      %v5507 = vsel %vm5494, %v5474, %v5228
      %v5508 = vsel %vm5494, %v5475, %v5230
      %v5509 = vsel %vm5494, %v5476, %v5232
      %v5510 = vsel %vm5494, %v5477, %v5234
      %v5511 = vsel %vm5494, %v5478, %v5236
      %v5512 = vsel %vm5494, %v5479, %v5238
      %v5513 = vsel %vm5494, %v5480, %v5240
      %v5514 = vsel %vm5494, %v5481, %v5242
      %v5515 = vsel %vm5494, %v5482, %v5244
      %v5516 = vsel %vm5494, %v5483, %v5246
      %v5517 = vsel %vm5494, %v5484, %v5248
      %v5518 = vsel %vm5494, %v5485, %v5250
      %v5519 = vsel %vm5494, %v5486, %v5252
      %v5520 = vsel %vm5494, %v5487, %v5254
      %v5521 = vsel %vm5494, %v5488, %v5256
      %v5522 = vsel %vm5494, %v5489, %v5258
      %v5523 = vsel %vm5494, %v5490, %v5260
      %v5524 = vsel %vm5494, %v5491, %v5262
      %v5525 = vsel %vm5494, %v5492, %v5264
      %v5526 = vsel %vm5494, %v5493, %v5266
      %v5527 = vpack.c.bf16 %v5496, %v5495
      %v5528 = vpack.c.bf16 %v4503, %v4501
      %v5529 = vpack.c.bf16 %v5498, %v5497
      %v5530 = vpack.c.bf16 %v4508, %v4506
      %v5531 = vpack.c.bf16 %v5500, %v5499
      %v5532 = vpack.c.bf16 %v4513, %v4511
      %v5533 = vpack.c.bf16 %v5502, %v5501
      %v5534 = vpack.c.bf16 %v4518, %v4516
      %v5535 = vpack.c.bf16 %v5504, %v5503
      %v5536 = vpack.c.bf16 %v4523, %v4521
      %v5537 = vpack.c.bf16 %v5506, %v5505
      %v5538 = vpack.c.bf16 %v4528, %v4526
      %v5539 = vpack.c.bf16 %v5508, %v5507
      %v5540 = vpack.c.bf16 %v4533, %v4531
      %v5541 = vpack.c.bf16 %v5510, %v5509
      %v5542 = vpack.c.bf16 %v4538, %v4536
      %v5543 = vpack.c.bf16 %v5512, %v5511
      %v5544 = vpack.c.bf16 %v4543, %v4541
      %v5545 = vpack.c.bf16 %v5514, %v5513
      %v5546 = vpack.c.bf16 %v4548, %v4546
      %v5547 = vpack.c.bf16 %v5516, %v5515
      %v5548 = vpack.c.bf16 %v4553, %v4551
      %v5549 = vpack.c.bf16 %v5518, %v5517
      %v5550 = vpack.c.bf16 %v4558, %v4556
      %v5551 = vpack.c.bf16 %v5520, %v5519
      %v5552 = vpack.c.bf16 %v4563, %v4561
      %v5553 = vpack.c.bf16 %v5522, %v5521
      %v5554 = vpack.c.bf16 %v4568, %v4566
      %v5555 = vpack.c.bf16 %v5524, %v5523
      %v5556 = vpack.c.bf16 %v4581, %v4579
      %v5557 = vpack.c.bf16 %v5526, %v5525
      %v5558 = vpack.c.bf16 %v4594, %v4592
      %v5559 = vld [vmem:[%s5] sm:$0xf]
      %v5560 = vld [vmem:[%s5 + $0x4] sm:$0xf]
      %v5561 = vld [vmem:[%s5 + $0x8] sm:$0xf]
      %v5562 = vld [vmem:[%s5 + $0xc] sm:$0xf]
      %v5563 = vld [vmem:[%s5 + $0x10] sm:$0xf]
      %v5564 = vld [vmem:[%s5 + $0x14] sm:$0xf]
      %v5565 = vld [vmem:[%s5 + $0x18] sm:$0xf]
      %v5566 = vld [vmem:[%s5 + $0x1c] sm:$0xf]
      %v5567 = vld [vmem:[%s5 + $0x20] sm:$0xf]
      %v5568 = vld [vmem:[%s5 + $0x24] sm:$0xf]
      %v5569 = vld [vmem:[%s5 + $0x28] sm:$0xf]
      %v5570 = vld [vmem:[%s5 + $0x2c] sm:$0xf]
      %v5571 = vld [vmem:[%s5 + $0x30] sm:$0xf]
      %v5572 = vld [vmem:[%s5 + $0x34] sm:$0xf]
      %v5573 = vld [vmem:[%s5 + $0x38] sm:$0xf]
      %v5574 = vld [vmem:[%s5 + $0x3c] sm:$0xf]
      %v5575 = vld [vmem:[%s5 + $0x40] sm:$0xf]
      %v5576 = vld [vmem:[%s5 + $0x44] sm:$0xf]
      %v5577 = vld [vmem:[%s6] sm:$0x1]
      %v5579 = vperm.slane %v5577, 0
      %v5599 = vunpack.c.l.b16 %v5559
      %v5600 = vunpack.c.l.b16 %v5560
      %v5601 = vunpack.c.l.b16 %v5561
      %v5602 = vunpack.c.l.b16 %v5562
      %v5603 = vunpack.c.l.b16 %v5563
      %v5604 = vunpack.c.l.b16 %v5564
      %v5605 = vunpack.c.l.b16 %v5565
      %v5606 = vunpack.c.l.b16 %v5566
      %v5607 = vunpack.c.l.b16 %v5567
      %v5608 = vunpack.c.l.b16 %v5568
      %v5609 = vunpack.c.l.b16 %v5569
      %v5610 = vunpack.c.l.b16 %v5570
      %v5611 = vunpack.c.l.b16 %v5571
      %v5612 = vunpack.c.l.b16 %v5572
      %v5613 = vunpack.c.l.b16 %v5573
      %v5614 = vunpack.c.l.b16 %v5574
      %v5615 = vunpack.c.l.b16 %v5575
      %v5616 = vunpack.c.l.b16 %v5576
      %v5617 = vpack.c.b16 %v5600, %v5599
      %v5618 = vpack.c.b16 %v5602, %v5601
      %v5619 = vpack.c.b16 %v5604, %v5603
      %v5620 = vpack.c.b16 %v5606, %v5605
      %v5621 = vpack.c.b16 %v5608, %v5607
      %v5622 = vpack.c.b16 %v5610, %v5609
      %v5623 = vpack.c.b16 %v5612, %v5611
      %v5624 = vpack.c.b16 %v5614, %v5613
      %v5625 = vpack.c.b16 %v5616, %v5615
      %v5636 = vsel %vm4090, %v5528, 0
      %v5639 = vsel %vm4090, %v5530, 0
      %v5642 = vsel %vm4090, %v5532, 0
      %v5645 = vsel %vm4090, %v5534, 0
      %v5648 = vsel %vm4090, %v5536, 0
      %v5651 = vsel %vm4090, %v5538, 0
      %v5654 = vsel %vm4090, %v5540, 0
      %v5657 = vsel %vm4090, %v5542, 0
      %v5660 = vsel %vm4090, %v5544, 0
      %v5663 = vsel %vm4090, %v5546, 0
      %v5666 = vsel %vm4090, %v5548, 0
      %v5669 = vsel %vm4090, %v5550, 0
      %v5672 = vsel %vm4090, %v5552, 0
      %v5675 = vsel %vm4090, %v5554, 0
      %v5678 = vsel %vm4090, %v5556, 0
      %v5681 = vsel %vm4090, %v5558, 0
      %5683 = vmatpush.bf16.msra.mxu0 %v5624
      %5684 = vmatpush.bf16.msra.mxu0 %v5623
      %5685 = vmatpush.bf16.msra.mxu0 %v5622
      %5686 = vmatpush.bf16.msra.mxu0 %v5621
      %5687 = vmatpush.bf16.msra.mxu0 %v5620
      %5688 = vmatpush.bf16.msra.mxu0 %v5619
      %5689 = vmatpush.bf16.msra.mxu0 %v5618
      %5690 = vmatpush.bf16.msra.mxu0 %v5617
      %5691 = vmatmul.bf16.gmra.mxu0 %v5527
      %v5692 = vpop.f32.mrf.mxu0
      %v5693 = vadd.f32 %v5579, %v5692
      %v5694 = vpop.f32.mrf.mxu0
      %v5695 = vadd.f32 %v5579, %v5694
      %5696 = vmatmul.bf16.gmra.mxu0 %v5529
      %v5697 = vpop.f32.mrf.mxu0
      %v5698 = vadd.f32 %v5579, %v5697
      %v5699 = vpop.f32.mrf.mxu0
      %v5700 = vadd.f32 %v5579, %v5699
      %5701 = vmatmul.bf16.gmra.mxu0 %v5531
      %v5702 = vpop.f32.mrf.mxu0
      %v5703 = vadd.f32 %v5579, %v5702
      %v5704 = vpop.f32.mrf.mxu0
      %v5705 = vadd.f32 %v5579, %v5704
      %5706 = vmatmul.bf16.gmra.mxu0 %v5533
      %v5707 = vpop.f32.mrf.mxu0
      %v5708 = vadd.f32 %v5579, %v5707
      %v5709 = vpop.f32.mrf.mxu0
      %v5710 = vadd.f32 %v5579, %v5709
      %5711 = vmatmul.bf16.gmra.mxu0 %v5535
      %v5712 = vpop.f32.mrf.mxu0
      %v5713 = vadd.f32 %v5579, %v5712
      %v5714 = vpop.f32.mrf.mxu0
      %v5715 = vadd.f32 %v5579, %v5714
      %5716 = vmatmul.bf16.gmra.mxu0 %v5537
      %v5717 = vpop.f32.mrf.mxu0
      %v5718 = vadd.f32 %v5579, %v5717
      %v5719 = vpop.f32.mrf.mxu0
      %v5720 = vadd.f32 %v5579, %v5719
      %5721 = vmatmul.bf16.gmra.mxu0 %v5539
      %v5722 = vpop.f32.mrf.mxu0
      %v5723 = vadd.f32 %v5579, %v5722
      %v5724 = vpop.f32.mrf.mxu0
      %v5725 = vadd.f32 %v5579, %v5724
      %5726 = vmatmul.bf16.gmra.mxu0 %v5541
      %v5727 = vpop.f32.mrf.mxu0
      %v5728 = vadd.f32 %v5579, %v5727
      %v5729 = vpop.f32.mrf.mxu0
      %v5730 = vadd.f32 %v5579, %v5729
      %5731 = vmatmul.bf16.gmra.mxu0 %v5543
      %v5732 = vpop.f32.mrf.mxu0
      %v5733 = vadd.f32 %v5579, %v5732
      %v5734 = vpop.f32.mrf.mxu0
      %v5735 = vadd.f32 %v5579, %v5734
      %5736 = vmatmul.bf16.gmra.mxu0 %v5545
      %v5737 = vpop.f32.mrf.mxu0
      %v5738 = vadd.f32 %v5579, %v5737
      %v5739 = vpop.f32.mrf.mxu0
      %v5740 = vadd.f32 %v5579, %v5739
      %5741 = vmatmul.bf16.gmra.mxu0 %v5547
      %v5742 = vpop.f32.mrf.mxu0
      %v5743 = vadd.f32 %v5579, %v5742
      %v5744 = vpop.f32.mrf.mxu0
      %v5745 = vadd.f32 %v5579, %v5744
      %5746 = vmatmul.bf16.gmra.mxu0 %v5549
      %v5747 = vpop.f32.mrf.mxu0
      %v5748 = vadd.f32 %v5579, %v5747
      %v5749 = vpop.f32.mrf.mxu0
      %v5750 = vadd.f32 %v5579, %v5749
      %5751 = vmatmul.bf16.gmra.mxu0 %v5551
      %v5752 = vpop.f32.mrf.mxu0
      %v5753 = vadd.f32 %v5579, %v5752
      %v5754 = vpop.f32.mrf.mxu0
      %v5755 = vadd.f32 %v5579, %v5754
      %5756 = vmatmul.bf16.gmra.mxu0 %v5553
      %v5757 = vpop.f32.mrf.mxu0
      %v5758 = vadd.f32 %v5579, %v5757
      %v5759 = vpop.f32.mrf.mxu0
      %v5760 = vadd.f32 %v5579, %v5759
      %5761 = vmatmul.bf16.gmra.mxu0 %v5555
      %v5762 = vpop.f32.mrf.mxu0
      %v5763 = vadd.f32 %v5579, %v5762
      %v5764 = vpop.f32.mrf.mxu0
      %v5765 = vadd.f32 %v5579, %v5764
      %5766 = vmatmul.bf16.gmra.mxu0 %v5557
      %v5767 = vpop.f32.mrf.mxu0
      %v5768 = vadd.f32 %v5579, %v5767
      %v5769 = vpop.f32.mrf.mxu0
      %v5770 = vadd.f32 %v5579, %v5769
      %5771 = vdwg.mxu0
      %5772 = vmatpush.bf16.msra.mxu0 0
      %5773 = vmatpush.bf16.msra.mxu0 0
      %5774 = vmatpush.bf16.msra.mxu0 0
      %5775 = vmatpush.bf16.msra.mxu0 0
      %5776 = vmatpush.bf16.msra.mxu0 0
      %5777 = vmatpush.bf16.msra.mxu0 0
      %5778 = vmatpush.bf16.msra.mxu0 0
      %5779 = vmatpush.bf16.msra.mxu0 %v5625
      %5780 = vmatmul.bf16.gmra.mxu0 %v5636
      %v5781 = vpop.f32.mrf.mxu0
      %v5782 = vadd.f32 %v5693, %v5781
      %v5783 = vpop.f32.mrf.mxu0
      %v5784 = vadd.f32 %v5695, %v5783
      %5785 = vmatmul.bf16.gmra.mxu0 %v5639
      %v5786 = vpop.f32.mrf.mxu0
      %v5787 = vadd.f32 %v5698, %v5786
      %v5788 = vpop.f32.mrf.mxu0
      %v5789 = vadd.f32 %v5700, %v5788
      %5790 = vmatmul.bf16.gmra.mxu0 %v5642
      %v5791 = vpop.f32.mrf.mxu0
      %v5792 = vadd.f32 %v5703, %v5791
      %v5793 = vpop.f32.mrf.mxu0
      %v5794 = vadd.f32 %v5705, %v5793
      %5795 = vmatmul.bf16.gmra.mxu0 %v5645
      %v5796 = vpop.f32.mrf.mxu0
      %v5797 = vadd.f32 %v5708, %v5796
      %v5798 = vpop.f32.mrf.mxu0
      %v5799 = vadd.f32 %v5710, %v5798
      %5800 = vmatmul.bf16.gmra.mxu0 %v5648
      %v5801 = vpop.f32.mrf.mxu0
      %v5802 = vadd.f32 %v5713, %v5801
      %v5803 = vpop.f32.mrf.mxu0
      %v5804 = vadd.f32 %v5715, %v5803
      %5805 = vmatmul.bf16.gmra.mxu0 %v5651
      %v5806 = vpop.f32.mrf.mxu0
      %v5807 = vadd.f32 %v5718, %v5806
      %v5808 = vpop.f32.mrf.mxu0
      %v5809 = vadd.f32 %v5720, %v5808
      %5810 = vmatmul.bf16.gmra.mxu0 %v5654
      %v5811 = vpop.f32.mrf.mxu0
      %v5812 = vadd.f32 %v5723, %v5811
      %v5813 = vpop.f32.mrf.mxu0
      %v5814 = vadd.f32 %v5725, %v5813
      %5815 = vmatmul.bf16.gmra.mxu0 %v5657
      %v5816 = vpop.f32.mrf.mxu0
      %v5817 = vadd.f32 %v5728, %v5816
      %v5818 = vpop.f32.mrf.mxu0
      %v5819 = vadd.f32 %v5730, %v5818
      %5820 = vmatmul.bf16.gmra.mxu0 %v5660
      %v5821 = vpop.f32.mrf.mxu0
      %v5822 = vadd.f32 %v5733, %v5821
      %v5823 = vpop.f32.mrf.mxu0
      %v5824 = vadd.f32 %v5735, %v5823
      %5825 = vmatmul.bf16.gmra.mxu0 %v5663
      %v5826 = vpop.f32.mrf.mxu0
      %v5827 = vadd.f32 %v5738, %v5826
      %v5828 = vpop.f32.mrf.mxu0
      %v5829 = vadd.f32 %v5740, %v5828
      %5830 = vmatmul.bf16.gmra.mxu0 %v5666
      %v5831 = vpop.f32.mrf.mxu0
      %v5832 = vadd.f32 %v5743, %v5831
      %v5833 = vpop.f32.mrf.mxu0
      %v5834 = vadd.f32 %v5745, %v5833
      %5835 = vmatmul.bf16.gmra.mxu0 %v5669
      %v5836 = vpop.f32.mrf.mxu0
      %v5837 = vadd.f32 %v5748, %v5836
      %v5838 = vpop.f32.mrf.mxu0
      %v5839 = vadd.f32 %v5750, %v5838
      %5840 = vmatmul.bf16.gmra.mxu0 %v5672
      %v5841 = vpop.f32.mrf.mxu0
      %v5842 = vadd.f32 %v5753, %v5841
      %v5843 = vpop.f32.mrf.mxu0
      %v5844 = vadd.f32 %v5755, %v5843
      %5845 = vmatmul.bf16.gmra.mxu0 %v5675
      %v5846 = vpop.f32.mrf.mxu0
      %v5847 = vadd.f32 %v5758, %v5846
      %v5848 = vpop.f32.mrf.mxu0
      %v5849 = vadd.f32 %v5760, %v5848
      %5850 = vmatmul.bf16.gmra.mxu0 %v5678
      %v5851 = vpop.f32.mrf.mxu0
      %v5852 = vadd.f32 %v5763, %v5851
      %v5853 = vpop.f32.mrf.mxu0
      %v5854 = vadd.f32 %v5765, %v5853
      %5855 = vmatmul.bf16.gmra.mxu0 %v5681
      %v5856 = vpop.f32.mrf.mxu0
      %v5857 = vadd.f32 %v5768, %v5856
      %v5858 = vpop.f32.mrf.mxu0
      %v5859 = vadd.f32 %v5770, %v5858
      %5860 = vdwg.mxu0
      %v5861 = vxor.u32 %v5782, 2147483648
      %v5862 = vxor.u32 %v5784, 2147483648
      %v5863 = vxor.u32 %v5787, 2147483648
      %v5864 = vxor.u32 %v5789, 2147483648
      %v5865 = vxor.u32 %v5792, 2147483648
      %v5866 = vxor.u32 %v5794, 2147483648
      %v5867 = vxor.u32 %v5797, 2147483648
      %v5868 = vxor.u32 %v5799, 2147483648
      %v5869 = vxor.u32 %v5802, 2147483648
      %v5870 = vxor.u32 %v5804, 2147483648
      %v5871 = vxor.u32 %v5807, 2147483648
      %v5872 = vxor.u32 %v5809, 2147483648
      %v5873 = vxor.u32 %v5812, 2147483648
      %v5874 = vxor.u32 %v5814, 2147483648
      %v5875 = vxor.u32 %v5817, 2147483648
      %v5876 = vxor.u32 %v5819, 2147483648
      %v5877 = vxor.u32 %v5822, 2147483648
      %v5878 = vxor.u32 %v5824, 2147483648
      %v5879 = vxor.u32 %v5827, 2147483648
      %v5880 = vxor.u32 %v5829, 2147483648
      %v5881 = vxor.u32 %v5832, 2147483648
      %v5882 = vxor.u32 %v5834, 2147483648
      %v5883 = vxor.u32 %v5837, 2147483648
      %v5884 = vxor.u32 %v5839, 2147483648
      %v5885 = vxor.u32 %v5842, 2147483648
      %v5886 = vxor.u32 %v5844, 2147483648
      %v5887 = vxor.u32 %v5847, 2147483648
      %v5888 = vxor.u32 %v5849, 2147483648
      %v5889 = vxor.u32 %v5852, 2147483648
      %v5890 = vxor.u32 %v5854, 2147483648
      %v5891 = vxor.u32 %v5857, 2147483648
      %v5892 = vxor.u32 %v5859, 2147483648
      %v5893 = vmul.f32 %v5861, 1.442695
      %v5894 = vpow.pop %v5893
      %v5895 = vmul.f32 %v5862, 1.442695
      %v5896 = vpow.pop %v5895
      %v5897 = vmul.f32 %v5863, 1.442695
      %v5898 = vpow.pop %v5897
      %v5899 = vmul.f32 %v5864, 1.442695
      %v5900 = vpow.pop %v5899
      %v5901 = vmul.f32 %v5865, 1.442695
      %v5902 = vpow.pop %v5901
      %v5903 = vmul.f32 %v5866, 1.442695
      %v5904 = vpow.pop %v5903
      %v5905 = vmul.f32 %v5867, 1.442695
      %v5906 = vpow.pop %v5905
      %v5907 = vmul.f32 %v5868, 1.442695
      %v5908 = vpow.pop %v5907
      %v5909 = vmul.f32 %v5869, 1.442695
      %v5910 = vpow.pop %v5909
      %v5911 = vmul.f32 %v5870, 1.442695
      %v5912 = vpow.pop %v5911
      %v5913 = vmul.f32 %v5871, 1.442695
      %v5914 = vpow.pop %v5913
      %v5915 = vmul.f32 %v5872, 1.442695
      %v5916 = vpow.pop %v5915
      %v5917 = vmul.f32 %v5873, 1.442695
      %v5918 = vpow.pop %v5917
      %v5919 = vmul.f32 %v5874, 1.442695
      %v5920 = vpow.pop %v5919
      %v5921 = vmul.f32 %v5875, 1.442695
      %v5922 = vpow.pop %v5921
      %v5923 = vmul.f32 %v5876, 1.442695
      %v5924 = vpow.pop %v5923
      %v5925 = vmul.f32 %v5877, 1.442695
      %v5926 = vpow.pop %v5925
      %v5927 = vmul.f32 %v5878, 1.442695
      %v5928 = vpow.pop %v5927
      %v5929 = vmul.f32 %v5879, 1.442695
      %v5930 = vpow.pop %v5929
      %v5931 = vmul.f32 %v5880, 1.442695
      %v5932 = vpow.pop %v5931
      %v5933 = vmul.f32 %v5881, 1.442695
      %v5934 = vpow.pop %v5933
      %v5935 = vmul.f32 %v5882, 1.442695
      %v5936 = vpow.pop %v5935
      %v5937 = vmul.f32 %v5883, 1.442695
      %v5938 = vpow.pop %v5937
      %v5939 = vmul.f32 %v5884, 1.442695
      %v5940 = vpow.pop %v5939
      %v5941 = vmul.f32 %v5885, 1.442695
      %v5942 = vpow.pop %v5941
      %v5943 = vmul.f32 %v5886, 1.442695
      %v5944 = vpow.pop %v5943
      %v5945 = vmul.f32 %v5887, 1.442695
      %v5946 = vpow.pop %v5945
      %v5947 = vmul.f32 %v5888, 1.442695
      %v5948 = vpow.pop %v5947
      %v5949 = vmul.f32 %v5889, 1.442695
      %v5950 = vpow.pop %v5949
      %v5951 = vmul.f32 %v5890, 1.442695
      %v5952 = vpow.pop %v5951
      %v5953 = vmul.f32 %v5891, 1.442695
      %v5954 = vpow.pop %v5953
      %v5955 = vmul.f32 %v5892, 1.442695
      %v5956 = vpow.pop %v5955
      %v5957 = vadd.f32 %v5894, 1.0
      %v5958 = vadd.f32 %v5896, 1.0
      %v5959 = vadd.f32 %v5898, 1.0
      %v5960 = vadd.f32 %v5900, 1.0
      %v5961 = vadd.f32 %v5902, 1.0
      %v5962 = vadd.f32 %v5904, 1.0
      %v5963 = vadd.f32 %v5906, 1.0
      %v5964 = vadd.f32 %v5908, 1.0
      %v5965 = vadd.f32 %v5910, 1.0
      %v5966 = vadd.f32 %v5912, 1.0
      %v5967 = vadd.f32 %v5914, 1.0
      %v5968 = vadd.f32 %v5916, 1.0
      %v5969 = vadd.f32 %v5918, 1.0
      %v5970 = vadd.f32 %v5920, 1.0
      %v5971 = vadd.f32 %v5922, 1.0
      %v5972 = vadd.f32 %v5924, 1.0
      %v5973 = vadd.f32 %v5926, 1.0
      %v5974 = vadd.f32 %v5928, 1.0
      %v5975 = vadd.f32 %v5930, 1.0
      %v5976 = vadd.f32 %v5932, 1.0
      %v5977 = vadd.f32 %v5934, 1.0
      %v5978 = vadd.f32 %v5936, 1.0
      %v5979 = vadd.f32 %v5938, 1.0
      %v5980 = vadd.f32 %v5940, 1.0
      %v5981 = vadd.f32 %v5942, 1.0
      %v5982 = vadd.f32 %v5944, 1.0
      %v5983 = vadd.f32 %v5946, 1.0
      %v5984 = vadd.f32 %v5948, 1.0
      %v5985 = vadd.f32 %v5950, 1.0
      %v5986 = vadd.f32 %v5952, 1.0
      %v5987 = vadd.f32 %v5954, 1.0
      %v5988 = vadd.f32 %v5956, 1.0
      %v5989 = vrcp.pop %v5957
      %v5990 = vmul.f32 %v5957, %v5989
      %v5991 = vsub.f32 1.0, %v5990
      %v5992 = vmul.f32 %v5989, %v5991
      %v5993 = vadd.f32 %v5989, %v5992
      %vm5994 = vweird.f32 %v5957
      %vm5995 = vweird.f32 %v5989
      %vm5996 = vmor %vm5994, %vm5995
      %v5997 = vsel %vm5996, %v5989, %v5993
      %v5998 = vand.u32 2147483647, %v5957
      %vm5999 = vcmp.eq.f32.partialorder %v5998, 8.507059e+37
      %v6000 = vand.u32 %v5957, 2147483648
      %v6001 = vor.u32 1.1754944e-38, %v6000
      %v6002 = vsel %vm5999, %v6001, %v5997
      %v6003 = vmul.f32 1.0, %v6002
      %v6004 = vrcp.pop %v5958
      %v6005 = vmul.f32 %v5958, %v6004
      %v6006 = vsub.f32 1.0, %v6005
      %v6007 = vmul.f32 %v6004, %v6006
      %v6008 = vadd.f32 %v6004, %v6007
      %vm6009 = vweird.f32 %v5958
      %vm6010 = vweird.f32 %v6004
      %vm6011 = vmor %vm6009, %vm6010
      %v6012 = vsel %vm6011, %v6004, %v6008
      %v6013 = vand.u32 2147483647, %v5958
      %vm6014 = vcmp.eq.f32.partialorder %v6013, 8.507059e+37
      %v6015 = vand.u32 %v5958, 2147483648
      %v6016 = vor.u32 1.1754944e-38, %v6015
      %v6017 = vsel %vm6014, %v6016, %v6012
      %v6018 = vmul.f32 1.0, %v6017
      %v6019 = vrcp.pop %v5959
      %v6020 = vmul.f32 %v5959, %v6019
      %v6021 = vsub.f32 1.0, %v6020
      %v6022 = vmul.f32 %v6019, %v6021
      %v6023 = vadd.f32 %v6019, %v6022
      %vm6024 = vweird.f32 %v5959
      %vm6025 = vweird.f32 %v6019
      %vm6026 = vmor %vm6024, %vm6025
      %v6027 = vsel %vm6026, %v6019, %v6023
      %v6028 = vand.u32 2147483647, %v5959
      %vm6029 = vcmp.eq.f32.partialorder %v6028, 8.507059e+37
      %v6030 = vand.u32 %v5959, 2147483648
      %v6031 = vor.u32 1.1754944e-38, %v6030
      %v6032 = vsel %vm6029, %v6031, %v6027
      %v6033 = vmul.f32 1.0, %v6032
      %v6034 = vrcp.pop %v5960
      %v6035 = vmul.f32 %v5960, %v6034
      %v6036 = vsub.f32 1.0, %v6035
      %v6037 = vmul.f32 %v6034, %v6036
      %v6038 = vadd.f32 %v6034, %v6037
      %vm6039 = vweird.f32 %v5960
      %vm6040 = vweird.f32 %v6034
      %vm6041 = vmor %vm6039, %vm6040
      %v6042 = vsel %vm6041, %v6034, %v6038
      %v6043 = vand.u32 2147483647, %v5960
      %vm6044 = vcmp.eq.f32.partialorder %v6043, 8.507059e+37
      %v6045 = vand.u32 %v5960, 2147483648
      %v6046 = vor.u32 1.1754944e-38, %v6045
      %v6047 = vsel %vm6044, %v6046, %v6042
      %v6048 = vmul.f32 1.0, %v6047
      %v6049 = vrcp.pop %v5961
      %v6050 = vmul.f32 %v5961, %v6049
      %v6051 = vsub.f32 1.0, %v6050
      %v6052 = vmul.f32 %v6049, %v6051
      %v6053 = vadd.f32 %v6049, %v6052
      %vm6054 = vweird.f32 %v5961
      %vm6055 = vweird.f32 %v6049
      %vm6056 = vmor %vm6054, %vm6055
      %v6057 = vsel %vm6056, %v6049, %v6053
      %v6058 = vand.u32 2147483647, %v5961
      %vm6059 = vcmp.eq.f32.partialorder %v6058, 8.507059e+37
      %v6060 = vand.u32 %v5961, 2147483648
      %v6061 = vor.u32 1.1754944e-38, %v6060
      %v6062 = vsel %vm6059, %v6061, %v6057
      %v6063 = vmul.f32 1.0, %v6062
      %v6064 = vrcp.pop %v5962
      %v6065 = vmul.f32 %v5962, %v6064
      %v6066 = vsub.f32 1.0, %v6065
      %v6067 = vmul.f32 %v6064, %v6066
      %v6068 = vadd.f32 %v6064, %v6067
      %vm6069 = vweird.f32 %v5962
      %vm6070 = vweird.f32 %v6064
      %vm6071 = vmor %vm6069, %vm6070
      %v6072 = vsel %vm6071, %v6064, %v6068
      %v6073 = vand.u32 2147483647, %v5962
      %vm6074 = vcmp.eq.f32.partialorder %v6073, 8.507059e+37
      %v6075 = vand.u32 %v5962, 2147483648
      %v6076 = vor.u32 1.1754944e-38, %v6075
      %v6077 = vsel %vm6074, %v6076, %v6072
      %v6078 = vmul.f32 1.0, %v6077
      %v6079 = vrcp.pop %v5963
      %v6080 = vmul.f32 %v5963, %v6079
      %v6081 = vsub.f32 1.0, %v6080
      %v6082 = vmul.f32 %v6079, %v6081
      %v6083 = vadd.f32 %v6079, %v6082
      %vm6084 = vweird.f32 %v5963
      %vm6085 = vweird.f32 %v6079
      %vm6086 = vmor %vm6084, %vm6085
      %v6087 = vsel %vm6086, %v6079, %v6083
      %v6088 = vand.u32 2147483647, %v5963
      %vm6089 = vcmp.eq.f32.partialorder %v6088, 8.507059e+37
      %v6090 = vand.u32 %v5963, 2147483648
      %v6091 = vor.u32 1.1754944e-38, %v6090
      %v6092 = vsel %vm6089, %v6091, %v6087
      %v6093 = vmul.f32 1.0, %v6092
      %v6094 = vrcp.pop %v5964
      %v6095 = vmul.f32 %v5964, %v6094
      %v6096 = vsub.f32 1.0, %v6095
      %v6097 = vmul.f32 %v6094, %v6096
      %v6098 = vadd.f32 %v6094, %v6097
      %vm6099 = vweird.f32 %v5964
      %vm6100 = vweird.f32 %v6094
      %vm6101 = vmor %vm6099, %vm6100
      %v6102 = vsel %vm6101, %v6094, %v6098
      %v6103 = vand.u32 2147483647, %v5964
      %vm6104 = vcmp.eq.f32.partialorder %v6103, 8.507059e+37
      %v6105 = vand.u32 %v5964, 2147483648
      %v6106 = vor.u32 1.1754944e-38, %v6105
      %v6107 = vsel %vm6104, %v6106, %v6102
      %v6108 = vmul.f32 1.0, %v6107
      %v6109 = vrcp.pop %v5965
      %v6110 = vmul.f32 %v5965, %v6109
      %v6111 = vsub.f32 1.0, %v6110
      %v6112 = vmul.f32 %v6109, %v6111
      %v6113 = vadd.f32 %v6109, %v6112
      %vm6114 = vweird.f32 %v5965
      %vm6115 = vweird.f32 %v6109
      %vm6116 = vmor %vm6114, %vm6115
      %v6117 = vsel %vm6116, %v6109, %v6113
      %v6118 = vand.u32 2147483647, %v5965
      %vm6119 = vcmp.eq.f32.partialorder %v6118, 8.507059e+37
      %v6120 = vand.u32 %v5965, 2147483648
      %v6121 = vor.u32 1.1754944e-38, %v6120
      %v6122 = vsel %vm6119, %v6121, %v6117
      %v6123 = vmul.f32 1.0, %v6122
      %v6124 = vrcp.pop %v5966
      %v6125 = vmul.f32 %v5966, %v6124
      %v6126 = vsub.f32 1.0, %v6125
      %v6127 = vmul.f32 %v6124, %v6126
      %v6128 = vadd.f32 %v6124, %v6127
      %vm6129 = vweird.f32 %v5966
      %vm6130 = vweird.f32 %v6124
      %vm6131 = vmor %vm6129, %vm6130
      %v6132 = vsel %vm6131, %v6124, %v6128
      %v6133 = vand.u32 2147483647, %v5966
      %vm6134 = vcmp.eq.f32.partialorder %v6133, 8.507059e+37
      %v6135 = vand.u32 %v5966, 2147483648
      %v6136 = vor.u32 1.1754944e-38, %v6135
      %v6137 = vsel %vm6134, %v6136, %v6132
      %v6138 = vmul.f32 1.0, %v6137
      %v6139 = vrcp.pop %v5967
      %v6140 = vmul.f32 %v5967, %v6139
      %v6141 = vsub.f32 1.0, %v6140
      %v6142 = vmul.f32 %v6139, %v6141
      %v6143 = vadd.f32 %v6139, %v6142
      %vm6144 = vweird.f32 %v5967
      %vm6145 = vweird.f32 %v6139
      %vm6146 = vmor %vm6144, %vm6145
      %v6147 = vsel %vm6146, %v6139, %v6143
      %v6148 = vand.u32 2147483647, %v5967
      %vm6149 = vcmp.eq.f32.partialorder %v6148, 8.507059e+37
      %v6150 = vand.u32 %v5967, 2147483648
      %v6151 = vor.u32 1.1754944e-38, %v6150
      %v6152 = vsel %vm6149, %v6151, %v6147
      %v6153 = vmul.f32 1.0, %v6152
      %v6154 = vrcp.pop %v5968
      %v6155 = vmul.f32 %v5968, %v6154
      %v6156 = vsub.f32 1.0, %v6155
      %v6157 = vmul.f32 %v6154, %v6156
      %v6158 = vadd.f32 %v6154, %v6157
      %vm6159 = vweird.f32 %v5968
      %vm6160 = vweird.f32 %v6154
      %vm6161 = vmor %vm6159, %vm6160
      %v6162 = vsel %vm6161, %v6154, %v6158
      %v6163 = vand.u32 2147483647, %v5968
      %vm6164 = vcmp.eq.f32.partialorder %v6163, 8.507059e+37
      %v6165 = vand.u32 %v5968, 2147483648
      %v6166 = vor.u32 1.1754944e-38, %v6165
      %v6167 = vsel %vm6164, %v6166, %v6162
      %v6168 = vmul.f32 1.0, %v6167
      %v6169 = vrcp.pop %v5969
      %v6170 = vmul.f32 %v5969, %v6169
      %v6171 = vsub.f32 1.0, %v6170
      %v6172 = vmul.f32 %v6169, %v6171
      %v6173 = vadd.f32 %v6169, %v6172
      %vm6174 = vweird.f32 %v5969
      %vm6175 = vweird.f32 %v6169
      %vm6176 = vmor %vm6174, %vm6175
      %v6177 = vsel %vm6176, %v6169, %v6173
      %v6178 = vand.u32 2147483647, %v5969
      %vm6179 = vcmp.eq.f32.partialorder %v6178, 8.507059e+37
      %v6180 = vand.u32 %v5969, 2147483648
      %v6181 = vor.u32 1.1754944e-38, %v6180
      %v6182 = vsel %vm6179, %v6181, %v6177
      %v6183 = vmul.f32 1.0, %v6182
      %v6184 = vrcp.pop %v5970
      %v6185 = vmul.f32 %v5970, %v6184
      %v6186 = vsub.f32 1.0, %v6185
      %v6187 = vmul.f32 %v6184, %v6186
      %v6188 = vadd.f32 %v6184, %v6187
      %vm6189 = vweird.f32 %v5970
      %vm6190 = vweird.f32 %v6184
      %vm6191 = vmor %vm6189, %vm6190
      %v6192 = vsel %vm6191, %v6184, %v6188
      %v6193 = vand.u32 2147483647, %v5970
      %vm6194 = vcmp.eq.f32.partialorder %v6193, 8.507059e+37
      %v6195 = vand.u32 %v5970, 2147483648
      %v6196 = vor.u32 1.1754944e-38, %v6195
      %v6197 = vsel %vm6194, %v6196, %v6192
      %v6198 = vmul.f32 1.0, %v6197
      %v6199 = vrcp.pop %v5971
      %v6200 = vmul.f32 %v5971, %v6199
      %v6201 = vsub.f32 1.0, %v6200
      %v6202 = vmul.f32 %v6199, %v6201
      %v6203 = vadd.f32 %v6199, %v6202
      %vm6204 = vweird.f32 %v5971
      %vm6205 = vweird.f32 %v6199
      %vm6206 = vmor %vm6204, %vm6205
      %v6207 = vsel %vm6206, %v6199, %v6203
      %v6208 = vand.u32 2147483647, %v5971
      %vm6209 = vcmp.eq.f32.partialorder %v6208, 8.507059e+37
      %v6210 = vand.u32 %v5971, 2147483648
      %v6211 = vor.u32 1.1754944e-38, %v6210
      %v6212 = vsel %vm6209, %v6211, %v6207
      %v6213 = vmul.f32 1.0, %v6212
      %v6214 = vrcp.pop %v5972
      %v6215 = vmul.f32 %v5972, %v6214
      %v6216 = vsub.f32 1.0, %v6215
      %v6217 = vmul.f32 %v6214, %v6216
      %v6218 = vadd.f32 %v6214, %v6217
      %vm6219 = vweird.f32 %v5972
      %vm6220 = vweird.f32 %v6214
      %vm6221 = vmor %vm6219, %vm6220
      %v6222 = vsel %vm6221, %v6214, %v6218
      %v6223 = vand.u32 2147483647, %v5972
      %vm6224 = vcmp.eq.f32.partialorder %v6223, 8.507059e+37
      %v6225 = vand.u32 %v5972, 2147483648
      %v6226 = vor.u32 1.1754944e-38, %v6225
      %v6227 = vsel %vm6224, %v6226, %v6222
      %v6228 = vmul.f32 1.0, %v6227
      %v6229 = vrcp.pop %v5973
      %v6230 = vmul.f32 %v5973, %v6229
      %v6231 = vsub.f32 1.0, %v6230
      %v6232 = vmul.f32 %v6229, %v6231
      %v6233 = vadd.f32 %v6229, %v6232
      %vm6234 = vweird.f32 %v5973
      %vm6235 = vweird.f32 %v6229
      %vm6236 = vmor %vm6234, %vm6235
      %v6237 = vsel %vm6236, %v6229, %v6233
      %v6238 = vand.u32 2147483647, %v5973
      %vm6239 = vcmp.eq.f32.partialorder %v6238, 8.507059e+37
      %v6240 = vand.u32 %v5973, 2147483648
      %v6241 = vor.u32 1.1754944e-38, %v6240
      %v6242 = vsel %vm6239, %v6241, %v6237
      %v6243 = vmul.f32 1.0, %v6242
      %v6244 = vrcp.pop %v5974
      %v6245 = vmul.f32 %v5974, %v6244
      %v6246 = vsub.f32 1.0, %v6245
      %v6247 = vmul.f32 %v6244, %v6246
      %v6248 = vadd.f32 %v6244, %v6247
      %vm6249 = vweird.f32 %v5974
      %vm6250 = vweird.f32 %v6244
      %vm6251 = vmor %vm6249, %vm6250
      %v6252 = vsel %vm6251, %v6244, %v6248
      %v6253 = vand.u32 2147483647, %v5974
      %vm6254 = vcmp.eq.f32.partialorder %v6253, 8.507059e+37
      %v6255 = vand.u32 %v5974, 2147483648
      %v6256 = vor.u32 1.1754944e-38, %v6255
      %v6257 = vsel %vm6254, %v6256, %v6252
      %v6258 = vmul.f32 1.0, %v6257
      %v6259 = vrcp.pop %v5975
      %v6260 = vmul.f32 %v5975, %v6259
      %v6261 = vsub.f32 1.0, %v6260
      %v6262 = vmul.f32 %v6259, %v6261
      %v6263 = vadd.f32 %v6259, %v6262
      %vm6264 = vweird.f32 %v5975
      %vm6265 = vweird.f32 %v6259
      %vm6266 = vmor %vm6264, %vm6265
      %v6267 = vsel %vm6266, %v6259, %v6263
      %v6268 = vand.u32 2147483647, %v5975
      %vm6269 = vcmp.eq.f32.partialorder %v6268, 8.507059e+37
      %v6270 = vand.u32 %v5975, 2147483648
      %v6271 = vor.u32 1.1754944e-38, %v6270
      %v6272 = vsel %vm6269, %v6271, %v6267
      %v6273 = vmul.f32 1.0, %v6272
      %v6274 = vrcp.pop %v5976
      %v6275 = vmul.f32 %v5976, %v6274
      %v6276 = vsub.f32 1.0, %v6275
      %v6277 = vmul.f32 %v6274, %v6276
      %v6278 = vadd.f32 %v6274, %v6277
      %vm6279 = vweird.f32 %v5976
      %vm6280 = vweird.f32 %v6274
      %vm6281 = vmor %vm6279, %vm6280
      %v6282 = vsel %vm6281, %v6274, %v6278
      %v6283 = vand.u32 2147483647, %v5976
      %vm6284 = vcmp.eq.f32.partialorder %v6283, 8.507059e+37
      %v6285 = vand.u32 %v5976, 2147483648
      %v6286 = vor.u32 1.1754944e-38, %v6285
      %v6287 = vsel %vm6284, %v6286, %v6282
      %v6288 = vmul.f32 1.0, %v6287
      %v6289 = vrcp.pop %v5977
      %v6290 = vmul.f32 %v5977, %v6289
      %v6291 = vsub.f32 1.0, %v6290
      %v6292 = vmul.f32 %v6289, %v6291
      %v6293 = vadd.f32 %v6289, %v6292
      %vm6294 = vweird.f32 %v5977
      %vm6295 = vweird.f32 %v6289
      %vm6296 = vmor %vm6294, %vm6295
      %v6297 = vsel %vm6296, %v6289, %v6293
      %v6298 = vand.u32 2147483647, %v5977
      %vm6299 = vcmp.eq.f32.partialorder %v6298, 8.507059e+37
      %v6300 = vand.u32 %v5977, 2147483648
      %v6301 = vor.u32 1.1754944e-38, %v6300
      %v6302 = vsel %vm6299, %v6301, %v6297
      %v6303 = vmul.f32 1.0, %v6302
      %v6304 = vrcp.pop %v5978
      %v6305 = vmul.f32 %v5978, %v6304
      %v6306 = vsub.f32 1.0, %v6305
      %v6307 = vmul.f32 %v6304, %v6306
      %v6308 = vadd.f32 %v6304, %v6307
      %vm6309 = vweird.f32 %v5978
      %vm6310 = vweird.f32 %v6304
      %vm6311 = vmor %vm6309, %vm6310
      %v6312 = vsel %vm6311, %v6304, %v6308
      %v6313 = vand.u32 2147483647, %v5978
      %vm6314 = vcmp.eq.f32.partialorder %v6313, 8.507059e+37
      %v6315 = vand.u32 %v5978, 2147483648
      %v6316 = vor.u32 1.1754944e-38, %v6315
      %v6317 = vsel %vm6314, %v6316, %v6312
      %v6318 = vmul.f32 1.0, %v6317
      %v6319 = vrcp.pop %v5979
      %v6320 = vmul.f32 %v5979, %v6319
      %v6321 = vsub.f32 1.0, %v6320
      %v6322 = vmul.f32 %v6319, %v6321
      %v6323 = vadd.f32 %v6319, %v6322
      %vm6324 = vweird.f32 %v5979
      %vm6325 = vweird.f32 %v6319
      %vm6326 = vmor %vm6324, %vm6325
      %v6327 = vsel %vm6326, %v6319, %v6323
      %v6328 = vand.u32 2147483647, %v5979
      %vm6329 = vcmp.eq.f32.partialorder %v6328, 8.507059e+37
      %v6330 = vand.u32 %v5979, 2147483648
      %v6331 = vor.u32 1.1754944e-38, %v6330
      %v6332 = vsel %vm6329, %v6331, %v6327
      %v6333 = vmul.f32 1.0, %v6332
      %v6334 = vrcp.pop %v5980
      %v6335 = vmul.f32 %v5980, %v6334
      %v6336 = vsub.f32 1.0, %v6335
      %v6337 = vmul.f32 %v6334, %v6336
      %v6338 = vadd.f32 %v6334, %v6337
      %vm6339 = vweird.f32 %v5980
      %vm6340 = vweird.f32 %v6334
      %vm6341 = vmor %vm6339, %vm6340
      %v6342 = vsel %vm6341, %v6334, %v6338
      %v6343 = vand.u32 2147483647, %v5980
      %vm6344 = vcmp.eq.f32.partialorder %v6343, 8.507059e+37
      %v6345 = vand.u32 %v5980, 2147483648
      %v6346 = vor.u32 1.1754944e-38, %v6345
      %v6347 = vsel %vm6344, %v6346, %v6342
      %v6348 = vmul.f32 1.0, %v6347
      %v6349 = vrcp.pop %v5981
      %v6350 = vmul.f32 %v5981, %v6349
      %v6351 = vsub.f32 1.0, %v6350
      %v6352 = vmul.f32 %v6349, %v6351
      %v6353 = vadd.f32 %v6349, %v6352
      %vm6354 = vweird.f32 %v5981
      %vm6355 = vweird.f32 %v6349
      %vm6356 = vmor %vm6354, %vm6355
      %v6357 = vsel %vm6356, %v6349, %v6353
      %v6358 = vand.u32 2147483647, %v5981
      %vm6359 = vcmp.eq.f32.partialorder %v6358, 8.507059e+37
      %v6360 = vand.u32 %v5981, 2147483648
      %v6361 = vor.u32 1.1754944e-38, %v6360
      %v6362 = vsel %vm6359, %v6361, %v6357
      %v6363 = vmul.f32 1.0, %v6362
      %v6364 = vrcp.pop %v5982
      %v6365 = vmul.f32 %v5982, %v6364
      %v6366 = vsub.f32 1.0, %v6365
      %v6367 = vmul.f32 %v6364, %v6366
      %v6368 = vadd.f32 %v6364, %v6367
      %vm6369 = vweird.f32 %v5982
      %vm6370 = vweird.f32 %v6364
      %vm6371 = vmor %vm6369, %vm6370
      %v6372 = vsel %vm6371, %v6364, %v6368
      %v6373 = vand.u32 2147483647, %v5982
      %vm6374 = vcmp.eq.f32.partialorder %v6373, 8.507059e+37
      %v6375 = vand.u32 %v5982, 2147483648
      %v6376 = vor.u32 1.1754944e-38, %v6375
      %v6377 = vsel %vm6374, %v6376, %v6372
      %v6378 = vmul.f32 1.0, %v6377
      %v6379 = vrcp.pop %v5983
      %v6380 = vmul.f32 %v5983, %v6379
      %v6381 = vsub.f32 1.0, %v6380
      %v6382 = vmul.f32 %v6379, %v6381
      %v6383 = vadd.f32 %v6379, %v6382
      %vm6384 = vweird.f32 %v5983
      %vm6385 = vweird.f32 %v6379
      %vm6386 = vmor %vm6384, %vm6385
      %v6387 = vsel %vm6386, %v6379, %v6383
      %v6388 = vand.u32 2147483647, %v5983
      %vm6389 = vcmp.eq.f32.partialorder %v6388, 8.507059e+37
      %v6390 = vand.u32 %v5983, 2147483648
      %v6391 = vor.u32 1.1754944e-38, %v6390
      %v6392 = vsel %vm6389, %v6391, %v6387
      %v6393 = vmul.f32 1.0, %v6392
      %v6394 = vrcp.pop %v5984
      %v6395 = vmul.f32 %v5984, %v6394
      %v6396 = vsub.f32 1.0, %v6395
      %v6397 = vmul.f32 %v6394, %v6396
      %v6398 = vadd.f32 %v6394, %v6397
      %vm6399 = vweird.f32 %v5984
      %vm6400 = vweird.f32 %v6394
      %vm6401 = vmor %vm6399, %vm6400
      %v6402 = vsel %vm6401, %v6394, %v6398
      %v6403 = vand.u32 2147483647, %v5984
      %vm6404 = vcmp.eq.f32.partialorder %v6403, 8.507059e+37
      %v6405 = vand.u32 %v5984, 2147483648
      %v6406 = vor.u32 1.1754944e-38, %v6405
      %v6407 = vsel %vm6404, %v6406, %v6402
      %v6408 = vmul.f32 1.0, %v6407
      %v6409 = vrcp.pop %v5985
      %v6410 = vmul.f32 %v5985, %v6409
      %v6411 = vsub.f32 1.0, %v6410
      %v6412 = vmul.f32 %v6409, %v6411
      %v6413 = vadd.f32 %v6409, %v6412
      %vm6414 = vweird.f32 %v5985
      %vm6415 = vweird.f32 %v6409
      %vm6416 = vmor %vm6414, %vm6415
      %v6417 = vsel %vm6416, %v6409, %v6413
      %v6418 = vand.u32 2147483647, %v5985
      %vm6419 = vcmp.eq.f32.partialorder %v6418, 8.507059e+37
      %v6420 = vand.u32 %v5985, 2147483648
      %v6421 = vor.u32 1.1754944e-38, %v6420
      %v6422 = vsel %vm6419, %v6421, %v6417
      %v6423 = vmul.f32 1.0, %v6422
      %v6424 = vrcp.pop %v5986
      %v6425 = vmul.f32 %v5986, %v6424
      %v6426 = vsub.f32 1.0, %v6425
      %v6427 = vmul.f32 %v6424, %v6426
      %v6428 = vadd.f32 %v6424, %v6427
      %vm6429 = vweird.f32 %v5986
      %vm6430 = vweird.f32 %v6424
      %vm6431 = vmor %vm6429, %vm6430
      %v6432 = vsel %vm6431, %v6424, %v6428
      %v6433 = vand.u32 2147483647, %v5986
      %vm6434 = vcmp.eq.f32.partialorder %v6433, 8.507059e+37
      %v6435 = vand.u32 %v5986, 2147483648
      %v6436 = vor.u32 1.1754944e-38, %v6435
      %v6437 = vsel %vm6434, %v6436, %v6432
      %v6438 = vmul.f32 1.0, %v6437
      %v6439 = vrcp.pop %v5987
      %v6440 = vmul.f32 %v5987, %v6439
      %v6441 = vsub.f32 1.0, %v6440
      %v6442 = vmul.f32 %v6439, %v6441
      %v6443 = vadd.f32 %v6439, %v6442
      %vm6444 = vweird.f32 %v5987
      %vm6445 = vweird.f32 %v6439
      %vm6446 = vmor %vm6444, %vm6445
      %v6447 = vsel %vm6446, %v6439, %v6443
      %v6448 = vand.u32 2147483647, %v5987
      %vm6449 = vcmp.eq.f32.partialorder %v6448, 8.507059e+37
      %v6450 = vand.u32 %v5987, 2147483648
      %v6451 = vor.u32 1.1754944e-38, %v6450
      %v6452 = vsel %vm6449, %v6451, %v6447
      %v6453 = vmul.f32 1.0, %v6452
      %v6454 = vrcp.pop %v5988
      %v6455 = vmul.f32 %v5988, %v6454
      %v6456 = vsub.f32 1.0, %v6455
      %v6457 = vmul.f32 %v6454, %v6456
      %v6458 = vadd.f32 %v6454, %v6457
      %vm6459 = vweird.f32 %v5988
      %vm6460 = vweird.f32 %v6454
      %vm6461 = vmor %vm6459, %vm6460
      %v6462 = vsel %vm6461, %v6454, %v6458
      %v6463 = vand.u32 2147483647, %v5988
      %vm6464 = vcmp.eq.f32.partialorder %v6463, 8.507059e+37
      %v6465 = vand.u32 %v5988, 2147483648
      %v6466 = vor.u32 1.1754944e-38, %v6465
      %v6467 = vsel %vm6464, %v6466, %v6462
      %v6468 = vmul.f32 1.0, %v6467
      %v6469 = vtanh.pop %v5782
      %v6470 = vtanh.pop %v5784
      %v6471 = vtanh.pop %v5787
      %v6472 = vtanh.pop %v5789
      %v6473 = vtanh.pop %v5792
      %v6474 = vtanh.pop %v5794
      %v6475 = vtanh.pop %v5797
      %v6476 = vtanh.pop %v5799
      %v6477 = vtanh.pop %v5802
      %v6478 = vtanh.pop %v5804
      %v6479 = vtanh.pop %v5807
      %v6480 = vtanh.pop %v5809
      %v6481 = vtanh.pop %v5812
      %v6482 = vtanh.pop %v5814
      %v6483 = vtanh.pop %v5817
      %v6484 = vtanh.pop %v5819
      %v6485 = vtanh.pop %v5822
      %v6486 = vtanh.pop %v5824
      %v6487 = vtanh.pop %v5827
      %v6488 = vtanh.pop %v5829
      %v6489 = vtanh.pop %v5832
      %v6490 = vtanh.pop %v5834
      %v6491 = vtanh.pop %v5837
      %v6492 = vtanh.pop %v5839
      %v6493 = vtanh.pop %v5842
      %v6494 = vtanh.pop %v5844
      %v6495 = vtanh.pop %v5847
      %v6496 = vtanh.pop %v5849
      %v6497 = vtanh.pop %v5852
      %v6498 = vtanh.pop %v5854
      %v6499 = vtanh.pop %v5857
      %v6500 = vtanh.pop %v5859
      %6533 = vrot.lane.b32.xlu0 %v6469, 120
      %v6534 = vpop.permute.xlu0 %6533
      %6535 = vrot.lane.b32.xlu0 %v6470, 120
      %v6536 = vpop.permute.xlu0 %6535
      %6537 = vrot.lane.b32.xlu0 %v6471, 120
      %v6538 = vpop.permute.xlu0 %6537
      %6539 = vrot.lane.b32.xlu0 %v6472, 120
      %v6540 = vpop.permute.xlu0 %6539
      %6541 = vrot.lane.b32.xlu0 %v6473, 120
      %v6542 = vpop.permute.xlu0 %6541
      %6543 = vrot.lane.b32.xlu0 %v6474, 120
      %v6544 = vpop.permute.xlu0 %6543
      %6545 = vrot.lane.b32.xlu0 %v6475, 120
      %v6546 = vpop.permute.xlu0 %6545
      %6547 = vrot.lane.b32.xlu0 %v6476, 120
      %v6548 = vpop.permute.xlu0 %6547
      %6549 = vrot.lane.b32.xlu0 %v6477, 120
      %v6550 = vpop.permute.xlu0 %6549
      %6551 = vrot.lane.b32.xlu0 %v6478, 120
      %v6552 = vpop.permute.xlu0 %6551
      %6553 = vrot.lane.b32.xlu0 %v6479, 120
      %v6554 = vpop.permute.xlu0 %6553
      %6555 = vrot.lane.b32.xlu0 %v6480, 120
      %v6556 = vpop.permute.xlu0 %6555
      %6557 = vrot.lane.b32.xlu0 %v6481, 120
      %v6558 = vpop.permute.xlu0 %6557
      %6559 = vrot.lane.b32.xlu0 %v6482, 120
      %v6560 = vpop.permute.xlu0 %6559
      %6561 = vrot.lane.b32.xlu0 %v6483, 120
      %v6562 = vpop.permute.xlu0 %6561
      %6563 = vrot.lane.b32.xlu0 %v6484, 120
      %v6564 = vpop.permute.xlu0 %6563
      %6565 = vrot.lane.b32.xlu0 %v6485, 120
      %v6566 = vpop.permute.xlu0 %6565
      %6567 = vrot.lane.b32.xlu0 %v6486, 120
      %v6568 = vpop.permute.xlu0 %6567
      %6569 = vrot.lane.b32.xlu0 %v6487, 120
      %v6570 = vpop.permute.xlu0 %6569
      %6571 = vrot.lane.b32.xlu0 %v6488, 120
      %v6572 = vpop.permute.xlu0 %6571
      %6573 = vrot.lane.b32.xlu0 %v6489, 120
      %v6574 = vpop.permute.xlu0 %6573
      %6575 = vrot.lane.b32.xlu0 %v6490, 120
      %v6576 = vpop.permute.xlu0 %6575
      %6577 = vrot.lane.b32.xlu0 %v6491, 120
      %v6578 = vpop.permute.xlu0 %6577
      %6579 = vrot.lane.b32.xlu0 %v6492, 120
      %v6580 = vpop.permute.xlu0 %6579
      %6581 = vrot.lane.b32.xlu0 %v6493, 120
      %v6582 = vpop.permute.xlu0 %6581
      %6583 = vrot.lane.b32.xlu0 %v6494, 120
      %v6584 = vpop.permute.xlu0 %6583
      %6585 = vrot.lane.b32.xlu0 %v6495, 120
      %v6586 = vpop.permute.xlu0 %6585
      %6587 = vrot.lane.b32.xlu0 %v6496, 120
      %v6588 = vpop.permute.xlu0 %6587
      %6589 = vrot.lane.b32.xlu0 %v6497, 120
      %v6590 = vpop.permute.xlu0 %6589
      %6591 = vrot.lane.b32.xlu0 %v6498, 120
      %v6592 = vpop.permute.xlu0 %6591
      %6593 = vrot.lane.b32.xlu0 %v6499, 120
      %v6594 = vpop.permute.xlu0 %6593
      %6595 = vrot.lane.b32.xlu0 %v6500, 120
      %v6596 = vpop.permute.xlu0 %6595
      %v6629 = vmul.f32 %v6003, %v6534
      %v6630 = vmul.f32 %v6018, %v6536
      %v6631 = vmul.f32 %v6033, %v6538
      %v6632 = vmul.f32 %v6048, %v6540
      %v6633 = vmul.f32 %v6063, %v6542
      %v6634 = vmul.f32 %v6078, %v6544
      %v6635 = vmul.f32 %v6093, %v6546
      %v6636 = vmul.f32 %v6108, %v6548
      %v6637 = vmul.f32 %v6123, %v6550
      %v6638 = vmul.f32 %v6138, %v6552
      %v6639 = vmul.f32 %v6153, %v6554
      %v6640 = vmul.f32 %v6168, %v6556
      %v6641 = vmul.f32 %v6183, %v6558
      %v6642 = vmul.f32 %v6198, %v6560
      %v6643 = vmul.f32 %v6213, %v6562
      %v6644 = vmul.f32 %v6228, %v6564
      %v6645 = vmul.f32 %v6243, %v6566
      %v6646 = vmul.f32 %v6258, %v6568
      %v6647 = vmul.f32 %v6273, %v6570
      %v6648 = vmul.f32 %v6288, %v6572
      %v6649 = vmul.f32 %v6303, %v6574
      %v6650 = vmul.f32 %v6318, %v6576
      %v6651 = vmul.f32 %v6333, %v6578
      %v6652 = vmul.f32 %v6348, %v6580
      %v6653 = vmul.f32 %v6363, %v6582
      %v6654 = vmul.f32 %v6378, %v6584
      %v6655 = vmul.f32 %v6393, %v6586
      %v6656 = vmul.f32 %v6408, %v6588
      %v6657 = vmul.f32 %v6423, %v6590
      %v6658 = vmul.f32 %v6438, %v6592
      %v6659 = vmul.f32 %v6453, %v6594
      %v6660 = vmul.f32 %v6468, %v6596
      %6661 = vst.msk [vmem:[%s387] sm:$0xff] %vm3897, %v6629
      %6662 = vst.msk [vmem:[%s387 + $0x8] sm:$0xff] %vm3897, %v6630
      %6663 = vst.msk [vmem:[%s387 + $0x10] sm:$0xff] %vm3897, %v6631
      %6664 = vst.msk [vmem:[%s387 + $0x18] sm:$0xff] %vm3897, %v6632
      %6665 = vst.msk [vmem:[%s387 + $0x20] sm:$0xff] %vm3897, %v6633
      %6666 = vst.msk [vmem:[%s387 + $0x28] sm:$0xff] %vm3897, %v6634
      %6667 = vst.msk [vmem:[%s387 + $0x30] sm:$0xff] %vm3897, %v6635
      %6668 = vst.msk [vmem:[%s387 + $0x38] sm:$0xff] %vm3897, %v6636
      %6669 = vst.msk [vmem:[%s387 + $0x40] sm:$0xff] %vm3897, %v6637
      %6670 = vst.msk [vmem:[%s387 + $0x48] sm:$0xff] %vm3897, %v6638
      %6671 = vst.msk [vmem:[%s387 + $0x50] sm:$0xff] %vm3897, %v6639
      %6672 = vst.msk [vmem:[%s387 + $0x58] sm:$0xff] %vm3897, %v6640
      %6673 = vst.msk [vmem:[%s387 + $0x60] sm:$0xff] %vm3897, %v6641
      %6674 = vst.msk [vmem:[%s387 + $0x68] sm:$0xff] %vm3897, %v6642
      %6675 = vst.msk [vmem:[%s387 + $0x70] sm:$0xff] %vm3897, %v6643
      %6676 = vst.msk [vmem:[%s387 + $0x78] sm:$0xff] %vm3897, %v6644
      %6677 = vst.msk [vmem:[%s387 + $0x80] sm:$0xff] %vm3897, %v6645
      %6678 = vst.msk [vmem:[%s387 + $0x88] sm:$0xff] %vm3897, %v6646
      %6679 = vst.msk [vmem:[%s387 + $0x90] sm:$0xff] %vm3897, %v6647
      %6680 = vst.msk [vmem:[%s387 + $0x98] sm:$0xff] %vm3897, %v6648
      %6681 = vst.msk [vmem:[%s387 + $0xa0] sm:$0xff] %vm3897, %v6649
      %6682 = vst.msk [vmem:[%s387 + $0xa8] sm:$0xff] %vm3897, %v6650
      %6683 = vst.msk [vmem:[%s387 + $0xb0] sm:$0xff] %vm3897, %v6651
      %6684 = vst.msk [vmem:[%s387 + $0xb8] sm:$0xff] %vm3897, %v6652
      %6685 = vst.msk [vmem:[%s387 + $0xc0] sm:$0xff] %vm3897, %v6653
      %6686 = vst.msk [vmem:[%s387 + $0xc8] sm:$0xff] %vm3897, %v6654
      %6687 = vst.msk [vmem:[%s387 + $0xd0] sm:$0xff] %vm3897, %v6655
      %6688 = vst.msk [vmem:[%s387 + $0xd8] sm:$0xff] %vm3897, %v6656
      %6689 = vst.msk [vmem:[%s387 + $0xe0] sm:$0xff] %vm3897, %v6657
      %6690 = vst.msk [vmem:[%s387 + $0xe8] sm:$0xff] %vm3897, %v6658
      %6691 = vst.msk [vmem:[%s387 + $0xf0] sm:$0xff] %vm3897, %v6659
      %6692 = vst.msk [vmem:[%s387 + $0xf8] sm:$0xff] %vm3897, %v6660
      %p6693 = scmp.lt.s32.totalorder %s21, 1
      %s6694 = scalar_select %p6693, %s21, 1
      %s6695 = smul.addr %s6694, 32
      %s6696 = smul.addr %s6695, 8
      %s6697 = scalar_lea.vmem %s7, %s6696
      %p6698 = scmp.lt.s32.totalorder %s21, 1
      %s6699 = scalar_select %p6698, %s21, 1
      %s6700 = smul.addr %s6699, 32
      %s6701 = smul.addr %s6700, 8
      %s6702 = scalar_lea.vmem %s8, %s6701
      %p6703 = scmp.lt.s32.totalorder %s21, 1
      %s6704 = scalar_select %p6703, %s21, 1
      %s6705 = smul.addr %s6704, 32
      %s6706 = smul.addr %s6705, 8
      %s6707 = scalar_lea.vmem %s9, %s6706
      // Predicated region
      $region49: #{cgl_forward.1} parent=47 // pred_check
        %p6708 = pneg %p201
      $region50: #{cgl_forward.1} parent=47 // pred_check_branch
        %6710 = sbr.rel (%p6708) target = $region52
      $region51: #{cgl_forward.1} parent=47 // pred_region
        _
      $region52: #{cgl_forward.1} parent=47 // pred_fallthru
        _
      // Predicated region
      $region53: #{cgl_forward.1} parent=47 // pred_check
        %p6711 = pneg %p227
      $region54: #{cgl_forward.1} parent=47 // pred_check_branch
        %6713 = sbr.rel (%p6711) target = $region56
      $region55: #{cgl_forward.1} parent=47 // pred_region
        _
      $region56: #{cgl_forward.1} parent=47 // pred_fallthru
        _
      // Predicated region
      $region57: #{cgl_forward.1} parent=47 // pred_check
        %p6714 = pneg %p253
      $region58: #{cgl_forward.1} parent=47 // pred_check_branch
        %6716 = sbr.rel (%p6714) target = $region60
      $region59: #{cgl_forward.1} parent=47 // pred_region
        _
      $region60: #{cgl_forward.1} parent=47 // pred_fallthru
        _
    $region48: #{cgl_forward.1} parent=5 // pred_fallthru
      _
    %p6717 = scmp.le.s32.totalorder 2, %s16
    // Predicated region
    $region61: #{cgl_forward.1} parent=5 // pred_check
      %p6718 = pneg %p6717
    $region62: #{cgl_forward.1} parent=5 // pred_check_branch
      %6720 = sbr.rel (%p6718) target = $region64
    $region63: #{cgl_forward.1} parent=5 // pred_region
      %s6721 = ssub.s32 %s16, 2
      // Predicated region
      $region65: #{cgl_forward.1} parent=63 // pred_check
        %p6722 = pneg %p207
      $region66: #{cgl_forward.1} parent=63 // pred_check_branch
        %6724 = sbr.rel (%p6722) target = $region68
      $region67: #{cgl_forward.1} parent=63 // pred_region
        %p6725 = scmp.lt.s32.totalorder %s22, 1
        %s6726 = scalar_select %p6725, %s22, 1
        %s6727 = smul.addr %s6726, 32
        %s6728 = smul.addr %s6727, 8
        %s6729 = scalar_lea.vmem %s7, %s6728
      $region68: #{cgl_forward.1} parent=63 // pred_fallthru
        _
      // Predicated region
      $region69: #{cgl_forward.1} parent=63 // pred_check
        %p6730 = pneg %p233
      $region70: #{cgl_forward.1} parent=63 // pred_check_branch
        %6732 = sbr.rel (%p6730) target = $region72
      $region71: #{cgl_forward.1} parent=63 // pred_region
        %p6733 = scmp.lt.s32.totalorder %s22, 1
        %s6734 = scalar_select %p6733, %s22, 1
        %s6735 = smul.addr %s6734, 32
        %s6736 = smul.addr %s6735, 8
        %s6737 = scalar_lea.vmem %s8, %s6736
      $region72: #{cgl_forward.1} parent=63 // pred_fallthru
        _
      // Predicated region
      $region73: #{cgl_forward.1} parent=63 // pred_check
        %p6738 = pneg %p259
      $region74: #{cgl_forward.1} parent=63 // pred_check_branch
        %6740 = sbr.rel (%p6738) target = $region76
      $region75: #{cgl_forward.1} parent=63 // pred_region
        %p6741 = scmp.lt.s32.totalorder %s22, 1
        %s6742 = scalar_select %p6741, %s22, 1
        %s6743 = smul.addr %s6742, 32
        %s6744 = smul.addr %s6743, 8
        %s6745 = scalar_lea.vmem %s9, %s6744
      $region76: #{cgl_forward.1} parent=63 // pred_fallthru
        _
    $region64: #{cgl_forward.1} parent=5 // pred_fallthru
      _
  $region6: #{cgl_forward.1} parent=0 // loop_footer
    %s20 = sadd.s32 1, %s16
  $region7: #{cgl_forward.1} parent=0 // loop_footer_branch
    %15 = sbr.rel target = $region3
  $region8: #{cgl_forward.1} parent=0 // loop_exit
    _

</llo_original>
